<compile_context>
chip_gen: v5e
topology: v5e:2x2
jax: 0.10.0
libtpu: 0.0.40
codegen_flags: <defaults>
</compile_context>

<pallas_src>
import numpy as np

import jax
import jax.numpy as jnp
from jax import lax
from jax.experimental import pallas as pl
from jax.experimental.pallas import tpu as pltpu


BATCH_TILE = 64        # upper bound on images per grid step
ROWS_PER_IMG = 32      # input height; every activation keeps this row grid


# ------------------------------ fused kernel --------------------------------

def lenet5_kernel(x_ref,                       # (bt*32, 32)  f32 input rows
                  t1_ref, b1_ref, q1_ref,      # (5,32,168) bf16, (1,168) f32, (168,84) bf16
                  t2_ref, b2_ref, q2_ref,      # (5,84,160) bf16, (1,160) f32, (160,80) bf16
                  wfc1_ref, bfc1_ref,          # (5,80,128) bf16, (1,128) f32
                  wfc2_ref, bfc2_ref,          # (128,128) bf16, (1,128) f32
                  wfc3_ref, bfc3_ref,          # (128,128) bf16, (1,128) f32
                  out_ref):                    # (bt, 128)    f32 softmax (first 10 lanes)
    f32, bf16 = jnp.float32, jnp.bfloat16
    n_rows = x_ref.shape[0]                    # bt * 32
    bt = out_ref.shape[0]

    def shift_up(v, k):
        # y[r, :] == v[r + k, :] for r < n_rows - k.  The k tail rows are
        # zero-filled don't-cares; valid rows never read across an image
        # boundary or into the tail (offsets are bounded by construction).
        if k == 0:
            return v
        return jnp.concatenate(
            [v[k:, :], jnp.zeros((k, v.shape[1]), v.dtype)], axis=0)

    x = x_ref[...]                                               # (n, 32) f32

    # conv1 (5x5, 1->6) + tanh: width handled by Toeplitz banks (lane axis),
    # height handled by row shifts.  Valid rows: r = b*32 + h, h < 28.
    acc1 = jnp.dot(x.astype(bf16), t1_ref[0], preferred_element_type=f32)
    for di in range(1, 5):
        acc1 = acc1 + jnp.dot(shift_up(x, di).astype(bf16), t1_ref[di],
                              preferred_element_type=f32)        # (n, 168)
    c1 = jnp.tanh(acc1 + b1_ref[...])

    # pool1 (2x2 avg; 0.25 folded into q1) + tanh.
    # Valid rows move to r = b*32 + 2*h', h' < 14 (row stride becomes 2).
    s1 = jnp.dot(c1.astype(bf16), q1_ref[...], preferred_element_type=f32)
    p1 = jnp.tanh(s1 + shift_up(s1, 1))                          # (n, 84)

    # conv2 (5x5, 6->16) + tanh on the stride-2 row grid.
    # Valid rows: r = b*32 + 2*h'', h'' < 10.
    acc2 = jnp.dot(p1.astype(bf16), t2_ref[0], preferred_element_type=f32)
    for di in range(1, 5):
        acc2 = acc2 + jnp.dot(shift_up(p1, 2 * di).astype(bf16), t2_ref[di],
                              preferred_element_type=f32)        # (n, 160)
    c2 = jnp.tanh(acc2 + b2_ref[...])

    # pool2 + tanh.  Valid rows: r = b*32 + 4*i, i < 5 (row stride 4).
    s2 = jnp.dot(c2.astype(bf16), q2_ref[...], preferred_element_type=f32)
    p2 = jnp.tanh(s2 + shift_up(s2, 2))                          # (n, 80)
    p2b = p2.astype(bf16)

    # fc1: gather the 5 valid rows of every image with tiny 0/1 selection
    # matmuls (iota compare -> MXU); the contraction order already matches
    # torch's view(-1, 400) = (oc, i, j) flatten (folded into wfc1 packing).
    col = lax.broadcasted_iota(jnp.int32, (bt, n_rows), 1)
    row = lax.broadcasted_iota(jnp.int32, (bt, n_rows), 0)
    rel = col - row * ROWS_PER_IMG                 # == 4*i at the wanted rows
    h1 = bfc1_ref[...]                                           # (1, 128)
    for i in range(5):
        sel = (rel == 4 * i).astype(bf16)                        # (bt, n)
        p2_i = jnp.dot(sel, p2b, preferred_element_type=f32)     # (bt, 80)
        h1 = h1 + jnp.dot(p2_i.astype(bf16), wfc1_ref[i],
                          preferred_element_type=f32)            # (bt, 128)
    h1 = jnp.tanh(h1)

    h2 = jnp.tanh(jnp.dot(h1.astype(bf16), wfc2_ref[...],
                          preferred_element_type=f32) + bfc2_ref[...])
    lg = jnp.tanh(jnp.dot(h2.astype(bf16), wfc3_ref[...],
                          preferred_element_type=f32) + bfc3_ref[...])

    # softmax over the 10 real classes (lanes 10..127 are padding); exact div.
    lane = lax.broadcasted_iota(jnp.int32, (bt, 128), 1)
    lg = jnp.where(lane < 10, lg, -1e30)
    lg = lg - jnp.max(lg, axis=-1, keepdims=True)
    e = jnp.exp(lg)
    out_ref[...] = e / jnp.sum(e, axis=-1, keepdims=True)


# --------------------------- one-time weight packing -------------------------

def pack_params(p):
    """Repack torch-layout parameters into kernel layouts (call once)."""
    f32, bf16 = jnp.float32, jnp.bfloat16

    def toeplitz_bank(w, in_w, out_w):
        # w: (O, I, 5, 5) -> (5, I*in_w, O*out_w) width-Toeplitz banks:
        # bank[di][ic*in_w + (w_out+dj), oc*out_w + w_out] = w[oc, ic, di, dj]
        O, I, KH, KW = w.shape
        sel = np.zeros((KW, in_w, out_w), np.float32)
        cols = np.arange(out_w)
        for k in range(KW):
            sel[k, cols + k, cols] = 1.0
        sel = jnp.asarray(sel)
        banks = []
        for di in range(KH):
            t = jnp.einsum('oik,kxy->ixoy', w[:, :, di, :].astype(f32), sel)
            banks.append(t.reshape(I * in_w, O * out_w))
        return jnp.stack(banks, axis=0).astype(bf16)

    def width_pool(w_in, ch):
        # Block-diagonal (ch*w_in, ch*w_in//2) width-halving matrix with the
        # full 0.25 avg-pool scale folded in (row pooling is done via shifts).
        h = np.zeros((w_in, w_in // 2), np.float32)
        idx = np.arange(w_in // 2)
        h[2 * idx, idx] = 0.25
        h[2 * idx + 1, idx] = 0.25
        return jnp.asarray(np.kron(np.eye(ch, dtype=np.float32), h)).astype(bf16)

    def pad_last(a, n):
        return jnp.pad(a, [(0, 0)] * (a.ndim - 1) + [(0, n - a.shape[-1])])

    t1 = toeplitz_bank(p["conv1_w"], 32, 28)                # (5, 32, 168)
    t2 = toeplitz_bank(p["conv2_w"], 14, 10)                # (5, 84, 160)
    q1 = width_pool(28, 6)                                  # (168, 84)
    q2 = width_pool(10, 16)                                 # (160, 80)

    b1 = jnp.repeat(p["conv1_b"].astype(f32), 28)[None, :]  # (1, 168)
    b2 = jnp.repeat(p["conv2_b"].astype(f32), 10)[None, :]  # (1, 160)

    # Fold torch's view(-1, 400) = (oc, i, j) flatten into fc1, stored as
    # (i, oc*5+j, n) and padded to 128 output lanes.
    wfc1 = p["fc1_w"].astype(f32).reshape(120, 16, 5, 5)    # [n, oc, i, j]
    wfc1 = jnp.transpose(wfc1, (2, 1, 3, 0)).reshape(5, 80, 120)
    wfc1 = pad_last(wfc1, 128).astype(bf16)                 # (5, 80, 128)
    bfc1 = pad_last(p["fc1_b"].astype(f32)[None, :], 128)   # (1, 128)

    wfc2 = jnp.pad(p["fc2_w"].astype(f32).T, ((0, 8), (0, 44))).astype(bf16)
    bfc2 = pad_last(p["fc2_b"].astype(f32)[None, :], 128)
    wfc3 = jnp.pad(p["fc3_w"].astype(f32).T, ((0, 44), (0, 118))).astype(bf16)
    bfc3 = pad_last(p["fc3_b"].astype(f32)[None, :], 128)

    return dict(t1=t1, b1=b1, q1=q1, t2=t2, b2=b2, q2=q2,
                wfc1=wfc1, bfc1=bfc1, wfc2=wfc2, bfc2=bfc2,
                wfc3=wfc3, bfc3=bfc3)


_WEIGHT_ORDER = ("t1", "b1", "q1", "t2", "b2", "q2",
                 "wfc1", "bfc1", "wfc2", "bfc2", "wfc3", "bfc3")


# --------------------------------- wrapper -----------------------------------

def _pick_batch_tile(batch, block_batch):
    # Multiple-of-8 tile (keeps (8,128)-aligned blocks).  For batches with at
    # least two such tiles, cap the tile at ~ceil(B/2) so the "parallel" grid
    # axis has >= 2 steps and both v7x TensorCores get work.
    half = ((batch + 1) // 2 + 7) // 8 * 8
    return max(8, min(block_batch, half))


def lenet5_forward(packed, x_nchw, *, block_batch=BATCH_TILE):
    """x_nchw: (B, 1, 32, 32) f32 -> (B, 10) softmax probabilities."""
    B = x_nchw.shape[0]
    bt = _pick_batch_tile(B, block_batch)
    b_pad = ((B + bt - 1) // bt) * bt

    x = x_nchw.reshape(B, 32, 32).astype(jnp.float32)
    if b_pad != B:
        x = jnp.pad(x, ((0, b_pad - B), (0, 0), (0, 0)))
    x = x.reshape(b_pad * ROWS_PER_IMG, 32)    # batch*height on the sublane axis

    weights = [packed[k] for k in _WEIGHT_ORDER]

    def full_spec(a):
        nd = a.ndim
        return pl.BlockSpec(a.shape, lambda i: (0,) * nd)

    in_specs = ([pl.BlockSpec((bt * ROWS_PER_IMG, 32), lambda i: (i, 0))]
                + [full_spec(w) for w in weights])

    out = pl.pallas_call(
        lenet5_kernel,
        out_shape=jax.ShapeDtypeStruct((b_pad, 128), jnp.float32),
        grid_spec=pltpu.PrefetchScalarGridSpec(
            num_scalar_prefetch=0,
            grid=(b_pad // bt,),
            in_specs=in_specs,
            out_specs=pl.BlockSpec((bt, 128), lambda i: (i, 0)),
        ),
        compiler_params=pltpu.CompilerParams(
            dimension_semantics=("parallel",),
            vmem_limit_bytes=48 * 1024 * 1024,
        ),
    )(x, *weights)
    return out[:B, :10]


# ------------------------- params + pure-JAX reference -----------------------

def init_params(key):
    ks = jax.random.split(key, 10)
    s = 0.1
    return {
        "conv1_w": jax.random.normal(ks[0], (6, 1, 5, 5), jnp.float32) * s,
        "conv1_b": jax.random.normal(ks[1], (6,), jnp.float32) * s,
        "conv2_w": jax.random.normal(ks[2], (16, 6, 5, 5), jnp.float32) * s,
        "conv2_b": jax.random.normal(ks[3], (16,), jnp.float32) * s,
        "fc1_w": jax.random.normal(ks[4], (120, 400), jnp.float32) * s,
        "fc1_b": jax.random.normal(ks[5], (120,), jnp.float32) * s,
        "fc2_w": jax.random.normal(ks[6], (84, 120), jnp.float32) * s,
        "fc2_b": jax.random.normal(ks[7], (84,), jnp.float32) * s,
        "fc3_w": jax.random.normal(ks[8], (10, 84), jnp.float32) * s,
        "fc3_b": jax.random.normal(ks[9], (10,), jnp.float32) * s,
    }


def lenet5_reference(p, x):
    """Plain-XLA reference matching the PyTorch module exactly."""
    def avgpool_tanh(y):
        return jnp.tanh(0.25 * (y[:, :, 0::2, 0::2] + y[:, :, 0::2, 1::2]
                                + y[:, :, 1::2, 0::2] + y[:, :, 1::2, 1::2]))
    dn = ('NCHW', 'OIHW', 'NCHW')
    y = lax.conv_general_dilated(x, p["conv1_w"], (1, 1), 'VALID',
                                 dimension_numbers=dn)
    y = jnp.tanh(y + p["conv1_b"][None, :, None, None])
    y = avgpool_tanh(y)
    y = lax.conv_general_dilated(y, p["conv2_w"], (1, 1), 'VALID',
                                 dimension_numbers=dn)
    y = jnp.tanh(y + p["conv2_b"][None, :, None, None])
    y = avgpool_tanh(y)
    y = y.reshape(y.shape[0], 400)                       # torch view(-1, 400)
    y = jnp.tanh(y @ p["fc1_w"].T + p["fc1_b"])
    y = jnp.tanh(y @ p["fc2_w"].T + p["fc2_b"])
    y = jnp.tanh(y @ p["fc3_w"].T + p["fc3_b"])
    return jax.nn.softmax(y, axis=-1)


# ----------------------------------- main ------------------------------------

if __name__ == "__main__":
    key = jax.random.PRNGKey(0)
    pkey, xkey = jax.random.split(key)

    params = init_params(pkey)
    packed = pack_params(params)       # one-time weight repacking (hoisted)

    # LeNet-5 requires 32x32 single-channel input so that 16*5*5 = 400 holds.
    x = jax.random.normal(xkey, (2, 1, 32, 32), jnp.float32)

    fwd = jax.jit(lenet5_forward)
    out = jax.block_until_ready(fwd(packed, x))
    ref = jax.block_until_ready(lenet5_reference(params, x))

    assert out.shape == (2, 10)
    assert bool(jnp.all(jnp.isfinite(out)))
    # exact softmax divide -> rows sum to 1 up to f32 rounding
    assert bool(jnp.allclose(jnp.sum(out, axis=1), 1.0, atol=1e-4))
    # matches the plain-XLA reference (bf16 dot operands => loose-ish tol)
    assert bool(jnp.allclose(out, ref, atol=1e-2))

    print("KERNEL_OK")
</pallas_src>

<mosaic_0001>
module attributes {stable_mosaic.version = 11 : i64} {
  func.func @lenet5_kernel(%arg0: i32, %arg1: memref<256x32xf32, #tpu.memory_space<vmem>>, %arg2: memref<5x32x168xbf16, #tpu.memory_space<vmem>>, %arg3: memref<1x168xf32, #tpu.memory_space<vmem>>, %arg4: memref<168x84xbf16, #tpu.memory_space<vmem>>, %arg5: memref<5x84x160xbf16, #tpu.memory_space<vmem>>, %arg6: memref<1x160xf32, #tpu.memory_space<vmem>>, %arg7: memref<160x80xbf16, #tpu.memory_space<vmem>>, %arg8: memref<5x80x128xbf16, #tpu.memory_space<vmem>>, %arg9: memref<1x128xf32, #tpu.memory_space<vmem>>, %arg10: memref<128x128xbf16, #tpu.memory_space<vmem>>, %arg11: memref<1x128xf32, #tpu.memory_space<vmem>>, %arg12: memref<128x128xbf16, #tpu.memory_space<vmem>>, %arg13: memref<1x128xf32, #tpu.memory_space<vmem>>, %arg14: memref<8x128xf32, #tpu.memory_space<vmem>>) attributes {dimension_semantics = [#tpu.dimension_semantics<parallel>], iteration_bounds = array<i64: 1>, scalar_prefetch = 0 : i64, scratch_operands = 0 : i64, tpu.core_type = #tpu.core_type<tc>, window_params = [{transform_indices = @transform_0, window_bounds = array<i64: 256, 32>}, {pipeline_mode = #tpu.pipeline_mode<synchronous>, transform_indices = @transform_1, window_bounds = array<i64: 5, 32, 168>}, {pipeline_mode = #tpu.pipeline_mode<synchronous>, transform_indices = @transform_2, window_bounds = array<i64: 1, 168>}, {pipeline_mode = #tpu.pipeline_mode<synchronous>, transform_indices = @transform_3, window_bounds = array<i64: 168, 84>}, {pipeline_mode = #tpu.pipeline_mode<synchronous>, transform_indices = @transform_4, window_bounds = array<i64: 5, 84, 160>}, {pipeline_mode = #tpu.pipeline_mode<synchronous>, transform_indices = @transform_5, window_bounds = array<i64: 1, 160>}, {pipeline_mode = #tpu.pipeline_mode<synchronous>, transform_indices = @transform_6, window_bounds = array<i64: 160, 80>}, {pipeline_mode = #tpu.pipeline_mode<synchronous>, transform_indices = @transform_7, window_bounds = array<i64: 5, 80, 128>}, {pipeline_mode = #tpu.pipeline_mode<synchronous>, transform_indices = @transform_8, window_bounds = array<i64: 1, 128>}, {pipeline_mode = #tpu.pipeline_mode<synchronous>, transform_indices = @transform_9, window_bounds = array<i64: 128, 128>}, {pipeline_mode = #tpu.pipeline_mode<synchronous>, transform_indices = @transform_10, window_bounds = array<i64: 1, 128>}, {pipeline_mode = #tpu.pipeline_mode<synchronous>, transform_indices = @transform_11, window_bounds = array<i64: 128, 128>}, {pipeline_mode = #tpu.pipeline_mode<synchronous>, transform_indices = @transform_12, window_bounds = array<i64: 1, 128>}, {transform_indices = @transform_13, window_bounds = array<i64: 8, 128>}]} {
    %c0 = arith.constant 0 : index
    %c0_0 = arith.constant 0 : index
    %0 = vector.load %arg1[%c0, %c0_0] : memref<256x32xf32, #tpu.memory_space<vmem>>, vector<256x32xf32>
    %1 = arith.truncf %0 : vector<256x32xf32> to vector<256x32xbf16>
    %c0_1 = arith.constant 0 : index
    %c0_2 = arith.constant 0 : index
    %c0_3 = arith.constant 0 : index
    %2 = vector.load %arg2[%c0_1, %c0_2, %c0_3] : memref<5x32x168xbf16, #tpu.memory_space<vmem>>, vector<1x32x168xbf16>
    %3 = vector.shape_cast %2 : vector<1x32x168xbf16> to vector<32x168xbf16>
    %cst = arith.constant dense<0.000000e+00> : vector<256x168xf32>
    %4 = tpu.matmul %1, %3, %cst {dimension_numbers = #tpu.dot_dimension_numbers<[1], [0], [0], [1], [0, 0, 1, 1], [], []>} : vector<256x32xbf16>, vector<32x168xbf16>, vector<256x168xf32> -> vector<256x168xf32>
    %5 = vector.extract_strided_slice %0 {offsets = [1, 0], sizes = [255, 32], strides = [1, 1]} : vector<256x32xf32> to vector<255x32xf32>
    %cst_4 = arith.constant 0.000000e+00 : f32
    %6 = vector.broadcast %cst_4 : f32 to vector<1x32xf32>
    %7 = tpu.concatenate %5, %6 in 0 : vector<255x32xf32>, vector<1x32xf32> -> vector<256x32xf32>
    %8 = arith.truncf %7 : vector<256x32xf32> to vector<256x32xbf16>
    %c1 = arith.constant 1 : index
    %c0_5 = arith.constant 0 : index
    %c0_6 = arith.constant 0 : index
    %9 = vector.load %arg2[%c1, %c0_5, %c0_6] : memref<5x32x168xbf16, #tpu.memory_space<vmem>>, vector<1x32x168xbf16>
    %10 = vector.shape_cast %9 : vector<1x32x168xbf16> to vector<32x168xbf16>
    %cst_7 = arith.constant dense<0.000000e+00> : vector<256x168xf32>
    %11 = tpu.matmul %8, %10, %cst_7 {dimension_numbers = #tpu.dot_dimension_numbers<[1], [0], [0], [1], [0, 0, 1, 1], [], []>} : vector<256x32xbf16>, vector<32x168xbf16>, vector<256x168xf32> -> vector<256x168xf32>
    %12 = arith.addf %4, %11 : vector<256x168xf32>
    %13 = vector.extract_strided_slice %0 {offsets = [2, 0], sizes = [254, 32], strides = [1, 1]} : vector<256x32xf32> to vector<254x32xf32>
    %cst_8 = arith.constant 0.000000e+00 : f32
    %14 = vector.broadcast %cst_8 : f32 to vector<2x32xf32>
    %15 = tpu.concatenate %13, %14 in 0 : vector<254x32xf32>, vector<2x32xf32> -> vector<256x32xf32>
    %16 = arith.truncf %15 : vector<256x32xf32> to vector<256x32xbf16>
    %c2 = arith.constant 2 : index
    %c0_9 = arith.constant 0 : index
    %c0_10 = arith.constant 0 : index
    %17 = vector.load %arg2[%c2, %c0_9, %c0_10] : memref<5x32x168xbf16, #tpu.memory_space<vmem>>, vector<1x32x168xbf16>
    %18 = vector.shape_cast %17 : vector<1x32x168xbf16> to vector<32x168xbf16>
    %cst_11 = arith.constant dense<0.000000e+00> : vector<256x168xf32>
    %19 = tpu.matmul %16, %18, %cst_11 {dimension_numbers = #tpu.dot_dimension_numbers<[1], [0], [0], [1], [0, 0, 1, 1], [], []>} : vector<256x32xbf16>, vector<32x168xbf16>, vector<256x168xf32> -> vector<256x168xf32>
    %20 = arith.addf %12, %19 : vector<256x168xf32>
    %21 = vector.extract_strided_slice %0 {offsets = [3, 0], sizes = [253, 32], strides = [1, 1]} : vector<256x32xf32> to vector<253x32xf32>
    %cst_12 = arith.constant 0.000000e+00 : f32
    %22 = vector.broadcast %cst_12 : f32 to vector<3x32xf32>
    %23 = tpu.concatenate %21, %22 in 0 : vector<253x32xf32>, vector<3x32xf32> -> vector<256x32xf32>
    %24 = arith.truncf %23 : vector<256x32xf32> to vector<256x32xbf16>
    %c3 = arith.constant 3 : index
    %c0_13 = arith.constant 0 : index
    %c0_14 = arith.constant 0 : index
    %25 = vector.load %arg2[%c3, %c0_13, %c0_14] : memref<5x32x168xbf16, #tpu.memory_space<vmem>>, vector<1x32x168xbf16>
    %26 = vector.shape_cast %25 : vector<1x32x168xbf16> to vector<32x168xbf16>
    %cst_15 = arith.constant dense<0.000000e+00> : vector<256x168xf32>
    %27 = tpu.matmul %24, %26, %cst_15 {dimension_numbers = #tpu.dot_dimension_numbers<[1], [0], [0], [1], [0, 0, 1, 1], [], []>} : vector<256x32xbf16>, vector<32x168xbf16>, vector<256x168xf32> -> vector<256x168xf32>
    %28 = arith.addf %20, %27 : vector<256x168xf32>
    %29 = vector.extract_strided_slice %0 {offsets = [4, 0], sizes = [252, 32], strides = [1, 1]} : vector<256x32xf32> to vector<252x32xf32>
    %cst_16 = arith.constant 0.000000e+00 : f32
    %30 = vector.broadcast %cst_16 : f32 to vector<4x32xf32>
    %31 = tpu.concatenate %29, %30 in 0 : vector<252x32xf32>, vector<4x32xf32> -> vector<256x32xf32>
    %32 = arith.truncf %31 : vector<256x32xf32> to vector<256x32xbf16>
    %c4 = arith.constant 4 : index
    %c0_17 = arith.constant 0 : index
    %c0_18 = arith.constant 0 : index
    %33 = vector.load %arg2[%c4, %c0_17, %c0_18] : memref<5x32x168xbf16, #tpu.memory_space<vmem>>, vector<1x32x168xbf16>
    %34 = vector.shape_cast %33 : vector<1x32x168xbf16> to vector<32x168xbf16>
    %cst_19 = arith.constant dense<0.000000e+00> : vector<256x168xf32>
    %35 = tpu.matmul %32, %34, %cst_19 {dimension_numbers = #tpu.dot_dimension_numbers<[1], [0], [0], [1], [0, 0, 1, 1], [], []>} : vector<256x32xbf16>, vector<32x168xbf16>, vector<256x168xf32> -> vector<256x168xf32>
    %36 = arith.addf %28, %35 : vector<256x168xf32>
    %c0_20 = arith.constant 0 : index
    %c0_21 = arith.constant 0 : index
    %37 = vector.load %arg3[%c0_20, %c0_21] : memref<1x168xf32, #tpu.memory_space<vmem>>, vector<1x168xf32>
    %38 = vector.broadcast %37 : vector<1x168xf32> to vector<256x168xf32>
    %39 = arith.addf %36, %38 : vector<256x168xf32>
    %40 = math.tanh %39 : vector<256x168xf32>
    %41 = arith.truncf %40 : vector<256x168xf32> to vector<256x168xbf16>
    %c0_22 = arith.constant 0 : index
    %c0_23 = arith.constant 0 : index
    %42 = vector.load %arg4[%c0_22, %c0_23] : memref<168x84xbf16, #tpu.memory_space<vmem>>, vector<168x84xbf16>
    %cst_24 = arith.constant dense<0.000000e+00> : vector<256x84xf32>
    %43 = tpu.matmul %41, %42, %cst_24 {dimension_numbers = #tpu.dot_dimension_numbers<[1], [0], [0], [1], [0, 0, 1, 1], [], []>} : vector<256x168xbf16>, vector<168x84xbf16>, vector<256x84xf32> -> vector<256x84xf32>
    %44 = vector.extract_strided_slice %43 {offsets = [1, 0], sizes = [255, 84], strides = [1, 1]} : vector<256x84xf32> to vector<255x84xf32>
    %cst_25 = arith.constant 0.000000e+00 : f32
    %45 = vector.broadcast %cst_25 : f32 to vector<1x84xf32>
    %46 = tpu.concatenate %44, %45 in 0 : vector<255x84xf32>, vector<1x84xf32> -> vector<256x84xf32>
    %47 = arith.addf %43, %46 : vector<256x84xf32>
    %48 = math.tanh %47 : vector<256x84xf32>
    %49 = arith.truncf %48 : vector<256x84xf32> to vector<256x84xbf16>
    %c0_26 = arith.constant 0 : index
    %c0_27 = arith.constant 0 : index
    %c0_28 = arith.constant 0 : index
    %50 = vector.load %arg5[%c0_26, %c0_27, %c0_28] : memref<5x84x160xbf16, #tpu.memory_space<vmem>>, vector<1x84x160xbf16>
    %51 = vector.shape_cast %50 : vector<1x84x160xbf16> to vector<84x160xbf16>
    %cst_29 = arith.constant dense<0.000000e+00> : vector<256x160xf32>
    %52 = tpu.matmul %49, %51, %cst_29 {dimension_numbers = #tpu.dot_dimension_numbers<[1], [0], [0], [1], [0, 0, 1, 1], [], []>} : vector<256x84xbf16>, vector<84x160xbf16>, vector<256x160xf32> -> vector<256x160xf32>
    %53 = vector.extract_strided_slice %48 {offsets = [2, 0], sizes = [254, 84], strides = [1, 1]} : vector<256x84xf32> to vector<254x84xf32>
    %cst_30 = arith.constant 0.000000e+00 : f32
    %54 = vector.broadcast %cst_30 : f32 to vector<2x84xf32>
    %55 = tpu.concatenate %53, %54 in 0 : vector<254x84xf32>, vector<2x84xf32> -> vector<256x84xf32>
    %56 = arith.truncf %55 : vector<256x84xf32> to vector<256x84xbf16>
    %c1_31 = arith.constant 1 : index
    %c0_32 = arith.constant 0 : index
    %c0_33 = arith.constant 0 : index
    %57 = vector.load %arg5[%c1_31, %c0_32, %c0_33] : memref<5x84x160xbf16, #tpu.memory_space<vmem>>, vector<1x84x160xbf16>
    %58 = vector.shape_cast %57 : vector<1x84x160xbf16> to vector<84x160xbf16>
    %cst_34 = arith.constant dense<0.000000e+00> : vector<256x160xf32>
    %59 = tpu.matmul %56, %58, %cst_34 {dimension_numbers = #tpu.dot_dimension_numbers<[1], [0], [0], [1], [0, 0, 1, 1], [], []>} : vector<256x84xbf16>, vector<84x160xbf16>, vector<256x160xf32> -> vector<256x160xf32>
    %60 = arith.addf %52, %59 : vector<256x160xf32>
    %61 = vector.extract_strided_slice %48 {offsets = [4, 0], sizes = [252, 84], strides = [1, 1]} : vector<256x84xf32> to vector<252x84xf32>
    %cst_35 = arith.constant 0.000000e+00 : f32
    %62 = vector.broadcast %cst_35 : f32 to vector<4x84xf32>
    %63 = tpu.concatenate %61, %62 in 0 : vector<252x84xf32>, vector<4x84xf32> -> vector<256x84xf32>
    %64 = arith.truncf %63 : vector<256x84xf32> to vector<256x84xbf16>
    %c2_36 = arith.constant 2 : index
    %c0_37 = arith.constant 0 : index
    %c0_38 = arith.constant 0 : index
    %65 = vector.load %arg5[%c2_36, %c0_37, %c0_38] : memref<5x84x160xbf16, #tpu.memory_space<vmem>>, vector<1x84x160xbf16>
    %66 = vector.shape_cast %65 : vector<1x84x160xbf16> to vector<84x160xbf16>
    %cst_39 = arith.constant dense<0.000000e+00> : vector<256x160xf32>
    %67 = tpu.matmul %64, %66, %cst_39 {dimension_numbers = #tpu.dot_dimension_numbers<[1], [0], [0], [1], [0, 0, 1, 1], [], []>} : vector<256x84xbf16>, vector<84x160xbf16>, vector<256x160xf32> -> vector<256x160xf32>
    %68 = arith.addf %60, %67 : vector<256x160xf32>
    %69 = vector.extract_strided_slice %48 {offsets = [6, 0], sizes = [250, 84], strides = [1, 1]} : vector<256x84xf32> to vector<250x84xf32>
    %cst_40 = arith.constant 0.000000e+00 : f32
    %70 = vector.broadcast %cst_40 : f32 to vector<6x84xf32>
    %71 = tpu.concatenate %69, %70 in 0 : vector<250x84xf32>, vector<6x84xf32> -> vector<256x84xf32>
    %72 = arith.truncf %71 : vector<256x84xf32> to vector<256x84xbf16>
    %c3_41 = arith.constant 3 : index
    %c0_42 = arith.constant 0 : index
    %c0_43 = arith.constant 0 : index
    %73 = vector.load %arg5[%c3_41, %c0_42, %c0_43] : memref<5x84x160xbf16, #tpu.memory_space<vmem>>, vector<1x84x160xbf16>
    %74 = vector.shape_cast %73 : vector<1x84x160xbf16> to vector<84x160xbf16>
    %cst_44 = arith.constant dense<0.000000e+00> : vector<256x160xf32>
    %75 = tpu.matmul %72, %74, %cst_44 {dimension_numbers = #tpu.dot_dimension_numbers<[1], [0], [0], [1], [0, 0, 1, 1], [], []>} : vector<256x84xbf16>, vector<84x160xbf16>, vector<256x160xf32> -> vector<256x160xf32>
    %76 = arith.addf %68, %75 : vector<256x160xf32>
    %77 = vector.extract_strided_slice %48 {offsets = [8, 0], sizes = [248, 84], strides = [1, 1]} : vector<256x84xf32> to vector<248x84xf32>
    %cst_45 = arith.constant 0.000000e+00 : f32
    %78 = vector.broadcast %cst_45 : f32 to vector<8x84xf32>
    %79 = tpu.concatenate %77, %78 in 0 : vector<248x84xf32>, vector<8x84xf32> -> vector<256x84xf32>
    %80 = arith.truncf %79 : vector<256x84xf32> to vector<256x84xbf16>
    %c4_46 = arith.constant 4 : index
    %c0_47 = arith.constant 0 : index
    %c0_48 = arith.constant 0 : index
    %81 = vector.load %arg5[%c4_46, %c0_47, %c0_48] : memref<5x84x160xbf16, #tpu.memory_space<vmem>>, vector<1x84x160xbf16>
    %82 = vector.shape_cast %81 : vector<1x84x160xbf16> to vector<84x160xbf16>
    %cst_49 = arith.constant dense<0.000000e+00> : vector<256x160xf32>
    %83 = tpu.matmul %80, %82, %cst_49 {dimension_numbers = #tpu.dot_dimension_numbers<[1], [0], [0], [1], [0, 0, 1, 1], [], []>} : vector<256x84xbf16>, vector<84x160xbf16>, vector<256x160xf32> -> vector<256x160xf32>
    %84 = arith.addf %76, %83 : vector<256x160xf32>
    %c0_50 = arith.constant 0 : index
    %c0_51 = arith.constant 0 : index
    %85 = vector.load %arg6[%c0_50, %c0_51] : memref<1x160xf32, #tpu.memory_space<vmem>>, vector<1x160xf32>
    %86 = vector.broadcast %85 : vector<1x160xf32> to vector<256x160xf32>
    %87 = arith.addf %84, %86 : vector<256x160xf32>
    %88 = math.tanh %87 : vector<256x160xf32>
    %89 = arith.truncf %88 : vector<256x160xf32> to vector<256x160xbf16>
    %c0_52 = arith.constant 0 : index
    %c0_53 = arith.constant 0 : index
    %90 = vector.load %arg7[%c0_52, %c0_53] : memref<160x80xbf16, #tpu.memory_space<vmem>>, vector<160x80xbf16>
    %cst_54 = arith.constant dense<0.000000e+00> : vector<256x80xf32>
    %91 = tpu.matmul %89, %90, %cst_54 {dimension_numbers = #tpu.dot_dimension_numbers<[1], [0], [0], [1], [0, 0, 1, 1], [], []>} : vector<256x160xbf16>, vector<160x80xbf16>, vector<256x80xf32> -> vector<256x80xf32>
    %92 = vector.extract_strided_slice %91 {offsets = [2, 0], sizes = [254, 80], strides = [1, 1]} : vector<256x80xf32> to vector<254x80xf32>
    %cst_55 = arith.constant 0.000000e+00 : f32
    %93 = vector.broadcast %cst_55 : f32 to vector<2x80xf32>
    %94 = tpu.concatenate %92, %93 in 0 : vector<254x80xf32>, vector<2x80xf32> -> vector<256x80xf32>
    %95 = arith.addf %91, %94 : vector<256x80xf32>
    %96 = math.tanh %95 : vector<256x80xf32>
    %97 = arith.truncf %96 : vector<256x80xf32> to vector<256x80xbf16>
    %98 = tpu.iota {dimensions = array<i32: 1>} : vector<8x256xi32>
    %99 = tpu.iota {dimensions = array<i32: 0>} : vector<8x256xi32>
    %c32_i32 = arith.constant 32 : i32
    %100 = vector.broadcast %c32_i32 : i32 to vector<8x256xi32>
    %101 = arith.muli %99, %100 : vector<8x256xi32>
    %102 = arith.subi %98, %101 : vector<8x256xi32>
    %c0_56 = arith.constant 0 : index
    %c0_57 = arith.constant 0 : index
    %103 = vector.load %arg9[%c0_56, %c0_57] : memref<1x128xf32, #tpu.memory_space<vmem>>, vector<1x128xf32>
    %c0_i32 = arith.constant 0 : i32
    %104 = vector.broadcast %c0_i32 : i32 to vector<8x256xi32>
    %105 = arith.cmpi eq, %102, %104 : vector<8x256xi32>
    %106 = arith.extui %105 : vector<8x256xi1> to vector<8x256xi32>
    %107 = arith.sitofp %106 : vector<8x256xi32> to vector<8x256xf32>
    %108 = arith.truncf %107 : vector<8x256xf32> to vector<8x256xbf16>
    %cst_58 = arith.constant dense<0.000000e+00> : vector<8x80xf32>
    %109 = tpu.matmul %108, %97, %cst_58 {dimension_numbers = #tpu.dot_dimension_numbers<[1], [0], [0], [1], [0, 0, 1, 1], [], []>} : vector<8x256xbf16>, vector<256x80xbf16>, vector<8x80xf32> -> vector<8x80xf32>
    %110 = arith.truncf %109 : vector<8x80xf32> to vector<8x80xbf16>
    %c0_59 = arith.constant 0 : index
    %c0_60 = arith.constant 0 : index
    %c0_61 = arith.constant 0 : index
    %111 = vector.load %arg8[%c0_59, %c0_60, %c0_61] : memref<5x80x128xbf16, #tpu.memory_space<vmem>>, vector<1x80x128xbf16>
    %112 = vector.shape_cast %111 : vector<1x80x128xbf16> to vector<80x128xbf16>
    %cst_62 = arith.constant dense<0.000000e+00> : vector<8x128xf32>
    %113 = tpu.matmul %110, %112, %cst_62 {dimension_numbers = #tpu.dot_dimension_numbers<[1], [0], [0], [1], [0, 0, 1, 1], [], []>} : vector<8x80xbf16>, vector<80x128xbf16>, vector<8x128xf32> -> vector<8x128xf32>
    %114 = vector.broadcast %103 : vector<1x128xf32> to vector<8x128xf32>
    %115 = arith.addf %114, %113 : vector<8x128xf32>
    %c4_i32 = arith.constant 4 : i32
    %116 = vector.broadcast %c4_i32 : i32 to vector<8x256xi32>
    %117 = arith.cmpi eq, %102, %116 : vector<8x256xi32>
    %118 = arith.extui %117 : vector<8x256xi1> to vector<8x256xi32>
    %119 = arith.sitofp %118 : vector<8x256xi32> to vector<8x256xf32>
    %120 = arith.truncf %119 : vector<8x256xf32> to vector<8x256xbf16>
    %cst_63 = arith.constant dense<0.000000e+00> : vector<8x80xf32>
    %121 = tpu.matmul %120, %97, %cst_63 {dimension_numbers = #tpu.dot_dimension_numbers<[1], [0], [0], [1], [0, 0, 1, 1], [], []>} : vector<8x256xbf16>, vector<256x80xbf16>, vector<8x80xf32> -> vector<8x80xf32>
    %122 = arith.truncf %121 : vector<8x80xf32> to vector<8x80xbf16>
    %c1_64 = arith.constant 1 : index
    %c0_65 = arith.constant 0 : index
    %c0_66 = arith.constant 0 : index
    %123 = vector.load %arg8[%c1_64, %c0_65, %c0_66] : memref<5x80x128xbf16, #tpu.memory_space<vmem>>, vector<1x80x128xbf16>
    %124 = vector.shape_cast %123 : vector<1x80x128xbf16> to vector<80x128xbf16>
    %cst_67 = arith.constant dense<0.000000e+00> : vector<8x128xf32>
    %125 = tpu.matmul %122, %124, %cst_67 {dimension_numbers = #tpu.dot_dimension_numbers<[1], [0], [0], [1], [0, 0, 1, 1], [], []>} : vector<8x80xbf16>, vector<80x128xbf16>, vector<8x128xf32> -> vector<8x128xf32>
    %126 = arith.addf %115, %125 : vector<8x128xf32>
    %c8_i32 = arith.constant 8 : i32
    %127 = vector.broadcast %c8_i32 : i32 to vector<8x256xi32>
    %128 = arith.cmpi eq, %102, %127 : vector<8x256xi32>
    %129 = arith.extui %128 : vector<8x256xi1> to vector<8x256xi32>
    %130 = arith.sitofp %129 : vector<8x256xi32> to vector<8x256xf32>
    %131 = arith.truncf %130 : vector<8x256xf32> to vector<8x256xbf16>
    %cst_68 = arith.constant dense<0.000000e+00> : vector<8x80xf32>
    %132 = tpu.matmul %131, %97, %cst_68 {dimension_numbers = #tpu.dot_dimension_numbers<[1], [0], [0], [1], [0, 0, 1, 1], [], []>} : vector<8x256xbf16>, vector<256x80xbf16>, vector<8x80xf32> -> vector<8x80xf32>
    %133 = arith.truncf %132 : vector<8x80xf32> to vector<8x80xbf16>
    %c2_69 = arith.constant 2 : index
    %c0_70 = arith.constant 0 : index
    %c0_71 = arith.constant 0 : index
    %134 = vector.load %arg8[%c2_69, %c0_70, %c0_71] : memref<5x80x128xbf16, #tpu.memory_space<vmem>>, vector<1x80x128xbf16>
    %135 = vector.shape_cast %134 : vector<1x80x128xbf16> to vector<80x128xbf16>
    %cst_72 = arith.constant dense<0.000000e+00> : vector<8x128xf32>
    %136 = tpu.matmul %133, %135, %cst_72 {dimension_numbers = #tpu.dot_dimension_numbers<[1], [0], [0], [1], [0, 0, 1, 1], [], []>} : vector<8x80xbf16>, vector<80x128xbf16>, vector<8x128xf32> -> vector<8x128xf32>
    %137 = arith.addf %126, %136 : vector<8x128xf32>
    %c12_i32 = arith.constant 12 : i32
    %138 = vector.broadcast %c12_i32 : i32 to vector<8x256xi32>
    %139 = arith.cmpi eq, %102, %138 : vector<8x256xi32>
    %140 = arith.extui %139 : vector<8x256xi1> to vector<8x256xi32>
    %141 = arith.sitofp %140 : vector<8x256xi32> to vector<8x256xf32>
    %142 = arith.truncf %141 : vector<8x256xf32> to vector<8x256xbf16>
    %cst_73 = arith.constant dense<0.000000e+00> : vector<8x80xf32>
    %143 = tpu.matmul %142, %97, %cst_73 {dimension_numbers = #tpu.dot_dimension_numbers<[1], [0], [0], [1], [0, 0, 1, 1], [], []>} : vector<8x256xbf16>, vector<256x80xbf16>, vector<8x80xf32> -> vector<8x80xf32>
    %144 = arith.truncf %143 : vector<8x80xf32> to vector<8x80xbf16>
    %c3_74 = arith.constant 3 : index
    %c0_75 = arith.constant 0 : index
    %c0_76 = arith.constant 0 : index
    %145 = vector.load %arg8[%c3_74, %c0_75, %c0_76] : memref<5x80x128xbf16, #tpu.memory_space<vmem>>, vector<1x80x128xbf16>
    %146 = vector.shape_cast %145 : vector<1x80x128xbf16> to vector<80x128xbf16>
    %cst_77 = arith.constant dense<0.000000e+00> : vector<8x128xf32>
    %147 = tpu.matmul %144, %146, %cst_77 {dimension_numbers = #tpu.dot_dimension_numbers<[1], [0], [0], [1], [0, 0, 1, 1], [], []>} : vector<8x80xbf16>, vector<80x128xbf16>, vector<8x128xf32> -> vector<8x128xf32>
    %148 = arith.addf %137, %147 : vector<8x128xf32>
    %c16_i32 = arith.constant 16 : i32
    %149 = vector.broadcast %c16_i32 : i32 to vector<8x256xi32>
    %150 = arith.cmpi eq, %102, %149 : vector<8x256xi32>
    %151 = arith.extui %150 : vector<8x256xi1> to vector<8x256xi32>
    %152 = arith.sitofp %151 : vector<8x256xi32> to vector<8x256xf32>
    %153 = arith.truncf %152 : vector<8x256xf32> to vector<8x256xbf16>
    %cst_78 = arith.constant dense<0.000000e+00> : vector<8x80xf32>
    %154 = tpu.matmul %153, %97, %cst_78 {dimension_numbers = #tpu.dot_dimension_numbers<[1], [0], [0], [1], [0, 0, 1, 1], [], []>} : vector<8x256xbf16>, vector<256x80xbf16>, vector<8x80xf32> -> vector<8x80xf32>
    %155 = arith.truncf %154 : vector<8x80xf32> to vector<8x80xbf16>
    %c4_79 = arith.constant 4 : index
    %c0_80 = arith.constant 0 : index
    %c0_81 = arith.constant 0 : index
    %156 = vector.load %arg8[%c4_79, %c0_80, %c0_81] : memref<5x80x128xbf16, #tpu.memory_space<vmem>>, vector<1x80x128xbf16>
    %157 = vector.shape_cast %156 : vector<1x80x128xbf16> to vector<80x128xbf16>
    %cst_82 = arith.constant dense<0.000000e+00> : vector<8x128xf32>
    %158 = tpu.matmul %155, %157, %cst_82 {dimension_numbers = #tpu.dot_dimension_numbers<[1], [0], [0], [1], [0, 0, 1, 1], [], []>} : vector<8x80xbf16>, vector<80x128xbf16>, vector<8x128xf32> -> vector<8x128xf32>
    %159 = arith.addf %148, %158 : vector<8x128xf32>
    %160 = math.tanh %159 : vector<8x128xf32>
    %161 = arith.truncf %160 : vector<8x128xf32> to vector<8x128xbf16>
    %c0_83 = arith.constant 0 : index
    %c0_84 = arith.constant 0 : index
    %162 = vector.load %arg10[%c0_83, %c0_84] : memref<128x128xbf16, #tpu.memory_space<vmem>>, vector<128x128xbf16>
    %cst_85 = arith.constant dense<0.000000e+00> : vector<8x128xf32>
    %163 = tpu.matmul %161, %162, %cst_85 {dimension_numbers = #tpu.dot_dimension_numbers<[1], [0], [0], [1], [0, 0, 1, 1], [], []>} : vector<8x128xbf16>, vector<128x128xbf16>, vector<8x128xf32> -> vector<8x128xf32>
    %c0_86 = arith.constant 0 : index
    %c0_87 = arith.constant 0 : index
    %164 = vector.load %arg11[%c0_86, %c0_87] : memref<1x128xf32, #tpu.memory_space<vmem>>, vector<1x128xf32>
    %165 = vector.broadcast %164 : vector<1x128xf32> to vector<8x128xf32>
    %166 = arith.addf %163, %165 : vector<8x128xf32>
    %167 = math.tanh %166 : vector<8x128xf32>
    %168 = arith.truncf %167 : vector<8x128xf32> to vector<8x128xbf16>
    %c0_88 = arith.constant 0 : index
    %c0_89 = arith.constant 0 : index
    %169 = vector.load %arg12[%c0_88, %c0_89] : memref<128x128xbf16, #tpu.memory_space<vmem>>, vector<128x128xbf16>
    %cst_90 = arith.constant dense<0.000000e+00> : vector<8x128xf32>
    %170 = tpu.matmul %168, %169, %cst_90 {dimension_numbers = #tpu.dot_dimension_numbers<[1], [0], [0], [1], [0, 0, 1, 1], [], []>} : vector<8x128xbf16>, vector<128x128xbf16>, vector<8x128xf32> -> vector<8x128xf32>
    %c0_91 = arith.constant 0 : index
    %c0_92 = arith.constant 0 : index
    %171 = vector.load %arg13[%c0_91, %c0_92] : memref<1x128xf32, #tpu.memory_space<vmem>>, vector<1x128xf32>
    %172 = vector.broadcast %171 : vector<1x128xf32> to vector<8x128xf32>
    %173 = arith.addf %170, %172 : vector<8x128xf32>
    %174 = math.tanh %173 : vector<8x128xf32>
    %175 = tpu.iota {dimensions = array<i32: 1>} : vector<8x128xi32>
    %c10_i32 = arith.constant 10 : i32
    %176 = vector.broadcast %c10_i32 : i32 to vector<8x128xi32>
    %177 = arith.cmpi slt, %175, %176 : vector<8x128xi32>
    %cst_93 = arith.constant -1.000000e+30 : f32
    %178 = vector.broadcast %cst_93 : f32 to vector<8x128xf32>
    %179 = arith.select %177, %174, %178 : vector<8x128xi1>, vector<8x128xf32>
    %cst_94 = arith.constant dense<0xFF800000> : vector<8xf32>
    %180 = vector.multi_reduction <maximumf>, %179, %cst_94 [1] : vector<8x128xf32> to vector<8xf32>
    %181 = vector.shape_cast %180 : vector<8xf32> to vector<8x1xf32>
    %182 = vector.broadcast %181 : vector<8x1xf32> to vector<8x128xf32>
    %183 = arith.subf %179, %182 : vector<8x128xf32>
    %184 = math.exp %183 : vector<8x128xf32>
    %cst_95 = arith.constant dense<0.000000e+00> : vector<8xf32>
    %185 = vector.multi_reduction <add>, %184, %cst_95 [1] : vector<8x128xf32> to vector<8xf32>
    %186 = vector.shape_cast %185 : vector<8xf32> to vector<8x1xf32>
    %187 = vector.broadcast %186 : vector<8x1xf32> to vector<8x128xf32>
    %188 = arith.divf %184, %187 : vector<8x128xf32>
    %c0_96 = arith.constant 0 : index
    %c0_97 = arith.constant 0 : index
    %189 = vector.load %arg14[%c0_96, %c0_97] : memref<8x128xf32, #tpu.memory_space<vmem>>, vector<8x128xf32>
    tpu.vector_store %arg14[%c0_96, %c0_97], %188 {strides = array<i32>} : memref<8x128xf32, #tpu.memory_space<vmem>>, vector<8x128xf32>,
    return
  }
  func.func @transform_0(%arg0: i32) -> (i32, i32) {
    %c0_i32 = arith.constant 0 : i32
    %c0_i32_0 = arith.constant 0 : i32
    return %arg0, %c0_i32 : i32, i32
  }
  func.func @transform_1(%arg0: i32) -> (i32, i32, i32) {
    %c0_i32 = arith.constant 0 : i32
    %c0_i32_0 = arith.constant 0 : i32
    %c0_i32_1 = arith.constant 0 : i32
    %c0_i32_2 = arith.constant 0 : i32
    return %c0_i32, %c0_i32_0, %c0_i32_1 : i32, i32, i32
  }
  func.func @transform_2(%arg0: i32) -> (i32, i32) {
    %c0_i32 = arith.constant 0 : i32
    %c0_i32_0 = arith.constant 0 : i32
    %c0_i32_1 = arith.constant 0 : i32
    return %c0_i32, %c0_i32_0 : i32, i32
  }
  func.func @transform_3(%arg0: i32) -> (i32, i32) {
    %c0_i32 = arith.constant 0 : i32
    %c0_i32_0 = arith.constant 0 : i32
    %c0_i32_1 = arith.constant 0 : i32
    return %c0_i32, %c0_i32_0 : i32, i32
  }
  func.func @transform_4(%arg0: i32) -> (i32, i32, i32) {
    %c0_i32 = arith.constant 0 : i32
    %c0_i32_0 = arith.constant 0 : i32
    %c0_i32_1 = arith.constant 0 : i32
    %c0_i32_2 = arith.constant 0 : i32
    return %c0_i32, %c0_i32_0, %c0_i32_1 : i32, i32, i32
  }
  func.func @transform_5(%arg0: i32) -> (i32, i32) {
    %c0_i32 = arith.constant 0 : i32
    %c0_i32_0 = arith.constant 0 : i32
    %c0_i32_1 = arith.constant 0 : i32
    return %c0_i32, %c0_i32_0 : i32, i32
  }
  func.func @transform_6(%arg0: i32) -> (i32, i32) {
    %c0_i32 = arith.constant 0 : i32
    %c0_i32_0 = arith.constant 0 : i32
    %c0_i32_1 = arith.constant 0 : i32
    return %c0_i32, %c0_i32_0 : i32, i32
  }
  func.func @transform_7(%arg0: i32) -> (i32, i32, i32) {
    %c0_i32 = arith.constant 0 : i32
    %c0_i32_0 = arith.constant 0 : i32
    %c0_i32_1 = arith.constant 0 : i32
    %c0_i32_2 = arith.constant 0 : i32
    return %c0_i32, %c0_i32_0, %c0_i32_1 : i32, i32, i32
  }
  func.func @transform_8(%arg0: i32) -> (i32, i32) {
    %c0_i32 = arith.constant 0 : i32
    %c0_i32_0 = arith.constant 0 : i32
    %c0_i32_1 = arith.constant 0 : i32
    return %c0_i32, %c0_i32_0 : i32, i32
  }
  func.func @transform_9(%arg0: i32) -> (i32, i32) {
    %c0_i32 = arith.constant 0 : i32
    %c0_i32_0 = arith.constant 0 : i32
    %c0_i32_1 = arith.constant 0 : i32
    return %c0_i32, %c0_i32_0 : i32, i32
  }
  func.func @transform_10(%arg0: i32) -> (i32, i32) {
    %c0_i32 = arith.constant 0 : i32
    %c0_i32_0 = arith.constant 0 : i32
    %c0_i32_1 = arith.constant 0 : i32
    return %c0_i32, %c0_i32_0 : i32, i32
  }
  func.func @transform_11(%arg0: i32) -> (i32, i32) {
    %c0_i32 = arith.constant 0 : i32
    %c0_i32_0 = arith.constant 0 : i32
    %c0_i32_1 = arith.constant 0 : i32
    return %c0_i32, %c0_i32_0 : i32, i32
  }
  func.func @transform_12(%arg0: i32) -> (i32, i32) {
    %c0_i32 = arith.constant 0 : i32
    %c0_i32_0 = arith.constant 0 : i32
    %c0_i32_1 = arith.constant 0 : i32
    return %c0_i32, %c0_i32_0 : i32, i32
  }
  func.func @transform_13(%arg0: i32) -> (i32, i32) {
    %c0_i32 = arith.constant 0 : i32
    %c0_i32_0 = arith.constant 0 : i32
    return %arg0, %c0_i32 : i32, i32
  }
}

</mosaic_0001>

<llo_original>
// kernel: lenet5_forward.1
$region0: #{lenet5_forward.1}
  #allocation0 [shape = 'u32[]', space=smem, size = 0x4, offset = 0x4, fixed_abs, tag = 'smem constant byte address 0x4 - core index']
  #allocation1 [shape = 'u32[72,128]{1,0:T(1,128)}', space=vmem, size = 0x9000, scoped, tag = 'internal scratch']
  %s0 = inlined_call_operand.vmem [shape: f32[256,32], index: 0, kind: input, shape index: {}]
  %s1 = inlined_call_operand.vmem [shape: bf16[5,32,168], index: 1, kind: input, shape index: {}]
  %s2 = inlined_call_operand.vmem [shape: f32[1,168], index: 2, kind: input, shape index: {}]
  %s3 = inlined_call_operand.vmem [shape: bf16[168,84], index: 3, kind: input, shape index: {}]
  %s4 = inlined_call_operand.vmem [shape: bf16[5,84,160], index: 4, kind: input, shape index: {}]
  %s5 = inlined_call_operand.vmem [shape: f32[1,160], index: 5, kind: input, shape index: {}]
  %s6 = inlined_call_operand.vmem [shape: bf16[160,80], index: 6, kind: input, shape index: {}]
  %s7 = inlined_call_operand.vmem [shape: bf16[5,80,128], index: 7, kind: input, shape index: {}]
  %s8 = inlined_call_operand.vmem [shape: f32[1,128], index: 8, kind: input, shape index: {}]
  %s9 = inlined_call_operand.vmem [shape: bf16[128,128], index: 9, kind: input, shape index: {}]
  %s10 = inlined_call_operand.vmem [shape: f32[1,128], index: 10, kind: input, shape index: {}]
  %s11 = inlined_call_operand.vmem [shape: bf16[128,128], index: 11, kind: input, shape index: {}]
  %s12 = inlined_call_operand.vmem [shape: f32[1,128], index: 12, kind: input, shape index: {}]
  %s13 = inlined_call_operand.vmem [shape: f32[8,128], index: 13, kind: output, shape index: {}]
  %s14 = sld [smem:[#allocation0]]
  $region62: #{lenet5_forward.1} parent=0
    _
  %s16 = ssub.s32 1, %s14
  %s17 = scalar_select 0, %s16, %s14
  // Predicated region
  $region2: #{lenet5_forward.1} parent=0 // pred_check
    _
  $region3: #{lenet5_forward.1} parent=0 // pred_check_branch
    %19 = sbr.rel (0) target = $region5
  $region4: #{lenet5_forward.1} parent=0 // pred_region
    _
  $region5: #{lenet5_forward.1} parent=0 // pred_fallthru
    _
  // Predicated region
  $region6: #{lenet5_forward.1} parent=0 // pred_check
    _
  $region7: #{lenet5_forward.1} parent=0 // pred_check_branch
    %21 = sbr.rel (0) target = $region9
  $region8: #{lenet5_forward.1} parent=0 // pred_region
    _
  $region9: #{lenet5_forward.1} parent=0 // pred_fallthru
    _
  // Predicated region
  $region10: #{lenet5_forward.1} parent=0 // pred_check
    _
  $region11: #{lenet5_forward.1} parent=0 // pred_check_branch
    %23 = sbr.rel (0) target = $region13
  $region12: #{lenet5_forward.1} parent=0 // pred_region
    _
  $region13: #{lenet5_forward.1} parent=0 // pred_fallthru
    _
  // Predicated region
  $region14: #{lenet5_forward.1} parent=0 // pred_check
    _
  $region15: #{lenet5_forward.1} parent=0 // pred_check_branch
    %25 = sbr.rel (0) target = $region17
  $region16: #{lenet5_forward.1} parent=0 // pred_region
    _
  $region17: #{lenet5_forward.1} parent=0 // pred_fallthru
    _
  // Predicated region
  $region18: #{lenet5_forward.1} parent=0 // pred_check
    _
  $region19: #{lenet5_forward.1} parent=0 // pred_check_branch
    %27 = sbr.rel (0) target = $region21
  $region20: #{lenet5_forward.1} parent=0 // pred_region
    _
  $region21: #{lenet5_forward.1} parent=0 // pred_fallthru
    _
  // Predicated region
  $region22: #{lenet5_forward.1} parent=0 // pred_check
    _
  $region23: #{lenet5_forward.1} parent=0 // pred_check_branch
    %29 = sbr.rel (0) target = $region25
  $region24: #{lenet5_forward.1} parent=0 // pred_region
    _
  $region25: #{lenet5_forward.1} parent=0 // pred_fallthru
    _
  // Predicated region
  $region26: #{lenet5_forward.1} parent=0 // pred_check
    _
  $region27: #{lenet5_forward.1} parent=0 // pred_check_branch
    %31 = sbr.rel (0) target = $region29
  $region28: #{lenet5_forward.1} parent=0 // pred_region
    _
  $region29: #{lenet5_forward.1} parent=0 // pred_fallthru
    _
  // Predicated region
  $region30: #{lenet5_forward.1} parent=0 // pred_check
    _
  $region31: #{lenet5_forward.1} parent=0 // pred_check_branch
    %33 = sbr.rel (0) target = $region33
  $region32: #{lenet5_forward.1} parent=0 // pred_region
    _
  $region33: #{lenet5_forward.1} parent=0 // pred_fallthru
    _
  // Predicated region
  $region34: #{lenet5_forward.1} parent=0 // pred_check
    _
  $region35: #{lenet5_forward.1} parent=0 // pred_check_branch
    %35 = sbr.rel (0) target = $region37
  $region36: #{lenet5_forward.1} parent=0 // pred_region
    _
  $region37: #{lenet5_forward.1} parent=0 // pred_fallthru
    _
  // Predicated region
  $region38: #{lenet5_forward.1} parent=0 // pred_check
    _
  $region39: #{lenet5_forward.1} parent=0 // pred_check_branch
    %37 = sbr.rel (0) target = $region41
  $region40: #{lenet5_forward.1} parent=0 // pred_region
    _
  $region41: #{lenet5_forward.1} parent=0 // pred_fallthru
    _
  // Predicated region
  $region42: #{lenet5_forward.1} parent=0 // pred_check
    _
  $region43: #{lenet5_forward.1} parent=0 // pred_check_branch
    %39 = sbr.rel (0) target = $region45
  $region44: #{lenet5_forward.1} parent=0 // pred_region
    _
  $region45: #{lenet5_forward.1} parent=0 // pred_fallthru
    _
  // Predicated region
  $region46: #{lenet5_forward.1} parent=0 // pred_check
    _
  $region47: #{lenet5_forward.1} parent=0 // pred_check_branch
    %41 = sbr.rel (0) target = $region49
  $region48: #{lenet5_forward.1} parent=0 // pred_region
    _
  $region49: #{lenet5_forward.1} parent=0 // pred_fallthru
    _
  // Predicated region
  $region50: #{lenet5_forward.1} parent=0 // pred_check
    _
  $region51: #{lenet5_forward.1} parent=0 // pred_check_branch
    %43 = sbr.rel (0) target = $region53
  $region52: #{lenet5_forward.1} parent=0 // pred_region
    _
  $region53: #{lenet5_forward.1} parent=0 // pred_fallthru
    _
  %v45 = vld [vmem:[%s0] sm:$0xff]
  %v46 = vld [vmem:[%s0 + $0x8] sm:$0xff]
  %v47 = vld [vmem:[%s0 + $0x10] sm:$0xff]
  %v48 = vld [vmem:[%s0 + $0x18] sm:$0xff]
  %v49 = vld [vmem:[%s0 + $0x20] sm:$0xff]
  %v50 = vld [vmem:[%s0 + $0x28] sm:$0xff]
  %v51 = vld [vmem:[%s0 + $0x30] sm:$0xff]
  %v52 = vld [vmem:[%s0 + $0x38] sm:$0xff]
  %v53 = vld [vmem:[%s0 + $0x40] sm:$0xff]
  %v54 = vld [vmem:[%s0 + $0x48] sm:$0xff]
  %v55 = vld [vmem:[%s0 + $0x50] sm:$0xff]
  %v56 = vld [vmem:[%s0 + $0x58] sm:$0xff]
  %v57 = vld [vmem:[%s0 + $0x60] sm:$0xff]
  %v58 = vld [vmem:[%s0 + $0x68] sm:$0xff]
  %v59 = vld [vmem:[%s0 + $0x70] sm:$0xff]
  %v60 = vld [vmem:[%s0 + $0x78] sm:$0xff]
  %v61 = vld [vmem:[%s0 + $0x80] sm:$0xff]
  %v62 = vld [vmem:[%s0 + $0x88] sm:$0xff]
  %v63 = vld [vmem:[%s0 + $0x90] sm:$0xff]
  %v64 = vld [vmem:[%s0 + $0x98] sm:$0xff]
  %v65 = vld [vmem:[%s0 + $0xa0] sm:$0xff]
  %v66 = vld [vmem:[%s0 + $0xa8] sm:$0xff]
  %v67 = vld [vmem:[%s0 + $0xb0] sm:$0xff]
  %v68 = vld [vmem:[%s0 + $0xb8] sm:$0xff]
  %v69 = vld [vmem:[%s0 + $0xc0] sm:$0xff]
  %v70 = vld [vmem:[%s0 + $0xc8] sm:$0xff]
  %v71 = vld [vmem:[%s0 + $0xd0] sm:$0xff]
  %v72 = vld [vmem:[%s0 + $0xd8] sm:$0xff]
  %v73 = vld [vmem:[%s0 + $0xe0] sm:$0xff]
  %v74 = vld [vmem:[%s0 + $0xe8] sm:$0xff]
  %v75 = vld [vmem:[%s0 + $0xf0] sm:$0xff]
  %v76 = vld [vmem:[%s0 + $0xf8] sm:$0xff]
  %v77 = vpack.c.bf16 %v46, %v45
  %v78 = vpack.c.bf16 %v48, %v47
  %v79 = vpack.c.bf16 %v50, %v49
  %v80 = vpack.c.bf16 %v52, %v51
  %v81 = vpack.c.bf16 %v54, %v53
  %v82 = vpack.c.bf16 %v56, %v55
  %v83 = vpack.c.bf16 %v58, %v57
  %v84 = vpack.c.bf16 %v60, %v59
  %v85 = vpack.c.bf16 %v62, %v61
  %v86 = vpack.c.bf16 %v64, %v63
  %v87 = vpack.c.bf16 %v66, %v65
  %v88 = vpack.c.bf16 %v68, %v67
  %v89 = vpack.c.bf16 %v70, %v69
  %v90 = vpack.c.bf16 %v72, %v71
  %v91 = vpack.c.bf16 %v74, %v73
  %v92 = vpack.c.bf16 %v76, %v75
  %v93 = vld [vmem:[%s1] sm:$0xff]
  %v94 = vld [vmem:[%s1 + $0x8] sm:$0xff]
  %v95 = vld [vmem:[%s1 + $0x10] sm:$0xff]
  %v96 = vld [vmem:[%s1 + $0x18] sm:$0xff]
  %vm129 = vcmask 1046528
  %v130 = vrot.slane %v45, 1
  %v131 = vrot.slane %v46, 1
  %v132 = vsel %vm129, %v130, %v131
  %v133 = vrot.slane %v47, 1
  %v134 = vsel %vm129, %v131, %v133
  %v135 = vrot.slane %v48, 1
  %v136 = vsel %vm129, %v133, %v135
  %v137 = vrot.slane %v49, 1
  %v138 = vsel %vm129, %v135, %v137
  %v139 = vrot.slane %v50, 1
  %v140 = vsel %vm129, %v137, %v139
  %v141 = vrot.slane %v51, 1
  %v142 = vsel %vm129, %v139, %v141
  %v143 = vrot.slane %v52, 1
  %v144 = vsel %vm129, %v141, %v143
  %v145 = vrot.slane %v53, 1
  %v146 = vsel %vm129, %v143, %v145
  %v147 = vrot.slane %v54, 1
  %v148 = vsel %vm129, %v145, %v147
  %v149 = vrot.slane %v55, 1
  %v150 = vsel %vm129, %v147, %v149
  %v151 = vrot.slane %v56, 1
  %v152 = vsel %vm129, %v149, %v151
  %v153 = vrot.slane %v57, 1
  %v154 = vsel %vm129, %v151, %v153
  %v155 = vrot.slane %v58, 1
  %v156 = vsel %vm129, %v153, %v155
  %v157 = vrot.slane %v59, 1
  %v158 = vsel %vm129, %v155, %v157
  %v159 = vrot.slane %v60, 1
  %v160 = vsel %vm129, %v157, %v159
  %v161 = vrot.slane %v61, 1
  %v162 = vsel %vm129, %v159, %v161
  %v163 = vrot.slane %v62, 1
  %v164 = vsel %vm129, %v161, %v163
  %v165 = vrot.slane %v63, 1
  %v166 = vsel %vm129, %v163, %v165
  %v167 = vrot.slane %v64, 1
  %v168 = vsel %vm129, %v165, %v167
  %v169 = vrot.slane %v65, 1
  %v170 = vsel %vm129, %v167, %v169
  %v171 = vrot.slane %v66, 1
  %v172 = vsel %vm129, %v169, %v171
  %v173 = vrot.slane %v67, 1
  %v174 = vsel %vm129, %v171, %v173
  %v175 = vrot.slane %v68, 1
  %v176 = vsel %vm129, %v173, %v175
  %v177 = vrot.slane %v69, 1
  %v178 = vsel %vm129, %v175, %v177
  %v179 = vrot.slane %v70, 1
  %v180 = vsel %vm129, %v177, %v179
  %v181 = vrot.slane %v71, 1
  %v182 = vsel %vm129, %v179, %v181
  %v183 = vrot.slane %v72, 1
  %v184 = vsel %vm129, %v181, %v183
  %v185 = vrot.slane %v73, 1
  %v186 = vsel %vm129, %v183, %v185
  %v187 = vrot.slane %v74, 1
  %v188 = vsel %vm129, %v185, %v187
  %v189 = vrot.slane %v75, 1
  %v190 = vsel %vm129, %v187, %v189
  %v191 = vrot.slane %v76, 1
  %v192 = vsel %vm129, %v189, %v191
  %v225 = vsel %vm129, %v191, 0.0
  %v226 = vpack.c.bf16 %v134, %v132
  %v227 = vpack.c.bf16 %v138, %v136
  %v228 = vpack.c.bf16 %v142, %v140
  %v229 = vpack.c.bf16 %v146, %v144
  %v230 = vpack.c.bf16 %v150, %v148
  %v231 = vpack.c.bf16 %v154, %v152
  %v232 = vpack.c.bf16 %v158, %v156
  %v233 = vpack.c.bf16 %v162, %v160
  %v234 = vpack.c.bf16 %v166, %v164
  %v235 = vpack.c.bf16 %v170, %v168
  %v236 = vpack.c.bf16 %v174, %v172
  %v237 = vpack.c.bf16 %v178, %v176
  %v238 = vpack.c.bf16 %v182, %v180
  %v239 = vpack.c.bf16 %v186, %v184
  %v240 = vpack.c.bf16 %v190, %v188
  %v241 = vpack.c.bf16 %v225, %v192
  %s242 = scalar_lea.vmem %s1, 32
  %v243 = vld [vmem:[%s242] sm:$0xff]
  %v244 = vld [vmem:[%s242 + $0x8] sm:$0xff]
  %v245 = vld [vmem:[%s242 + $0x10] sm:$0xff]
  %v246 = vld [vmem:[%s242 + $0x18] sm:$0xff]
  %v251 = vunpack.c.l.b16 %v243
  %v252 = vunpack.c.h.b16 %v243
  %v253 = vunpack.c.l.b16 %v244
  %v254 = vunpack.c.h.b16 %v244
  %v255 = vunpack.c.l.b16 %v245
  %v256 = vunpack.c.h.b16 %v245
  %v257 = vunpack.c.l.b16 %v246
  %v258 = vunpack.c.h.b16 %v246
  %v259 = vpack.c.b16 %v253, %v251
  %v260 = vpack.c.b16 %v254, %v252
  %v261 = vpack.c.b16 %v257, %v255
  %v262 = vpack.c.b16 %v258, %v256
  %vm267 = vcmask 261120
  %v269 = vsel %vm267, %v226, 0
  %v272 = vsel %vm267, %v227, 0
  %v275 = vsel %vm267, %v228, 0
  %v278 = vsel %vm267, %v229, 0
  %v281 = vsel %vm267, %v230, 0
  %v284 = vsel %vm267, %v231, 0
  %v287 = vsel %vm267, %v232, 0
  %v290 = vsel %vm267, %v233, 0
  %v293 = vsel %vm267, %v234, 0
  %v296 = vsel %vm267, %v235, 0
  %v299 = vsel %vm267, %v236, 0
  %v302 = vsel %vm267, %v237, 0
  %v305 = vsel %vm267, %v238, 0
  %v308 = vsel %vm267, %v239, 0
  %v311 = vsel %vm267, %v240, 0
  %v314 = vsel %vm267, %v241, 0
  %316 = vmatpush.bf16.msra.mxu0 0
  %317 = vmatpush.bf16.msra.mxu0 0
  %318 = vmatpush.bf16.msra.mxu0 0
  %319 = vmatpush.bf16.msra.mxu0 0
  %320 = vmatpush.bf16.msra.mxu0 0
  %321 = vmatpush.bf16.msra.mxu0 0
  %322 = vmatpush.bf16.msra.mxu0 %v261
  %323 = vmatpush.bf16.msra.mxu0 %v259
  %324 = vmatmul.bf16.gmra.mxu0 %v269
  %v325 = vpop.f32.mrf.mxu0
  %v326 = vadd.f32 0.0, %v325
  %v327 = vpop.f32.mrf.mxu0
  %v328 = vadd.f32 0.0, %v327
  %329 = vmatmul.bf16.gmra.mxu0 %v272
  %v330 = vpop.f32.mrf.mxu0
  %v331 = vadd.f32 0.0, %v330
  %v332 = vpop.f32.mrf.mxu0
  %v333 = vadd.f32 0.0, %v332
  %334 = vmatmul.bf16.gmra.mxu0 %v275
  %v335 = vpop.f32.mrf.mxu0
  %v336 = vadd.f32 0.0, %v335
  %v337 = vpop.f32.mrf.mxu0
  %v338 = vadd.f32 0.0, %v337
  %339 = vmatmul.bf16.gmra.mxu0 %v278
  %v340 = vpop.f32.mrf.mxu0
  %v341 = vadd.f32 0.0, %v340
  %v342 = vpop.f32.mrf.mxu0
  %v343 = vadd.f32 0.0, %v342
  %344 = vmatmul.bf16.gmra.mxu0 %v281
  %v345 = vpop.f32.mrf.mxu0
  %v346 = vadd.f32 0.0, %v345
  %v347 = vpop.f32.mrf.mxu0
  %v348 = vadd.f32 0.0, %v347
  %349 = vmatmul.bf16.gmra.mxu0 %v284
  %v350 = vpop.f32.mrf.mxu0
  %v351 = vadd.f32 0.0, %v350
  %v352 = vpop.f32.mrf.mxu0
  %v353 = vadd.f32 0.0, %v352
  %354 = vmatmul.bf16.gmra.mxu0 %v287
  %v355 = vpop.f32.mrf.mxu0
  %v356 = vadd.f32 0.0, %v355
  %v357 = vpop.f32.mrf.mxu0
  %v358 = vadd.f32 0.0, %v357
  %359 = vmatmul.bf16.gmra.mxu0 %v290
  %v360 = vpop.f32.mrf.mxu0
  %v361 = vadd.f32 0.0, %v360
  %v362 = vpop.f32.mrf.mxu0
  %v363 = vadd.f32 0.0, %v362
  %364 = vmatmul.bf16.gmra.mxu0 %v293
  %v365 = vpop.f32.mrf.mxu0
  %v366 = vadd.f32 0.0, %v365
  %v367 = vpop.f32.mrf.mxu0
  %v368 = vadd.f32 0.0, %v367
  %369 = vmatmul.bf16.gmra.mxu0 %v296
  %v370 = vpop.f32.mrf.mxu0
  %v371 = vadd.f32 0.0, %v370
  %v372 = vpop.f32.mrf.mxu0
  %v373 = vadd.f32 0.0, %v372
  %374 = vmatmul.bf16.gmra.mxu0 %v299
  %v375 = vpop.f32.mrf.mxu0
  %v376 = vadd.f32 0.0, %v375
  %v377 = vpop.f32.mrf.mxu0
  %v378 = vadd.f32 0.0, %v377
  %379 = vmatmul.bf16.gmra.mxu0 %v302
  %v380 = vpop.f32.mrf.mxu0
  %v381 = vadd.f32 0.0, %v380
  %v382 = vpop.f32.mrf.mxu0
  %v383 = vadd.f32 0.0, %v382
  %384 = vmatmul.bf16.gmra.mxu0 %v305
  %v385 = vpop.f32.mrf.mxu0
  %v386 = vadd.f32 0.0, %v385
  %v387 = vpop.f32.mrf.mxu0
  %v388 = vadd.f32 0.0, %v387
  %389 = vmatmul.bf16.gmra.mxu0 %v308
  %v390 = vpop.f32.mrf.mxu0
  %v391 = vadd.f32 0.0, %v390
  %v392 = vpop.f32.mrf.mxu0
  %v393 = vadd.f32 0.0, %v392
  %394 = vmatmul.bf16.gmra.mxu0 %v311
  %v395 = vpop.f32.mrf.mxu0
  %v396 = vadd.f32 0.0, %v395
  %v397 = vpop.f32.mrf.mxu0
  %v398 = vadd.f32 0.0, %v397
  %399 = vmatmul.bf16.gmra.mxu0 %v314
  %v400 = vpop.f32.mrf.mxu0
  %v401 = vadd.f32 0.0, %v400
  %v402 = vpop.f32.mrf.mxu0
  %v403 = vadd.f32 0.0, %v402
  %404 = vdwg.mxu0
  %405 = vmatpush.bf16.msra.mxu0 0
  %406 = vmatpush.bf16.msra.mxu0 0
  %407 = vmatpush.bf16.msra.mxu0 0
  %408 = vmatpush.bf16.msra.mxu0 0
  %409 = vmatpush.bf16.msra.mxu0 0
  %410 = vmatpush.bf16.msra.mxu0 0
  %411 = vmatpush.bf16.msra.mxu0 %v262
  %412 = vmatpush.bf16.msra.mxu0 %v260
  %413 = vmatmul.bf16.gmra.mxu0 %v269
  %v414 = vpop.f32.mrf.mxu0
  %v415 = vadd.f32 0.0, %v414
  %v416 = vpop.f32.mrf.mxu0
  %v417 = vadd.f32 0.0, %v416
  %418 = vmatmul.bf16.gmra.mxu0 %v272
  %v419 = vpop.f32.mrf.mxu0
  %v420 = vadd.f32 0.0, %v419
  %v421 = vpop.f32.mrf.mxu0
  %v422 = vadd.f32 0.0, %v421
  %423 = vmatmul.bf16.gmra.mxu0 %v275
  %v424 = vpop.f32.mrf.mxu0
  %v425 = vadd.f32 0.0, %v424
  %v426 = vpop.f32.mrf.mxu0
  %v427 = vadd.f32 0.0, %v426
  %428 = vmatmul.bf16.gmra.mxu0 %v278
  %v429 = vpop.f32.mrf.mxu0
  %v430 = vadd.f32 0.0, %v429
  %v431 = vpop.f32.mrf.mxu0
  %v432 = vadd.f32 0.0, %v431
  %433 = vmatmul.bf16.gmra.mxu0 %v281
  %v434 = vpop.f32.mrf.mxu0
  %v435 = vadd.f32 0.0, %v434
  %v436 = vpop.f32.mrf.mxu0
  %v437 = vadd.f32 0.0, %v436
  %438 = vmatmul.bf16.gmra.mxu0 %v284
  %v439 = vpop.f32.mrf.mxu0
  %v440 = vadd.f32 0.0, %v439
  %v441 = vpop.f32.mrf.mxu0
  %v442 = vadd.f32 0.0, %v441
  %443 = vmatmul.bf16.gmra.mxu0 %v287
  %v444 = vpop.f32.mrf.mxu0
  %v445 = vadd.f32 0.0, %v444
  %v446 = vpop.f32.mrf.mxu0
  %v447 = vadd.f32 0.0, %v446
  %448 = vmatmul.bf16.gmra.mxu0 %v290
  %v449 = vpop.f32.mrf.mxu0
  %v450 = vadd.f32 0.0, %v449
  %v451 = vpop.f32.mrf.mxu0
  %v452 = vadd.f32 0.0, %v451
  %453 = vmatmul.bf16.gmra.mxu0 %v293
  %v454 = vpop.f32.mrf.mxu0
  %v455 = vadd.f32 0.0, %v454
  %v456 = vpop.f32.mrf.mxu0
  %v457 = vadd.f32 0.0, %v456
  %458 = vmatmul.bf16.gmra.mxu0 %v296
  %v459 = vpop.f32.mrf.mxu0
  %v460 = vadd.f32 0.0, %v459
  %v461 = vpop.f32.mrf.mxu0
  %v462 = vadd.f32 0.0, %v461
  %463 = vmatmul.bf16.gmra.mxu0 %v299
  %v464 = vpop.f32.mrf.mxu0
  %v465 = vadd.f32 0.0, %v464
  %v466 = vpop.f32.mrf.mxu0
  %v467 = vadd.f32 0.0, %v466
  %468 = vmatmul.bf16.gmra.mxu0 %v302
  %v469 = vpop.f32.mrf.mxu0
  %v470 = vadd.f32 0.0, %v469
  %v471 = vpop.f32.mrf.mxu0
  %v472 = vadd.f32 0.0, %v471
  %473 = vmatmul.bf16.gmra.mxu0 %v305
  %v474 = vpop.f32.mrf.mxu0
  %v475 = vadd.f32 0.0, %v474
  %v476 = vpop.f32.mrf.mxu0
  %v477 = vadd.f32 0.0, %v476
  %478 = vmatmul.bf16.gmra.mxu0 %v308
  %v479 = vpop.f32.mrf.mxu0
  %v480 = vadd.f32 0.0, %v479
  %v481 = vpop.f32.mrf.mxu0
  %v482 = vadd.f32 0.0, %v481
  %483 = vmatmul.bf16.gmra.mxu0 %v311
  %v484 = vpop.f32.mrf.mxu0
  %v485 = vadd.f32 0.0, %v484
  %v486 = vpop.f32.mrf.mxu0
  %v487 = vadd.f32 0.0, %v486
  %488 = vmatmul.bf16.gmra.mxu0 %v314
  %v489 = vpop.f32.mrf.mxu0
  %v490 = vadd.f32 0.0, %v489
  %v491 = vpop.f32.mrf.mxu0
  %v492 = vadd.f32 0.0, %v491
  %493 = vdwg.mxu0
  %v498 = vunpack.c.l.b16 %v93
  %v499 = vunpack.c.h.b16 %v93
  %v500 = vunpack.c.l.b16 %v94
  %v501 = vunpack.c.h.b16 %v94
  %v502 = vunpack.c.l.b16 %v95
  %v503 = vunpack.c.h.b16 %v95
  %v504 = vunpack.c.l.b16 %v96
  %v505 = vunpack.c.h.b16 %v96
  %v506 = vpack.c.b16 %v500, %v498
  %v507 = vpack.c.b16 %v501, %v499
  %v508 = vpack.c.b16 %v504, %v502
  %v509 = vpack.c.b16 %v505, %v503
  %v515 = vsel %vm267, %v77, 0
  %v518 = vsel %vm267, %v78, 0
  %v521 = vsel %vm267, %v79, 0
  %v524 = vsel %vm267, %v80, 0
  %v527 = vsel %vm267, %v81, 0
  %v530 = vsel %vm267, %v82, 0
  %v533 = vsel %vm267, %v83, 0
  %v536 = vsel %vm267, %v84, 0
  %v539 = vsel %vm267, %v85, 0
  %v542 = vsel %vm267, %v86, 0
  %v545 = vsel %vm267, %v87, 0
  %v548 = vsel %vm267, %v88, 0
  %v551 = vsel %vm267, %v89, 0
  %v554 = vsel %vm267, %v90, 0
  %v557 = vsel %vm267, %v91, 0
  %v560 = vsel %vm267, %v92, 0
  %562 = vmatpush.bf16.msra.mxu0 0
  %563 = vmatpush.bf16.msra.mxu0 0
  %564 = vmatpush.bf16.msra.mxu0 0
  %565 = vmatpush.bf16.msra.mxu0 0
  %566 = vmatpush.bf16.msra.mxu0 0
  %567 = vmatpush.bf16.msra.mxu0 0
  %568 = vmatpush.bf16.msra.mxu0 %v508
  %569 = vmatpush.bf16.msra.mxu0 %v506
  %570 = vmatmul.bf16.gmra.mxu0 %v515
  %v571 = vpop.f32.mrf.mxu0
  %v572 = vadd.f32 %v326, %v571
  %v573 = vpop.f32.mrf.mxu0
  %v574 = vadd.f32 %v328, %v573
  %575 = vmatmul.bf16.gmra.mxu0 %v518
  %v576 = vpop.f32.mrf.mxu0
  %v577 = vadd.f32 %v331, %v576
  %v578 = vpop.f32.mrf.mxu0
  %v579 = vadd.f32 %v333, %v578
  %580 = vmatmul.bf16.gmra.mxu0 %v521
  %v581 = vpop.f32.mrf.mxu0
  %v582 = vadd.f32 %v336, %v581
  %v583 = vpop.f32.mrf.mxu0
  %v584 = vadd.f32 %v338, %v583
  %585 = vmatmul.bf16.gmra.mxu0 %v524
  %v586 = vpop.f32.mrf.mxu0
  %v587 = vadd.f32 %v341, %v586
  %v588 = vpop.f32.mrf.mxu0
  %v589 = vadd.f32 %v343, %v588
  %590 = vmatmul.bf16.gmra.mxu0 %v527
  %v591 = vpop.f32.mrf.mxu0
  %v592 = vadd.f32 %v346, %v591
  %v593 = vpop.f32.mrf.mxu0
  %v594 = vadd.f32 %v348, %v593
  %595 = vmatmul.bf16.gmra.mxu0 %v530
  %v596 = vpop.f32.mrf.mxu0
  %v597 = vadd.f32 %v351, %v596
  %v598 = vpop.f32.mrf.mxu0
  %v599 = vadd.f32 %v353, %v598
  %600 = vmatmul.bf16.gmra.mxu0 %v533
  %v601 = vpop.f32.mrf.mxu0
  %v602 = vadd.f32 %v356, %v601
  %v603 = vpop.f32.mrf.mxu0
  %v604 = vadd.f32 %v358, %v603
  %605 = vmatmul.bf16.gmra.mxu0 %v536
  %v606 = vpop.f32.mrf.mxu0
  %v607 = vadd.f32 %v361, %v606
  %v608 = vpop.f32.mrf.mxu0
  %v609 = vadd.f32 %v363, %v608
  %610 = vmatmul.bf16.gmra.mxu0 %v539
  %v611 = vpop.f32.mrf.mxu0
  %v612 = vadd.f32 %v366, %v611
  %v613 = vpop.f32.mrf.mxu0
  %v614 = vadd.f32 %v368, %v613
  %615 = vmatmul.bf16.gmra.mxu0 %v542
  %v616 = vpop.f32.mrf.mxu0
  %v617 = vadd.f32 %v371, %v616
  %v618 = vpop.f32.mrf.mxu0
  %v619 = vadd.f32 %v373, %v618
  %620 = vmatmul.bf16.gmra.mxu0 %v545
  %v621 = vpop.f32.mrf.mxu0
  %v622 = vadd.f32 %v376, %v621
  %v623 = vpop.f32.mrf.mxu0
  %v624 = vadd.f32 %v378, %v623
  %625 = vmatmul.bf16.gmra.mxu0 %v548
  %v626 = vpop.f32.mrf.mxu0
  %v627 = vadd.f32 %v381, %v626
  %v628 = vpop.f32.mrf.mxu0
  %v629 = vadd.f32 %v383, %v628
  %630 = vmatmul.bf16.gmra.mxu0 %v551
  %v631 = vpop.f32.mrf.mxu0
  %v632 = vadd.f32 %v386, %v631
  %v633 = vpop.f32.mrf.mxu0
  %v634 = vadd.f32 %v388, %v633
  %635 = vmatmul.bf16.gmra.mxu0 %v554
  %v636 = vpop.f32.mrf.mxu0
  %v637 = vadd.f32 %v391, %v636
  %v638 = vpop.f32.mrf.mxu0
  %v639 = vadd.f32 %v393, %v638
  %640 = vmatmul.bf16.gmra.mxu0 %v557
  %v641 = vpop.f32.mrf.mxu0
  %v642 = vadd.f32 %v396, %v641
  %v643 = vpop.f32.mrf.mxu0
  %v644 = vadd.f32 %v398, %v643
  %645 = vmatmul.bf16.gmra.mxu0 %v560
  %v646 = vpop.f32.mrf.mxu0
  %v647 = vadd.f32 %v401, %v646
  %v648 = vpop.f32.mrf.mxu0
  %v649 = vadd.f32 %v403, %v648
  %650 = vdwg.mxu0
  %651 = vmatpush.bf16.msra.mxu0 0
  %652 = vmatpush.bf16.msra.mxu0 0
  %653 = vmatpush.bf16.msra.mxu0 0
  %654 = vmatpush.bf16.msra.mxu0 0
  %655 = vmatpush.bf16.msra.mxu0 0
  %656 = vmatpush.bf16.msra.mxu0 0
  %657 = vmatpush.bf16.msra.mxu0 %v509
  %658 = vmatpush.bf16.msra.mxu0 %v507
  %659 = vmatmul.bf16.gmra.mxu0 %v515
  %v660 = vpop.f32.mrf.mxu0
  %v661 = vadd.f32 %v415, %v660
  %v662 = vpop.f32.mrf.mxu0
  %v663 = vadd.f32 %v417, %v662
  %664 = vmatmul.bf16.gmra.mxu0 %v518
  %v665 = vpop.f32.mrf.mxu0
  %v666 = vadd.f32 %v420, %v665
  %v667 = vpop.f32.mrf.mxu0
  %v668 = vadd.f32 %v422, %v667
  %669 = vmatmul.bf16.gmra.mxu0 %v521
  %v670 = vpop.f32.mrf.mxu0
  %v671 = vadd.f32 %v425, %v670
  %v672 = vpop.f32.mrf.mxu0
  %v673 = vadd.f32 %v427, %v672
  %674 = vmatmul.bf16.gmra.mxu0 %v524
  %v675 = vpop.f32.mrf.mxu0
  %v676 = vadd.f32 %v430, %v675
  %v677 = vpop.f32.mrf.mxu0
  %v678 = vadd.f32 %v432, %v677
  %679 = vmatmul.bf16.gmra.mxu0 %v527
  %v680 = vpop.f32.mrf.mxu0
  %v681 = vadd.f32 %v435, %v680
  %v682 = vpop.f32.mrf.mxu0
  %v683 = vadd.f32 %v437, %v682
  %684 = vmatmul.bf16.gmra.mxu0 %v530
  %v685 = vpop.f32.mrf.mxu0
  %v686 = vadd.f32 %v440, %v685
  %v687 = vpop.f32.mrf.mxu0
  %v688 = vadd.f32 %v442, %v687
  %689 = vmatmul.bf16.gmra.mxu0 %v533
  %v690 = vpop.f32.mrf.mxu0
  %v691 = vadd.f32 %v445, %v690
  %v692 = vpop.f32.mrf.mxu0
  %v693 = vadd.f32 %v447, %v692
  %694 = vmatmul.bf16.gmra.mxu0 %v536
  %v695 = vpop.f32.mrf.mxu0
  %v696 = vadd.f32 %v450, %v695
  %v697 = vpop.f32.mrf.mxu0
  %v698 = vadd.f32 %v452, %v697
  %699 = vmatmul.bf16.gmra.mxu0 %v539
  %v700 = vpop.f32.mrf.mxu0
  %v701 = vadd.f32 %v455, %v700
  %v702 = vpop.f32.mrf.mxu0
  %v703 = vadd.f32 %v457, %v702
  %704 = vmatmul.bf16.gmra.mxu0 %v542
  %v705 = vpop.f32.mrf.mxu0
  %v706 = vadd.f32 %v460, %v705
  %v707 = vpop.f32.mrf.mxu0
  %v708 = vadd.f32 %v462, %v707
  %709 = vmatmul.bf16.gmra.mxu0 %v545
  %v710 = vpop.f32.mrf.mxu0
  %v711 = vadd.f32 %v465, %v710
  %v712 = vpop.f32.mrf.mxu0
  %v713 = vadd.f32 %v467, %v712
  %714 = vmatmul.bf16.gmra.mxu0 %v548
  %v715 = vpop.f32.mrf.mxu0
  %v716 = vadd.f32 %v470, %v715
  %v717 = vpop.f32.mrf.mxu0
  %v718 = vadd.f32 %v472, %v717
  %719 = vmatmul.bf16.gmra.mxu0 %v551
  %v720 = vpop.f32.mrf.mxu0
  %v721 = vadd.f32 %v475, %v720
  %v722 = vpop.f32.mrf.mxu0
  %v723 = vadd.f32 %v477, %v722
  %724 = vmatmul.bf16.gmra.mxu0 %v554
  %v725 = vpop.f32.mrf.mxu0
  %v726 = vadd.f32 %v480, %v725
  %v727 = vpop.f32.mrf.mxu0
  %v728 = vadd.f32 %v482, %v727
  %729 = vmatmul.bf16.gmra.mxu0 %v557
  %v730 = vpop.f32.mrf.mxu0
  %v731 = vadd.f32 %v485, %v730
  %v732 = vpop.f32.mrf.mxu0
  %v733 = vadd.f32 %v487, %v732
  %734 = vmatmul.bf16.gmra.mxu0 %v560
  %v735 = vpop.f32.mrf.mxu0
  %v736 = vadd.f32 %v490, %v735
  %v737 = vpop.f32.mrf.mxu0
  %v738 = vadd.f32 %v492, %v737
  %739 = vdwg.mxu0
  %vm740 = vcmask 1045504
  %v741 = vrot.slane %v45, 2
  %v742 = vrot.slane %v46, 2
  %v743 = vsel %vm740, %v741, %v742
  %v744 = vrot.slane %v47, 2
  %v745 = vsel %vm740, %v742, %v744
  %v746 = vrot.slane %v48, 2
  %v747 = vsel %vm740, %v744, %v746
  %v748 = vrot.slane %v49, 2
  %v749 = vsel %vm740, %v746, %v748
  %v750 = vrot.slane %v50, 2
  %v751 = vsel %vm740, %v748, %v750
  %v752 = vrot.slane %v51, 2
  %v753 = vsel %vm740, %v750, %v752
  %v754 = vrot.slane %v52, 2
  %v755 = vsel %vm740, %v752, %v754
  %v756 = vrot.slane %v53, 2
  %v757 = vsel %vm740, %v754, %v756
  %v758 = vrot.slane %v54, 2
  %v759 = vsel %vm740, %v756, %v758
  %v760 = vrot.slane %v55, 2
  %v761 = vsel %vm740, %v758, %v760
  %v762 = vrot.slane %v56, 2
  %v763 = vsel %vm740, %v760, %v762
  %v764 = vrot.slane %v57, 2
  %v765 = vsel %vm740, %v762, %v764
  %v766 = vrot.slane %v58, 2
  %v767 = vsel %vm740, %v764, %v766
  %v768 = vrot.slane %v59, 2
  %v769 = vsel %vm740, %v766, %v768
  %v770 = vrot.slane %v60, 2
  %v771 = vsel %vm740, %v768, %v770
  %v772 = vrot.slane %v61, 2
  %v773 = vsel %vm740, %v770, %v772
  %v774 = vrot.slane %v62, 2
  %v775 = vsel %vm740, %v772, %v774
  %v776 = vrot.slane %v63, 2
  %v777 = vsel %vm740, %v774, %v776
  %v778 = vrot.slane %v64, 2
  %v779 = vsel %vm740, %v776, %v778
  %v780 = vrot.slane %v65, 2
  %v781 = vsel %vm740, %v778, %v780
  %v782 = vrot.slane %v66, 2
  %v783 = vsel %vm740, %v780, %v782
  %v784 = vrot.slane %v67, 2
  %v785 = vsel %vm740, %v782, %v784
  %v786 = vrot.slane %v68, 2
  %v787 = vsel %vm740, %v784, %v786
  %v788 = vrot.slane %v69, 2
  %v789 = vsel %vm740, %v786, %v788
  %v790 = vrot.slane %v70, 2
  %v791 = vsel %vm740, %v788, %v790
  %v792 = vrot.slane %v71, 2
  %v793 = vsel %vm740, %v790, %v792
  %v794 = vrot.slane %v72, 2
  %v795 = vsel %vm740, %v792, %v794
  %v796 = vrot.slane %v73, 2
  %v797 = vsel %vm740, %v794, %v796
  %v798 = vrot.slane %v74, 2
  %v799 = vsel %vm740, %v796, %v798
  %v800 = vrot.slane %v75, 2
  %v801 = vsel %vm740, %v798, %v800
  %v802 = vrot.slane %v76, 2
  %v803 = vsel %vm740, %v800, %v802
  %v836 = vsel %vm740, %v802, 0.0
  %v837 = vpack.c.bf16 %v745, %v743
  %v838 = vpack.c.bf16 %v749, %v747
  %v839 = vpack.c.bf16 %v753, %v751
  %v840 = vpack.c.bf16 %v757, %v755
  %v841 = vpack.c.bf16 %v761, %v759
  %v842 = vpack.c.bf16 %v765, %v763
  %v843 = vpack.c.bf16 %v769, %v767
  %v844 = vpack.c.bf16 %v773, %v771
  %v845 = vpack.c.bf16 %v777, %v775
  %v846 = vpack.c.bf16 %v781, %v779
  %v847 = vpack.c.bf16 %v785, %v783
  %v848 = vpack.c.bf16 %v789, %v787
  %v849 = vpack.c.bf16 %v793, %v791
  %v850 = vpack.c.bf16 %v797, %v795
  %v851 = vpack.c.bf16 %v801, %v799
  %v852 = vpack.c.bf16 %v836, %v803
  %s853 = scalar_lea.vmem %s1, 64
  %v854 = vld [vmem:[%s853] sm:$0xff]
  %v855 = vld [vmem:[%s853 + $0x8] sm:$0xff]
  %v856 = vld [vmem:[%s853 + $0x10] sm:$0xff]
  %v857 = vld [vmem:[%s853 + $0x18] sm:$0xff]
  %v862 = vunpack.c.l.b16 %v854
  %v863 = vunpack.c.h.b16 %v854
  %v864 = vunpack.c.l.b16 %v855
  %v865 = vunpack.c.h.b16 %v855
  %v866 = vunpack.c.l.b16 %v856
  %v867 = vunpack.c.h.b16 %v856
  %v868 = vunpack.c.l.b16 %v857
  %v869 = vunpack.c.h.b16 %v857
  %v870 = vpack.c.b16 %v864, %v862
  %v871 = vpack.c.b16 %v865, %v863
  %v872 = vpack.c.b16 %v868, %v866
  %v873 = vpack.c.b16 %v869, %v867
  %v879 = vsel %vm267, %v837, 0
  %v882 = vsel %vm267, %v838, 0
  %v885 = vsel %vm267, %v839, 0
  %v888 = vsel %vm267, %v840, 0
  %v891 = vsel %vm267, %v841, 0
  %v894 = vsel %vm267, %v842, 0
  %v897 = vsel %vm267, %v843, 0
  %v900 = vsel %vm267, %v844, 0
  %v903 = vsel %vm267, %v845, 0
  %v906 = vsel %vm267, %v846, 0
  %v909 = vsel %vm267, %v847, 0
  %v912 = vsel %vm267, %v848, 0
  %v915 = vsel %vm267, %v849, 0
  %v918 = vsel %vm267, %v850, 0
  %v921 = vsel %vm267, %v851, 0
  %v924 = vsel %vm267, %v852, 0
  %926 = vmatpush.bf16.msra.mxu0 0
  %927 = vmatpush.bf16.msra.mxu0 0
  %928 = vmatpush.bf16.msra.mxu0 0
  %929 = vmatpush.bf16.msra.mxu0 0
  %930 = vmatpush.bf16.msra.mxu0 0
  %931 = vmatpush.bf16.msra.mxu0 0
  %932 = vmatpush.bf16.msra.mxu0 %v872
  %933 = vmatpush.bf16.msra.mxu0 %v870
  %934 = vmatmul.bf16.gmra.mxu0 %v879
  %v935 = vpop.f32.mrf.mxu0
  %v936 = vadd.f32 0.0, %v935
  %v937 = vpop.f32.mrf.mxu0
  %v938 = vadd.f32 0.0, %v937
  %939 = vmatmul.bf16.gmra.mxu0 %v882
  %v940 = vpop.f32.mrf.mxu0
  %v941 = vadd.f32 0.0, %v940
  %v942 = vpop.f32.mrf.mxu0
  %v943 = vadd.f32 0.0, %v942
  %944 = vmatmul.bf16.gmra.mxu0 %v885
  %v945 = vpop.f32.mrf.mxu0
  %v946 = vadd.f32 0.0, %v945
  %v947 = vpop.f32.mrf.mxu0
  %v948 = vadd.f32 0.0, %v947
  %949 = vmatmul.bf16.gmra.mxu0 %v888
  %v950 = vpop.f32.mrf.mxu0
  %v951 = vadd.f32 0.0, %v950
  %v952 = vpop.f32.mrf.mxu0
  %v953 = vadd.f32 0.0, %v952
  %954 = vmatmul.bf16.gmra.mxu0 %v891
  %v955 = vpop.f32.mrf.mxu0
  %v956 = vadd.f32 0.0, %v955
  %v957 = vpop.f32.mrf.mxu0
  %v958 = vadd.f32 0.0, %v957
  %959 = vmatmul.bf16.gmra.mxu0 %v894
  %v960 = vpop.f32.mrf.mxu0
  %v961 = vadd.f32 0.0, %v960
  %v962 = vpop.f32.mrf.mxu0
  %v963 = vadd.f32 0.0, %v962
  %964 = vmatmul.bf16.gmra.mxu0 %v897
  %v965 = vpop.f32.mrf.mxu0
  %v966 = vadd.f32 0.0, %v965
  %v967 = vpop.f32.mrf.mxu0
  %v968 = vadd.f32 0.0, %v967
  %969 = vmatmul.bf16.gmra.mxu0 %v900
  %v970 = vpop.f32.mrf.mxu0
  %v971 = vadd.f32 0.0, %v970
  %v972 = vpop.f32.mrf.mxu0
  %v973 = vadd.f32 0.0, %v972
  %974 = vmatmul.bf16.gmra.mxu0 %v903
  %v975 = vpop.f32.mrf.mxu0
  %v976 = vadd.f32 0.0, %v975
  %v977 = vpop.f32.mrf.mxu0
  %v978 = vadd.f32 0.0, %v977
  %979 = vmatmul.bf16.gmra.mxu0 %v906
  %v980 = vpop.f32.mrf.mxu0
  %v981 = vadd.f32 0.0, %v980
  %v982 = vpop.f32.mrf.mxu0
  %v983 = vadd.f32 0.0, %v982
  %984 = vmatmul.bf16.gmra.mxu0 %v909
  %v985 = vpop.f32.mrf.mxu0
  %v986 = vadd.f32 0.0, %v985
  %v987 = vpop.f32.mrf.mxu0
  %v988 = vadd.f32 0.0, %v987
  %989 = vmatmul.bf16.gmra.mxu0 %v912
  %v990 = vpop.f32.mrf.mxu0
  %v991 = vadd.f32 0.0, %v990
  %v992 = vpop.f32.mrf.mxu0
  %v993 = vadd.f32 0.0, %v992
  %994 = vmatmul.bf16.gmra.mxu0 %v915
  %v995 = vpop.f32.mrf.mxu0
  %v996 = vadd.f32 0.0, %v995
  %v997 = vpop.f32.mrf.mxu0
  %v998 = vadd.f32 0.0, %v997
  %999 = vmatmul.bf16.gmra.mxu0 %v918
  %v1000 = vpop.f32.mrf.mxu0
  %v1001 = vadd.f32 0.0, %v1000
  %v1002 = vpop.f32.mrf.mxu0
  %v1003 = vadd.f32 0.0, %v1002
  %1004 = vmatmul.bf16.gmra.mxu0 %v921
  %v1005 = vpop.f32.mrf.mxu0
  %v1006 = vadd.f32 0.0, %v1005
  %v1007 = vpop.f32.mrf.mxu0
  %v1008 = vadd.f32 0.0, %v1007
  %1009 = vmatmul.bf16.gmra.mxu0 %v924
  %v1010 = vpop.f32.mrf.mxu0
  %v1011 = vadd.f32 0.0, %v1010
  %v1012 = vpop.f32.mrf.mxu0
  %v1013 = vadd.f32 0.0, %v1012
  %1014 = vdwg.mxu0
  %1015 = vmatpush.bf16.msra.mxu0 0
  %1016 = vmatpush.bf16.msra.mxu0 0
  %1017 = vmatpush.bf16.msra.mxu0 0
  %1018 = vmatpush.bf16.msra.mxu0 0
  %1019 = vmatpush.bf16.msra.mxu0 0
  %1020 = vmatpush.bf16.msra.mxu0 0
  %1021 = vmatpush.bf16.msra.mxu0 %v873
  %1022 = vmatpush.bf16.msra.mxu0 %v871
  %1023 = vmatmul.bf16.gmra.mxu0 %v879
  %v1024 = vpop.f32.mrf.mxu0
  %v1025 = vadd.f32 0.0, %v1024
  %v1026 = vpop.f32.mrf.mxu0
  %v1027 = vadd.f32 0.0, %v1026
  %1028 = vmatmul.bf16.gmra.mxu0 %v882
  %v1029 = vpop.f32.mrf.mxu0
  %v1030 = vadd.f32 0.0, %v1029
  %v1031 = vpop.f32.mrf.mxu0
  %v1032 = vadd.f32 0.0, %v1031
  %1033 = vmatmul.bf16.gmra.mxu0 %v885
  %v1034 = vpop.f32.mrf.mxu0
  %v1035 = vadd.f32 0.0, %v1034
  %v1036 = vpop.f32.mrf.mxu0
  %v1037 = vadd.f32 0.0, %v1036
  %1038 = vmatmul.bf16.gmra.mxu0 %v888
  %v1039 = vpop.f32.mrf.mxu0
  %v1040 = vadd.f32 0.0, %v1039
  %v1041 = vpop.f32.mrf.mxu0
  %v1042 = vadd.f32 0.0, %v1041
  %1043 = vmatmul.bf16.gmra.mxu0 %v891
  %v1044 = vpop.f32.mrf.mxu0
  %v1045 = vadd.f32 0.0, %v1044
  %v1046 = vpop.f32.mrf.mxu0
  %v1047 = vadd.f32 0.0, %v1046
  %1048 = vmatmul.bf16.gmra.mxu0 %v894
  %v1049 = vpop.f32.mrf.mxu0
  %v1050 = vadd.f32 0.0, %v1049
  %v1051 = vpop.f32.mrf.mxu0
  %v1052 = vadd.f32 0.0, %v1051
  %1053 = vmatmul.bf16.gmra.mxu0 %v897
  %v1054 = vpop.f32.mrf.mxu0
  %v1055 = vadd.f32 0.0, %v1054
  %v1056 = vpop.f32.mrf.mxu0
  %v1057 = vadd.f32 0.0, %v1056
  %1058 = vmatmul.bf16.gmra.mxu0 %v900
  %v1059 = vpop.f32.mrf.mxu0
  %v1060 = vadd.f32 0.0, %v1059
  %v1061 = vpop.f32.mrf.mxu0
  %v1062 = vadd.f32 0.0, %v1061
  %1063 = vmatmul.bf16.gmra.mxu0 %v903
  %v1064 = vpop.f32.mrf.mxu0
  %v1065 = vadd.f32 0.0, %v1064
  %v1066 = vpop.f32.mrf.mxu0
  %v1067 = vadd.f32 0.0, %v1066
  %1068 = vmatmul.bf16.gmra.mxu0 %v906
  %v1069 = vpop.f32.mrf.mxu0
  %v1070 = vadd.f32 0.0, %v1069
  %v1071 = vpop.f32.mrf.mxu0
  %v1072 = vadd.f32 0.0, %v1071
  %1073 = vmatmul.bf16.gmra.mxu0 %v909
  %v1074 = vpop.f32.mrf.mxu0
  %v1075 = vadd.f32 0.0, %v1074
  %v1076 = vpop.f32.mrf.mxu0
  %v1077 = vadd.f32 0.0, %v1076
  %1078 = vmatmul.bf16.gmra.mxu0 %v912
  %v1079 = vpop.f32.mrf.mxu0
  %v1080 = vadd.f32 0.0, %v1079
  %v1081 = vpop.f32.mrf.mxu0
  %v1082 = vadd.f32 0.0, %v1081
  %1083 = vmatmul.bf16.gmra.mxu0 %v915
  %v1084 = vpop.f32.mrf.mxu0
  %v1085 = vadd.f32 0.0, %v1084
  %v1086 = vpop.f32.mrf.mxu0
  %v1087 = vadd.f32 0.0, %v1086
  %1088 = vmatmul.bf16.gmra.mxu0 %v918
  %v1089 = vpop.f32.mrf.mxu0
  %v1090 = vadd.f32 0.0, %v1089
  %v1091 = vpop.f32.mrf.mxu0
  %v1092 = vadd.f32 0.0, %v1091
  %1093 = vmatmul.bf16.gmra.mxu0 %v921
  %v1094 = vpop.f32.mrf.mxu0
  %v1095 = vadd.f32 0.0, %v1094
  %v1096 = vpop.f32.mrf.mxu0
  %v1097 = vadd.f32 0.0, %v1096
  %1098 = vmatmul.bf16.gmra.mxu0 %v924
  %v1099 = vpop.f32.mrf.mxu0
  %v1100 = vadd.f32 0.0, %v1099
  %v1101 = vpop.f32.mrf.mxu0
  %v1102 = vadd.f32 0.0, %v1101
  %1103 = vdwg.mxu0
  %v1104 = vadd.f32 %v572, %v936
  %v1105 = vadd.f32 %v661, %v1025
  %v1106 = vadd.f32 %v574, %v938
  %v1107 = vadd.f32 %v663, %v1027
  %v1108 = vadd.f32 %v577, %v941
  %v1109 = vadd.f32 %v666, %v1030
  %v1110 = vadd.f32 %v579, %v943
  %v1111 = vadd.f32 %v668, %v1032
  %v1112 = vadd.f32 %v582, %v946
  %v1113 = vadd.f32 %v671, %v1035
  %v1114 = vadd.f32 %v584, %v948
  %v1115 = vadd.f32 %v673, %v1037
  %v1116 = vadd.f32 %v587, %v951
  %v1117 = vadd.f32 %v676, %v1040
  %v1118 = vadd.f32 %v589, %v953
  %v1119 = vadd.f32 %v678, %v1042
  %v1120 = vadd.f32 %v592, %v956
  %v1121 = vadd.f32 %v681, %v1045
  %v1122 = vadd.f32 %v594, %v958
  %v1123 = vadd.f32 %v683, %v1047
  %v1124 = vadd.f32 %v597, %v961
  %v1125 = vadd.f32 %v686, %v1050
  %v1126 = vadd.f32 %v599, %v963
  %v1127 = vadd.f32 %v688, %v1052
  %v1128 = vadd.f32 %v602, %v966
  %v1129 = vadd.f32 %v691, %v1055
  %v1130 = vadd.f32 %v604, %v968
  %v1131 = vadd.f32 %v693, %v1057
  %v1132 = vadd.f32 %v607, %v971
  %v1133 = vadd.f32 %v696, %v1060
  %v1134 = vadd.f32 %v609, %v973
  %v1135 = vadd.f32 %v698, %v1062
  %v1136 = vadd.f32 %v612, %v976
  %v1137 = vadd.f32 %v701, %v1065
  %v1138 = vadd.f32 %v614, %v978
  %v1139 = vadd.f32 %v703, %v1067
  %v1140 = vadd.f32 %v617, %v981
  %v1141 = vadd.f32 %v706, %v1070
  %v1142 = vadd.f32 %v619, %v983
  %v1143 = vadd.f32 %v708, %v1072
  %v1144 = vadd.f32 %v622, %v986
  %v1145 = vadd.f32 %v711, %v1075
  %v1146 = vadd.f32 %v624, %v988
  %v1147 = vadd.f32 %v713, %v1077
  %v1148 = vadd.f32 %v627, %v991
  %v1149 = vadd.f32 %v716, %v1080
  %v1150 = vadd.f32 %v629, %v993
  %v1151 = vadd.f32 %v718, %v1082
  %v1152 = vadd.f32 %v632, %v996
  %v1153 = vadd.f32 %v721, %v1085
  %v1154 = vadd.f32 %v634, %v998
  %v1155 = vadd.f32 %v723, %v1087
  %v1156 = vadd.f32 %v637, %v1001
  %v1157 = vadd.f32 %v726, %v1090
  %v1158 = vadd.f32 %v639, %v1003
  %v1159 = vadd.f32 %v728, %v1092
  %v1160 = vadd.f32 %v642, %v1006
  %v1161 = vadd.f32 %v731, %v1095
  %v1162 = vadd.f32 %v644, %v1008
  %v1163 = vadd.f32 %v733, %v1097
  %v1164 = vadd.f32 %v647, %v1011
  %v1165 = vadd.f32 %v736, %v1100
  %v1166 = vadd.f32 %v649, %v1013
  %v1167 = vadd.f32 %v738, %v1102
  %vm1168 = vcmask 1044480
  %v1169 = vrot.slane %v45, 3
  %v1170 = vrot.slane %v46, 3
  %v1171 = vsel %vm1168, %v1169, %v1170
  %v1172 = vrot.slane %v47, 3
  %v1173 = vsel %vm1168, %v1170, %v1172
  %v1174 = vrot.slane %v48, 3
  %v1175 = vsel %vm1168, %v1172, %v1174
  %v1176 = vrot.slane %v49, 3
  %v1177 = vsel %vm1168, %v1174, %v1176
  %v1178 = vrot.slane %v50, 3
  %v1179 = vsel %vm1168, %v1176, %v1178
  %v1180 = vrot.slane %v51, 3
  %v1181 = vsel %vm1168, %v1178, %v1180
  %v1182 = vrot.slane %v52, 3
  %v1183 = vsel %vm1168, %v1180, %v1182
  %v1184 = vrot.slane %v53, 3
  %v1185 = vsel %vm1168, %v1182, %v1184
  %v1186 = vrot.slane %v54, 3
  %v1187 = vsel %vm1168, %v1184, %v1186
  %v1188 = vrot.slane %v55, 3
  %v1189 = vsel %vm1168, %v1186, %v1188
  %v1190 = vrot.slane %v56, 3
  %v1191 = vsel %vm1168, %v1188, %v1190
  %v1192 = vrot.slane %v57, 3
  %v1193 = vsel %vm1168, %v1190, %v1192
  %v1194 = vrot.slane %v58, 3
  %v1195 = vsel %vm1168, %v1192, %v1194
  %v1196 = vrot.slane %v59, 3
  %v1197 = vsel %vm1168, %v1194, %v1196
  %v1198 = vrot.slane %v60, 3
  %v1199 = vsel %vm1168, %v1196, %v1198
  %v1200 = vrot.slane %v61, 3
  %v1201 = vsel %vm1168, %v1198, %v1200
  %v1202 = vrot.slane %v62, 3
  %v1203 = vsel %vm1168, %v1200, %v1202
  %v1204 = vrot.slane %v63, 3
  %v1205 = vsel %vm1168, %v1202, %v1204
  %v1206 = vrot.slane %v64, 3
  %v1207 = vsel %vm1168, %v1204, %v1206
  %v1208 = vrot.slane %v65, 3
  %v1209 = vsel %vm1168, %v1206, %v1208
  %v1210 = vrot.slane %v66, 3
  %v1211 = vsel %vm1168, %v1208, %v1210
  %v1212 = vrot.slane %v67, 3
  %v1213 = vsel %vm1168, %v1210, %v1212
  %v1214 = vrot.slane %v68, 3
  %v1215 = vsel %vm1168, %v1212, %v1214
  %v1216 = vrot.slane %v69, 3
  %v1217 = vsel %vm1168, %v1214, %v1216
  %v1218 = vrot.slane %v70, 3
  %v1219 = vsel %vm1168, %v1216, %v1218
  %v1220 = vrot.slane %v71, 3
  %v1221 = vsel %vm1168, %v1218, %v1220
  %v1222 = vrot.slane %v72, 3
  %v1223 = vsel %vm1168, %v1220, %v1222
  %v1224 = vrot.slane %v73, 3
  %v1225 = vsel %vm1168, %v1222, %v1224
  %v1226 = vrot.slane %v74, 3
  %v1227 = vsel %vm1168, %v1224, %v1226
  %v1228 = vrot.slane %v75, 3
  %v1229 = vsel %vm1168, %v1226, %v1228
  %v1230 = vrot.slane %v76, 3
  %v1231 = vsel %vm1168, %v1228, %v1230
  %v1264 = vsel %vm1168, %v1230, 0.0
  %v1265 = vpack.c.bf16 %v1173, %v1171
  %v1266 = vpack.c.bf16 %v1177, %v1175
  %v1267 = vpack.c.bf16 %v1181, %v1179
  %v1268 = vpack.c.bf16 %v1185, %v1183
  %v1269 = vpack.c.bf16 %v1189, %v1187
  %v1270 = vpack.c.bf16 %v1193, %v1191
  %v1271 = vpack.c.bf16 %v1197, %v1195
  %v1272 = vpack.c.bf16 %v1201, %v1199
  %v1273 = vpack.c.bf16 %v1205, %v1203
  %v1274 = vpack.c.bf16 %v1209, %v1207
  %v1275 = vpack.c.bf16 %v1213, %v1211
  %v1276 = vpack.c.bf16 %v1217, %v1215
  %v1277 = vpack.c.bf16 %v1221, %v1219
  %v1278 = vpack.c.bf16 %v1225, %v1223
  %v1279 = vpack.c.bf16 %v1229, %v1227
  %v1280 = vpack.c.bf16 %v1264, %v1231
  %s1281 = scalar_lea.vmem %s1, 96
  %v1282 = vld [vmem:[%s1281] sm:$0xff]
  %v1283 = vld [vmem:[%s1281 + $0x8] sm:$0xff]
  %v1284 = vld [vmem:[%s1281 + $0x10] sm:$0xff]
  %v1285 = vld [vmem:[%s1281 + $0x18] sm:$0xff]
  %v1290 = vunpack.c.l.b16 %v1282
  %v1291 = vunpack.c.h.b16 %v1282
  %v1292 = vunpack.c.l.b16 %v1283
  %v1293 = vunpack.c.h.b16 %v1283
  %v1294 = vunpack.c.l.b16 %v1284
  %v1295 = vunpack.c.h.b16 %v1284
  %v1296 = vunpack.c.l.b16 %v1285
  %v1297 = vunpack.c.h.b16 %v1285
  %v1298 = vpack.c.b16 %v1292, %v1290
  %v1299 = vpack.c.b16 %v1293, %v1291
  %v1300 = vpack.c.b16 %v1296, %v1294
  %v1301 = vpack.c.b16 %v1297, %v1295
  %v1307 = vsel %vm267, %v1265, 0
  %v1310 = vsel %vm267, %v1266, 0
  %v1313 = vsel %vm267, %v1267, 0
  %v1316 = vsel %vm267, %v1268, 0
  %v1319 = vsel %vm267, %v1269, 0
  %v1322 = vsel %vm267, %v1270, 0
  %v1325 = vsel %vm267, %v1271, 0
  %v1328 = vsel %vm267, %v1272, 0
  %v1331 = vsel %vm267, %v1273, 0
  %v1334 = vsel %vm267, %v1274, 0
  %v1337 = vsel %vm267, %v1275, 0
  %v1340 = vsel %vm267, %v1276, 0
  %v1343 = vsel %vm267, %v1277, 0
  %v1346 = vsel %vm267, %v1278, 0
  %v1349 = vsel %vm267, %v1279, 0
  %v1352 = vsel %vm267, %v1280, 0
  %1354 = vmatpush.bf16.msra.mxu0 0
  %1355 = vmatpush.bf16.msra.mxu0 0
  %1356 = vmatpush.bf16.msra.mxu0 0
  %1357 = vmatpush.bf16.msra.mxu0 0
  %1358 = vmatpush.bf16.msra.mxu0 0
  %1359 = vmatpush.bf16.msra.mxu0 0
  %1360 = vmatpush.bf16.msra.mxu0 %v1300
  %1361 = vmatpush.bf16.msra.mxu0 %v1298
  %1362 = vmatmul.bf16.gmra.mxu0 %v1307
  %v1363 = vpop.f32.mrf.mxu0
  %v1364 = vadd.f32 0.0, %v1363
  %v1365 = vpop.f32.mrf.mxu0
  %v1366 = vadd.f32 0.0, %v1365
  %1367 = vmatmul.bf16.gmra.mxu0 %v1310
  %v1368 = vpop.f32.mrf.mxu0
  %v1369 = vadd.f32 0.0, %v1368
  %v1370 = vpop.f32.mrf.mxu0
  %v1371 = vadd.f32 0.0, %v1370
  %1372 = vmatmul.bf16.gmra.mxu0 %v1313
  %v1373 = vpop.f32.mrf.mxu0
  %v1374 = vadd.f32 0.0, %v1373
  %v1375 = vpop.f32.mrf.mxu0
  %v1376 = vadd.f32 0.0, %v1375
  %1377 = vmatmul.bf16.gmra.mxu0 %v1316
  %v1378 = vpop.f32.mrf.mxu0
  %v1379 = vadd.f32 0.0, %v1378
  %v1380 = vpop.f32.mrf.mxu0
  %v1381 = vadd.f32 0.0, %v1380
  %1382 = vmatmul.bf16.gmra.mxu0 %v1319
  %v1383 = vpop.f32.mrf.mxu0
  %v1384 = vadd.f32 0.0, %v1383
  %v1385 = vpop.f32.mrf.mxu0
  %v1386 = vadd.f32 0.0, %v1385
  %1387 = vmatmul.bf16.gmra.mxu0 %v1322
  %v1388 = vpop.f32.mrf.mxu0
  %v1389 = vadd.f32 0.0, %v1388
  %v1390 = vpop.f32.mrf.mxu0
  %v1391 = vadd.f32 0.0, %v1390
  %1392 = vmatmul.bf16.gmra.mxu0 %v1325
  %v1393 = vpop.f32.mrf.mxu0
  %v1394 = vadd.f32 0.0, %v1393
  %v1395 = vpop.f32.mrf.mxu0
  %v1396 = vadd.f32 0.0, %v1395
  %1397 = vmatmul.bf16.gmra.mxu0 %v1328
  %v1398 = vpop.f32.mrf.mxu0
  %v1399 = vadd.f32 0.0, %v1398
  %v1400 = vpop.f32.mrf.mxu0
  %v1401 = vadd.f32 0.0, %v1400
  %1402 = vmatmul.bf16.gmra.mxu0 %v1331
  %v1403 = vpop.f32.mrf.mxu0
  %v1404 = vadd.f32 0.0, %v1403
  %v1405 = vpop.f32.mrf.mxu0
  %v1406 = vadd.f32 0.0, %v1405
  %1407 = vmatmul.bf16.gmra.mxu0 %v1334
  %v1408 = vpop.f32.mrf.mxu0
  %v1409 = vadd.f32 0.0, %v1408
  %v1410 = vpop.f32.mrf.mxu0
  %v1411 = vadd.f32 0.0, %v1410
  %1412 = vmatmul.bf16.gmra.mxu0 %v1337
  %v1413 = vpop.f32.mrf.mxu0
  %v1414 = vadd.f32 0.0, %v1413
  %v1415 = vpop.f32.mrf.mxu0
  %v1416 = vadd.f32 0.0, %v1415
  %1417 = vmatmul.bf16.gmra.mxu0 %v1340
  %v1418 = vpop.f32.mrf.mxu0
  %v1419 = vadd.f32 0.0, %v1418
  %v1420 = vpop.f32.mrf.mxu0
  %v1421 = vadd.f32 0.0, %v1420
  %1422 = vmatmul.bf16.gmra.mxu0 %v1343
  %v1423 = vpop.f32.mrf.mxu0
  %v1424 = vadd.f32 0.0, %v1423
  %v1425 = vpop.f32.mrf.mxu0
  %v1426 = vadd.f32 0.0, %v1425
  %1427 = vmatmul.bf16.gmra.mxu0 %v1346
  %v1428 = vpop.f32.mrf.mxu0
  %v1429 = vadd.f32 0.0, %v1428
  %v1430 = vpop.f32.mrf.mxu0
  %v1431 = vadd.f32 0.0, %v1430
  %1432 = vmatmul.bf16.gmra.mxu0 %v1349
  %v1433 = vpop.f32.mrf.mxu0
  %v1434 = vadd.f32 0.0, %v1433
  %v1435 = vpop.f32.mrf.mxu0
  %v1436 = vadd.f32 0.0, %v1435
  %1437 = vmatmul.bf16.gmra.mxu0 %v1352
  %v1438 = vpop.f32.mrf.mxu0
  %v1439 = vadd.f32 0.0, %v1438
  %v1440 = vpop.f32.mrf.mxu0
  %v1441 = vadd.f32 0.0, %v1440
  %1442 = vdwg.mxu0
  %1443 = vmatpush.bf16.msra.mxu0 0
  %1444 = vmatpush.bf16.msra.mxu0 0
  %1445 = vmatpush.bf16.msra.mxu0 0
  %1446 = vmatpush.bf16.msra.mxu0 0
  %1447 = vmatpush.bf16.msra.mxu0 0
  %1448 = vmatpush.bf16.msra.mxu0 0
  %1449 = vmatpush.bf16.msra.mxu0 %v1301
  %1450 = vmatpush.bf16.msra.mxu0 %v1299
  %1451 = vmatmul.bf16.gmra.mxu0 %v1307
  %v1452 = vpop.f32.mrf.mxu0
  %v1453 = vadd.f32 0.0, %v1452
  %v1454 = vpop.f32.mrf.mxu0
  %v1455 = vadd.f32 0.0, %v1454
  %1456 = vmatmul.bf16.gmra.mxu0 %v1310
  %v1457 = vpop.f32.mrf.mxu0
  %v1458 = vadd.f32 0.0, %v1457
  %v1459 = vpop.f32.mrf.mxu0
  %v1460 = vadd.f32 0.0, %v1459
  %1461 = vmatmul.bf16.gmra.mxu0 %v1313
  %v1462 = vpop.f32.mrf.mxu0
  %v1463 = vadd.f32 0.0, %v1462
  %v1464 = vpop.f32.mrf.mxu0
  %v1465 = vadd.f32 0.0, %v1464
  %1466 = vmatmul.bf16.gmra.mxu0 %v1316
  %v1467 = vpop.f32.mrf.mxu0
  %v1468 = vadd.f32 0.0, %v1467
  %v1469 = vpop.f32.mrf.mxu0
  %v1470 = vadd.f32 0.0, %v1469
  %1471 = vmatmul.bf16.gmra.mxu0 %v1319
  %v1472 = vpop.f32.mrf.mxu0
  %v1473 = vadd.f32 0.0, %v1472
  %v1474 = vpop.f32.mrf.mxu0
  %v1475 = vadd.f32 0.0, %v1474
  %1476 = vmatmul.bf16.gmra.mxu0 %v1322
  %v1477 = vpop.f32.mrf.mxu0
  %v1478 = vadd.f32 0.0, %v1477
  %v1479 = vpop.f32.mrf.mxu0
  %v1480 = vadd.f32 0.0, %v1479
  %1481 = vmatmul.bf16.gmra.mxu0 %v1325
  %v1482 = vpop.f32.mrf.mxu0
  %v1483 = vadd.f32 0.0, %v1482
  %v1484 = vpop.f32.mrf.mxu0
  %v1485 = vadd.f32 0.0, %v1484
  %1486 = vmatmul.bf16.gmra.mxu0 %v1328
  %v1487 = vpop.f32.mrf.mxu0
  %v1488 = vadd.f32 0.0, %v1487
  %v1489 = vpop.f32.mrf.mxu0
  %v1490 = vadd.f32 0.0, %v1489
  %1491 = vmatmul.bf16.gmra.mxu0 %v1331
  %v1492 = vpop.f32.mrf.mxu0
  %v1493 = vadd.f32 0.0, %v1492
  %v1494 = vpop.f32.mrf.mxu0
  %v1495 = vadd.f32 0.0, %v1494
  %1496 = vmatmul.bf16.gmra.mxu0 %v1334
  %v1497 = vpop.f32.mrf.mxu0
  %v1498 = vadd.f32 0.0, %v1497
  %v1499 = vpop.f32.mrf.mxu0
  %v1500 = vadd.f32 0.0, %v1499
  %1501 = vmatmul.bf16.gmra.mxu0 %v1337
  %v1502 = vpop.f32.mrf.mxu0
  %v1503 = vadd.f32 0.0, %v1502
  %v1504 = vpop.f32.mrf.mxu0
  %v1505 = vadd.f32 0.0, %v1504
  %1506 = vmatmul.bf16.gmra.mxu0 %v1340
  %v1507 = vpop.f32.mrf.mxu0
  %v1508 = vadd.f32 0.0, %v1507
  %v1509 = vpop.f32.mrf.mxu0
  %v1510 = vadd.f32 0.0, %v1509
  %1511 = vmatmul.bf16.gmra.mxu0 %v1343
  %v1512 = vpop.f32.mrf.mxu0
  %v1513 = vadd.f32 0.0, %v1512
  %v1514 = vpop.f32.mrf.mxu0
  %v1515 = vadd.f32 0.0, %v1514
  %1516 = vmatmul.bf16.gmra.mxu0 %v1346
  %v1517 = vpop.f32.mrf.mxu0
  %v1518 = vadd.f32 0.0, %v1517
  %v1519 = vpop.f32.mrf.mxu0
  %v1520 = vadd.f32 0.0, %v1519
  %1521 = vmatmul.bf16.gmra.mxu0 %v1349
  %v1522 = vpop.f32.mrf.mxu0
  %v1523 = vadd.f32 0.0, %v1522
  %v1524 = vpop.f32.mrf.mxu0
  %v1525 = vadd.f32 0.0, %v1524
  %1526 = vmatmul.bf16.gmra.mxu0 %v1352
  %v1527 = vpop.f32.mrf.mxu0
  %v1528 = vadd.f32 0.0, %v1527
  %v1529 = vpop.f32.mrf.mxu0
  %v1530 = vadd.f32 0.0, %v1529
  %1531 = vdwg.mxu0
  %v1532 = vadd.f32 %v1104, %v1364
  %v1533 = vadd.f32 %v1105, %v1453
  %v1534 = vadd.f32 %v1106, %v1366
  %v1535 = vadd.f32 %v1107, %v1455
  %v1536 = vadd.f32 %v1108, %v1369
  %v1537 = vadd.f32 %v1109, %v1458
  %v1538 = vadd.f32 %v1110, %v1371
  %v1539 = vadd.f32 %v1111, %v1460
  %v1540 = vadd.f32 %v1112, %v1374
  %v1541 = vadd.f32 %v1113, %v1463
  %v1542 = vadd.f32 %v1114, %v1376
  %v1543 = vadd.f32 %v1115, %v1465
  %v1544 = vadd.f32 %v1116, %v1379
  %v1545 = vadd.f32 %v1117, %v1468
  %v1546 = vadd.f32 %v1118, %v1381
  %v1547 = vadd.f32 %v1119, %v1470
  %v1548 = vadd.f32 %v1120, %v1384
  %v1549 = vadd.f32 %v1121, %v1473
  %v1550 = vadd.f32 %v1122, %v1386
  %v1551 = vadd.f32 %v1123, %v1475
  %v1552 = vadd.f32 %v1124, %v1389
  %v1553 = vadd.f32 %v1125, %v1478
  %v1554 = vadd.f32 %v1126, %v1391
  %v1555 = vadd.f32 %v1127, %v1480
  %v1556 = vadd.f32 %v1128, %v1394
  %v1557 = vadd.f32 %v1129, %v1483
  %v1558 = vadd.f32 %v1130, %v1396
  %v1559 = vadd.f32 %v1131, %v1485
  %v1560 = vadd.f32 %v1132, %v1399
  %v1561 = vadd.f32 %v1133, %v1488
  %v1562 = vadd.f32 %v1134, %v1401
  %v1563 = vadd.f32 %v1135, %v1490
  %v1564 = vadd.f32 %v1136, %v1404
  %v1565 = vadd.f32 %v1137, %v1493
  %v1566 = vadd.f32 %v1138, %v1406
  %v1567 = vadd.f32 %v1139, %v1495
  %v1568 = vadd.f32 %v1140, %v1409
  %v1569 = vadd.f32 %v1141, %v1498
  %v1570 = vadd.f32 %v1142, %v1411
  %v1571 = vadd.f32 %v1143, %v1500
  %v1572 = vadd.f32 %v1144, %v1414
  %v1573 = vadd.f32 %v1145, %v1503
  %v1574 = vadd.f32 %v1146, %v1416
  %v1575 = vadd.f32 %v1147, %v1505
  %v1576 = vadd.f32 %v1148, %v1419
  %v1577 = vadd.f32 %v1149, %v1508
  %v1578 = vadd.f32 %v1150, %v1421
  %v1579 = vadd.f32 %v1151, %v1510
  %v1580 = vadd.f32 %v1152, %v1424
  %v1581 = vadd.f32 %v1153, %v1513
  %v1582 = vadd.f32 %v1154, %v1426
  %v1583 = vadd.f32 %v1155, %v1515
  %v1584 = vadd.f32 %v1156, %v1429
  %v1585 = vadd.f32 %v1157, %v1518
  %v1586 = vadd.f32 %v1158, %v1431
  %v1587 = vadd.f32 %v1159, %v1520
  %v1588 = vadd.f32 %v1160, %v1434
  %v1589 = vadd.f32 %v1161, %v1523
  %v1590 = vadd.f32 %v1162, %v1436
  %v1591 = vadd.f32 %v1163, %v1525
  %v1592 = vadd.f32 %v1164, %v1439
  %v1593 = vadd.f32 %v1165, %v1528
  %v1594 = vadd.f32 %v1166, %v1441
  %v1595 = vadd.f32 %v1167, %v1530
  %vm1596 = vcmask 1043456
  %v1597 = vrot.slane %v45, 4
  %v1598 = vrot.slane %v46, 4
  %v1599 = vsel %vm1596, %v1597, %v1598
  %v1600 = vrot.slane %v47, 4
  %v1601 = vsel %vm1596, %v1598, %v1600
  %v1602 = vrot.slane %v48, 4
  %v1603 = vsel %vm1596, %v1600, %v1602
  %v1604 = vrot.slane %v49, 4
  %v1605 = vsel %vm1596, %v1602, %v1604
  %v1606 = vrot.slane %v50, 4
  %v1607 = vsel %vm1596, %v1604, %v1606
  %v1608 = vrot.slane %v51, 4
  %v1609 = vsel %vm1596, %v1606, %v1608
  %v1610 = vrot.slane %v52, 4
  %v1611 = vsel %vm1596, %v1608, %v1610
  %v1612 = vrot.slane %v53, 4
  %v1613 = vsel %vm1596, %v1610, %v1612
  %v1614 = vrot.slane %v54, 4
  %v1615 = vsel %vm1596, %v1612, %v1614
  %v1616 = vrot.slane %v55, 4
  %v1617 = vsel %vm1596, %v1614, %v1616
  %v1618 = vrot.slane %v56, 4
  %v1619 = vsel %vm1596, %v1616, %v1618
  %v1620 = vrot.slane %v57, 4
  %v1621 = vsel %vm1596, %v1618, %v1620
  %v1622 = vrot.slane %v58, 4
  %v1623 = vsel %vm1596, %v1620, %v1622
  %v1624 = vrot.slane %v59, 4
  %v1625 = vsel %vm1596, %v1622, %v1624
  %v1626 = vrot.slane %v60, 4
  %v1627 = vsel %vm1596, %v1624, %v1626
  %v1628 = vrot.slane %v61, 4
  %v1629 = vsel %vm1596, %v1626, %v1628
  %v1630 = vrot.slane %v62, 4
  %v1631 = vsel %vm1596, %v1628, %v1630
  %v1632 = vrot.slane %v63, 4
  %v1633 = vsel %vm1596, %v1630, %v1632
  %v1634 = vrot.slane %v64, 4
  %v1635 = vsel %vm1596, %v1632, %v1634
  %v1636 = vrot.slane %v65, 4
  %v1637 = vsel %vm1596, %v1634, %v1636
  %v1638 = vrot.slane %v66, 4
  %v1639 = vsel %vm1596, %v1636, %v1638
  %v1640 = vrot.slane %v67, 4
  %v1641 = vsel %vm1596, %v1638, %v1640
  %v1642 = vrot.slane %v68, 4
  %v1643 = vsel %vm1596, %v1640, %v1642
  %v1644 = vrot.slane %v69, 4
  %v1645 = vsel %vm1596, %v1642, %v1644
  %v1646 = vrot.slane %v70, 4
  %v1647 = vsel %vm1596, %v1644, %v1646
  %v1648 = vrot.slane %v71, 4
  %v1649 = vsel %vm1596, %v1646, %v1648
  %v1650 = vrot.slane %v72, 4
  %v1651 = vsel %vm1596, %v1648, %v1650
  %v1652 = vrot.slane %v73, 4
  %v1653 = vsel %vm1596, %v1650, %v1652
  %v1654 = vrot.slane %v74, 4
  %v1655 = vsel %vm1596, %v1652, %v1654
  %v1656 = vrot.slane %v75, 4
  %v1657 = vsel %vm1596, %v1654, %v1656
  %v1658 = vrot.slane %v76, 4
  %v1659 = vsel %vm1596, %v1656, %v1658
  %v1692 = vsel %vm1596, %v1658, 0.0
  %v1693 = vpack.c.bf16 %v1601, %v1599
  %v1694 = vpack.c.bf16 %v1605, %v1603
  %v1695 = vpack.c.bf16 %v1609, %v1607
  %v1696 = vpack.c.bf16 %v1613, %v1611
  %v1697 = vpack.c.bf16 %v1617, %v1615
  %v1698 = vpack.c.bf16 %v1621, %v1619
  %v1699 = vpack.c.bf16 %v1625, %v1623
  %v1700 = vpack.c.bf16 %v1629, %v1627
  %v1701 = vpack.c.bf16 %v1633, %v1631
  %v1702 = vpack.c.bf16 %v1637, %v1635
  %v1703 = vpack.c.bf16 %v1641, %v1639
  %v1704 = vpack.c.bf16 %v1645, %v1643
  %v1705 = vpack.c.bf16 %v1649, %v1647
  %v1706 = vpack.c.bf16 %v1653, %v1651
  %v1707 = vpack.c.bf16 %v1657, %v1655
  %v1708 = vpack.c.bf16 %v1692, %v1659
  %s1709 = scalar_lea.vmem %s1, 128
  %v1710 = vld [vmem:[%s1709] sm:$0xff]
  %v1711 = vld [vmem:[%s1709 + $0x8] sm:$0xff]
  %v1712 = vld [vmem:[%s1709 + $0x10] sm:$0xff]
  %v1713 = vld [vmem:[%s1709 + $0x18] sm:$0xff]
  %v1718 = vunpack.c.l.b16 %v1710
  %v1719 = vunpack.c.h.b16 %v1710
  %v1720 = vunpack.c.l.b16 %v1711
  %v1721 = vunpack.c.h.b16 %v1711
  %v1722 = vunpack.c.l.b16 %v1712
  %v1723 = vunpack.c.h.b16 %v1712
  %v1724 = vunpack.c.l.b16 %v1713
  %v1725 = vunpack.c.h.b16 %v1713
  %v1726 = vpack.c.b16 %v1720, %v1718
  %v1727 = vpack.c.b16 %v1721, %v1719
  %v1728 = vpack.c.b16 %v1724, %v1722
  %v1729 = vpack.c.b16 %v1725, %v1723
  %v1735 = vsel %vm267, %v1693, 0
  %v1738 = vsel %vm267, %v1694, 0
  %v1741 = vsel %vm267, %v1695, 0
  %v1744 = vsel %vm267, %v1696, 0
  %v1747 = vsel %vm267, %v1697, 0
  %v1750 = vsel %vm267, %v1698, 0
  %v1753 = vsel %vm267, %v1699, 0
  %v1756 = vsel %vm267, %v1700, 0
  %v1759 = vsel %vm267, %v1701, 0
  %v1762 = vsel %vm267, %v1702, 0
  %v1765 = vsel %vm267, %v1703, 0
  %v1768 = vsel %vm267, %v1704, 0
  %v1771 = vsel %vm267, %v1705, 0
  %v1774 = vsel %vm267, %v1706, 0
  %v1777 = vsel %vm267, %v1707, 0
  %v1780 = vsel %vm267, %v1708, 0
  %1782 = vmatpush.bf16.msra.mxu0 0
  %1783 = vmatpush.bf16.msra.mxu0 0
  %1784 = vmatpush.bf16.msra.mxu0 0
  %1785 = vmatpush.bf16.msra.mxu0 0
  %1786 = vmatpush.bf16.msra.mxu0 0
  %1787 = vmatpush.bf16.msra.mxu0 0
  %1788 = vmatpush.bf16.msra.mxu0 %v1728
  %1789 = vmatpush.bf16.msra.mxu0 %v1726
  %1790 = vmatmul.bf16.gmra.mxu0 %v1735
  %v1791 = vpop.f32.mrf.mxu0
  %v1792 = vadd.f32 0.0, %v1791
  %v1793 = vpop.f32.mrf.mxu0
  %v1794 = vadd.f32 0.0, %v1793
  %1795 = vmatmul.bf16.gmra.mxu0 %v1738
  %v1796 = vpop.f32.mrf.mxu0
  %v1797 = vadd.f32 0.0, %v1796
  %v1798 = vpop.f32.mrf.mxu0
  %v1799 = vadd.f32 0.0, %v1798
  %1800 = vmatmul.bf16.gmra.mxu0 %v1741
  %v1801 = vpop.f32.mrf.mxu0
  %v1802 = vadd.f32 0.0, %v1801
  %v1803 = vpop.f32.mrf.mxu0
  %v1804 = vadd.f32 0.0, %v1803
  %1805 = vmatmul.bf16.gmra.mxu0 %v1744
  %v1806 = vpop.f32.mrf.mxu0
  %v1807 = vadd.f32 0.0, %v1806
  %v1808 = vpop.f32.mrf.mxu0
  %v1809 = vadd.f32 0.0, %v1808
  %1810 = vmatmul.bf16.gmra.mxu0 %v1747
  %v1811 = vpop.f32.mrf.mxu0
  %v1812 = vadd.f32 0.0, %v1811
  %v1813 = vpop.f32.mrf.mxu0
  %v1814 = vadd.f32 0.0, %v1813
  %1815 = vmatmul.bf16.gmra.mxu0 %v1750
  %v1816 = vpop.f32.mrf.mxu0
  %v1817 = vadd.f32 0.0, %v1816
  %v1818 = vpop.f32.mrf.mxu0
  %v1819 = vadd.f32 0.0, %v1818
  %1820 = vmatmul.bf16.gmra.mxu0 %v1753
  %v1821 = vpop.f32.mrf.mxu0
  %v1822 = vadd.f32 0.0, %v1821
  %v1823 = vpop.f32.mrf.mxu0
  %v1824 = vadd.f32 0.0, %v1823
  %1825 = vmatmul.bf16.gmra.mxu0 %v1756
  %v1826 = vpop.f32.mrf.mxu0
  %v1827 = vadd.f32 0.0, %v1826
  %v1828 = vpop.f32.mrf.mxu0
  %v1829 = vadd.f32 0.0, %v1828
  %1830 = vmatmul.bf16.gmra.mxu0 %v1759
  %v1831 = vpop.f32.mrf.mxu0
  %v1832 = vadd.f32 0.0, %v1831
  %v1833 = vpop.f32.mrf.mxu0
  %v1834 = vadd.f32 0.0, %v1833
  %1835 = vmatmul.bf16.gmra.mxu0 %v1762
  %v1836 = vpop.f32.mrf.mxu0
  %v1837 = vadd.f32 0.0, %v1836
  %v1838 = vpop.f32.mrf.mxu0
  %v1839 = vadd.f32 0.0, %v1838
  %1840 = vmatmul.bf16.gmra.mxu0 %v1765
  %v1841 = vpop.f32.mrf.mxu0
  %v1842 = vadd.f32 0.0, %v1841
  %v1843 = vpop.f32.mrf.mxu0
  %v1844 = vadd.f32 0.0, %v1843
  %1845 = vmatmul.bf16.gmra.mxu0 %v1768
  %v1846 = vpop.f32.mrf.mxu0
  %v1847 = vadd.f32 0.0, %v1846
  %v1848 = vpop.f32.mrf.mxu0
  %v1849 = vadd.f32 0.0, %v1848
  %1850 = vmatmul.bf16.gmra.mxu0 %v1771
  %v1851 = vpop.f32.mrf.mxu0
  %v1852 = vadd.f32 0.0, %v1851
  %v1853 = vpop.f32.mrf.mxu0
  %v1854 = vadd.f32 0.0, %v1853
  %1855 = vmatmul.bf16.gmra.mxu0 %v1774
  %v1856 = vpop.f32.mrf.mxu0
  %v1857 = vadd.f32 0.0, %v1856
  %v1858 = vpop.f32.mrf.mxu0
  %v1859 = vadd.f32 0.0, %v1858
  %1860 = vmatmul.bf16.gmra.mxu0 %v1777
  %v1861 = vpop.f32.mrf.mxu0
  %v1862 = vadd.f32 0.0, %v1861
  %v1863 = vpop.f32.mrf.mxu0
  %v1864 = vadd.f32 0.0, %v1863
  %1865 = vmatmul.bf16.gmra.mxu0 %v1780
  %v1866 = vpop.f32.mrf.mxu0
  %v1867 = vadd.f32 0.0, %v1866
  %v1868 = vpop.f32.mrf.mxu0
  %v1869 = vadd.f32 0.0, %v1868
  %1870 = vdwg.mxu0
  %1871 = vmatpush.bf16.msra.mxu0 0
  %1872 = vmatpush.bf16.msra.mxu0 0
  %1873 = vmatpush.bf16.msra.mxu0 0
  %1874 = vmatpush.bf16.msra.mxu0 0
  %1875 = vmatpush.bf16.msra.mxu0 0
  %1876 = vmatpush.bf16.msra.mxu0 0
  %1877 = vmatpush.bf16.msra.mxu0 %v1729
  %1878 = vmatpush.bf16.msra.mxu0 %v1727
  %1879 = vmatmul.bf16.gmra.mxu0 %v1735
  %v1880 = vpop.f32.mrf.mxu0
  %v1881 = vadd.f32 0.0, %v1880
  %v1882 = vpop.f32.mrf.mxu0
  %v1883 = vadd.f32 0.0, %v1882
  %1884 = vmatmul.bf16.gmra.mxu0 %v1738
  %v1885 = vpop.f32.mrf.mxu0
  %v1886 = vadd.f32 0.0, %v1885
  %v1887 = vpop.f32.mrf.mxu0
  %v1888 = vadd.f32 0.0, %v1887
  %1889 = vmatmul.bf16.gmra.mxu0 %v1741
  %v1890 = vpop.f32.mrf.mxu0
  %v1891 = vadd.f32 0.0, %v1890
  %v1892 = vpop.f32.mrf.mxu0
  %v1893 = vadd.f32 0.0, %v1892
  %1894 = vmatmul.bf16.gmra.mxu0 %v1744
  %v1895 = vpop.f32.mrf.mxu0
  %v1896 = vadd.f32 0.0, %v1895
  %v1897 = vpop.f32.mrf.mxu0
  %v1898 = vadd.f32 0.0, %v1897
  %1899 = vmatmul.bf16.gmra.mxu0 %v1747
  %v1900 = vpop.f32.mrf.mxu0
  %v1901 = vadd.f32 0.0, %v1900
  %v1902 = vpop.f32.mrf.mxu0
  %v1903 = vadd.f32 0.0, %v1902
  %1904 = vmatmul.bf16.gmra.mxu0 %v1750
  %v1905 = vpop.f32.mrf.mxu0
  %v1906 = vadd.f32 0.0, %v1905
  %v1907 = vpop.f32.mrf.mxu0
  %v1908 = vadd.f32 0.0, %v1907
  %1909 = vmatmul.bf16.gmra.mxu0 %v1753
  %v1910 = vpop.f32.mrf.mxu0
  %v1911 = vadd.f32 0.0, %v1910
  %v1912 = vpop.f32.mrf.mxu0
  %v1913 = vadd.f32 0.0, %v1912
  %1914 = vmatmul.bf16.gmra.mxu0 %v1756
  %v1915 = vpop.f32.mrf.mxu0
  %v1916 = vadd.f32 0.0, %v1915
  %v1917 = vpop.f32.mrf.mxu0
  %v1918 = vadd.f32 0.0, %v1917
  %1919 = vmatmul.bf16.gmra.mxu0 %v1759
  %v1920 = vpop.f32.mrf.mxu0
  %v1921 = vadd.f32 0.0, %v1920
  %v1922 = vpop.f32.mrf.mxu0
  %v1923 = vadd.f32 0.0, %v1922
  %1924 = vmatmul.bf16.gmra.mxu0 %v1762
  %v1925 = vpop.f32.mrf.mxu0
  %v1926 = vadd.f32 0.0, %v1925
  %v1927 = vpop.f32.mrf.mxu0
  %v1928 = vadd.f32 0.0, %v1927
  %1929 = vmatmul.bf16.gmra.mxu0 %v1765
  %v1930 = vpop.f32.mrf.mxu0
  %v1931 = vadd.f32 0.0, %v1930
  %v1932 = vpop.f32.mrf.mxu0
  %v1933 = vadd.f32 0.0, %v1932
  %1934 = vmatmul.bf16.gmra.mxu0 %v1768
  %v1935 = vpop.f32.mrf.mxu0
  %v1936 = vadd.f32 0.0, %v1935
  %v1937 = vpop.f32.mrf.mxu0
  %v1938 = vadd.f32 0.0, %v1937
  %1939 = vmatmul.bf16.gmra.mxu0 %v1771
  %v1940 = vpop.f32.mrf.mxu0
  %v1941 = vadd.f32 0.0, %v1940
  %v1942 = vpop.f32.mrf.mxu0
  %v1943 = vadd.f32 0.0, %v1942
  %1944 = vmatmul.bf16.gmra.mxu0 %v1774
  %v1945 = vpop.f32.mrf.mxu0
  %v1946 = vadd.f32 0.0, %v1945
  %v1947 = vpop.f32.mrf.mxu0
  %v1948 = vadd.f32 0.0, %v1947
  %1949 = vmatmul.bf16.gmra.mxu0 %v1777
  %v1950 = vpop.f32.mrf.mxu0
  %v1951 = vadd.f32 0.0, %v1950
  %v1952 = vpop.f32.mrf.mxu0
  %v1953 = vadd.f32 0.0, %v1952
  %1954 = vmatmul.bf16.gmra.mxu0 %v1780
  %v1955 = vpop.f32.mrf.mxu0
  %v1956 = vadd.f32 0.0, %v1955
  %v1957 = vpop.f32.mrf.mxu0
  %v1958 = vadd.f32 0.0, %v1957
  %1959 = vdwg.mxu0
  %v1960 = vadd.f32 %v1532, %v1792
  %v1961 = vadd.f32 %v1533, %v1881
  %v1962 = vadd.f32 %v1534, %v1794
  %v1963 = vadd.f32 %v1535, %v1883
  %v1964 = vadd.f32 %v1536, %v1797
  %v1965 = vadd.f32 %v1537, %v1886
  %v1966 = vadd.f32 %v1538, %v1799
  %v1967 = vadd.f32 %v1539, %v1888
  %v1968 = vadd.f32 %v1540, %v1802
  %v1969 = vadd.f32 %v1541, %v1891
  %v1970 = vadd.f32 %v1542, %v1804
  %v1971 = vadd.f32 %v1543, %v1893
  %v1972 = vadd.f32 %v1544, %v1807
  %v1973 = vadd.f32 %v1545, %v1896
  %v1974 = vadd.f32 %v1546, %v1809
  %v1975 = vadd.f32 %v1547, %v1898
  %v1976 = vadd.f32 %v1548, %v1812
  %v1977 = vadd.f32 %v1549, %v1901
  %v1978 = vadd.f32 %v1550, %v1814
  %v1979 = vadd.f32 %v1551, %v1903
  %v1980 = vadd.f32 %v1552, %v1817
  %v1981 = vadd.f32 %v1553, %v1906
  %v1982 = vadd.f32 %v1554, %v1819
  %v1983 = vadd.f32 %v1555, %v1908
  %v1984 = vadd.f32 %v1556, %v1822
  %v1985 = vadd.f32 %v1557, %v1911
  %v1986 = vadd.f32 %v1558, %v1824
  %v1987 = vadd.f32 %v1559, %v1913
  %v1988 = vadd.f32 %v1560, %v1827
  %v1989 = vadd.f32 %v1561, %v1916
  %v1990 = vadd.f32 %v1562, %v1829
  %v1991 = vadd.f32 %v1563, %v1918
  %v1992 = vadd.f32 %v1564, %v1832
  %v1993 = vadd.f32 %v1565, %v1921
  %v1994 = vadd.f32 %v1566, %v1834
  %v1995 = vadd.f32 %v1567, %v1923
  %v1996 = vadd.f32 %v1568, %v1837
  %v1997 = vadd.f32 %v1569, %v1926
  %v1998 = vadd.f32 %v1570, %v1839
  %v1999 = vadd.f32 %v1571, %v1928
  %v2000 = vadd.f32 %v1572, %v1842
  %v2001 = vadd.f32 %v1573, %v1931
  %v2002 = vadd.f32 %v1574, %v1844
  %v2003 = vadd.f32 %v1575, %v1933
  %v2004 = vadd.f32 %v1576, %v1847
  %v2005 = vadd.f32 %v1577, %v1936
  %v2006 = vadd.f32 %v1578, %v1849
  %v2007 = vadd.f32 %v1579, %v1938
  %v2008 = vadd.f32 %v1580, %v1852
  %v2009 = vadd.f32 %v1581, %v1941
  %v2010 = vadd.f32 %v1582, %v1854
  %v2011 = vadd.f32 %v1583, %v1943
  %v2012 = vadd.f32 %v1584, %v1857
  %v2013 = vadd.f32 %v1585, %v1946
  %v2014 = vadd.f32 %v1586, %v1859
  %v2015 = vadd.f32 %v1587, %v1948
  %v2016 = vadd.f32 %v1588, %v1862
  %v2017 = vadd.f32 %v1589, %v1951
  %v2018 = vadd.f32 %v1590, %v1864
  %v2019 = vadd.f32 %v1591, %v1953
  %v2020 = vadd.f32 %v1592, %v1867
  %v2021 = vadd.f32 %v1593, %v1956
  %v2022 = vadd.f32 %v1594, %v1869
  %v2023 = vadd.f32 %v1595, %v1958
  %v2024 = vld [vmem:[%s2] sm:$0x3]
  %v2026 = vperm.slane %v2024, 0
  %v2027 = vperm.slane %v2024, 1
  %v2030 = vadd.f32 %v1960, %v2026
  %v2031 = vadd.f32 %v1961, %v2027
  %v2032 = vadd.f32 %v1962, %v2026
  %v2033 = vadd.f32 %v1963, %v2027
  %v2034 = vadd.f32 %v1964, %v2026
  %v2035 = vadd.f32 %v1965, %v2027
  %v2036 = vadd.f32 %v1966, %v2026
  %v2037 = vadd.f32 %v1967, %v2027
  %v2038 = vadd.f32 %v1968, %v2026
  %v2039 = vadd.f32 %v1969, %v2027
  %v2040 = vadd.f32 %v1970, %v2026
  %v2041 = vadd.f32 %v1971, %v2027
  %v2042 = vadd.f32 %v1972, %v2026
  %v2043 = vadd.f32 %v1973, %v2027
  %v2044 = vadd.f32 %v1974, %v2026
  %v2045 = vadd.f32 %v1975, %v2027
  %v2046 = vadd.f32 %v1976, %v2026
  %v2047 = vadd.f32 %v1977, %v2027
  %v2048 = vadd.f32 %v1978, %v2026
  %v2049 = vadd.f32 %v1979, %v2027
  %v2050 = vadd.f32 %v1980, %v2026
  %v2051 = vadd.f32 %v1981, %v2027
  %v2052 = vadd.f32 %v1982, %v2026
  %v2053 = vadd.f32 %v1983, %v2027
  %v2054 = vadd.f32 %v1984, %v2026
  %v2055 = vadd.f32 %v1985, %v2027
  %v2056 = vadd.f32 %v1986, %v2026
  %v2057 = vadd.f32 %v1987, %v2027
  %v2058 = vadd.f32 %v1988, %v2026
  %v2059 = vadd.f32 %v1989, %v2027
  %v2060 = vadd.f32 %v1990, %v2026
  %v2061 = vadd.f32 %v1991, %v2027
  %v2062 = vadd.f32 %v1992, %v2026
  %v2063 = vadd.f32 %v1993, %v2027
  %v2064 = vadd.f32 %v1994, %v2026
  %v2065 = vadd.f32 %v1995, %v2027
  %v2066 = vadd.f32 %v1996, %v2026
  %v2067 = vadd.f32 %v1997, %v2027
  %v2068 = vadd.f32 %v1998, %v2026
  %v2069 = vadd.f32 %v1999, %v2027
  %v2070 = vadd.f32 %v2000, %v2026
  %v2071 = vadd.f32 %v2001, %v2027
  %v2072 = vadd.f32 %v2002, %v2026
  %v2073 = vadd.f32 %v2003, %v2027
  %v2074 = vadd.f32 %v2004, %v2026
  %v2075 = vadd.f32 %v2005, %v2027
  %v2076 = vadd.f32 %v2006, %v2026
  %v2077 = vadd.f32 %v2007, %v2027
  %v2078 = vadd.f32 %v2008, %v2026
  %v2079 = vadd.f32 %v2009, %v2027
  %v2080 = vadd.f32 %v2010, %v2026
  %v2081 = vadd.f32 %v2011, %v2027
  %v2082 = vadd.f32 %v2012, %v2026
  %v2083 = vadd.f32 %v2013, %v2027
  %v2084 = vadd.f32 %v2014, %v2026
  %v2085 = vadd.f32 %v2015, %v2027
  %v2086 = vadd.f32 %v2016, %v2026
  %v2087 = vadd.f32 %v2017, %v2027
  %v2088 = vadd.f32 %v2018, %v2026
  %v2089 = vadd.f32 %v2019, %v2027
  %v2090 = vadd.f32 %v2020, %v2026
  %v2091 = vadd.f32 %v2021, %v2027
  %v2092 = vadd.f32 %v2022, %v2026
  %v2093 = vadd.f32 %v2023, %v2027
  %v2094 = vtanh.pop %v2030
  %v2095 = vtanh.pop %v2031
  %v2096 = vtanh.pop %v2032
  %v2097 = vtanh.pop %v2033
  %v2098 = vtanh.pop %v2034
  %v2099 = vtanh.pop %v2035
  %v2100 = vtanh.pop %v2036
  %v2101 = vtanh.pop %v2037
  %v2102 = vtanh.pop %v2038
  %v2103 = vtanh.pop %v2039
  %v2104 = vtanh.pop %v2040
  %v2105 = vtanh.pop %v2041
  %v2106 = vtanh.pop %v2042
  %v2107 = vtanh.pop %v2043
  %v2108 = vtanh.pop %v2044
  %v2109 = vtanh.pop %v2045
  %v2110 = vtanh.pop %v2046
  %v2111 = vtanh.pop %v2047
  %v2112 = vtanh.pop %v2048
  %v2113 = vtanh.pop %v2049
  %v2114 = vtanh.pop %v2050
  %v2115 = vtanh.pop %v2051
  %v2116 = vtanh.pop %v2052
  %v2117 = vtanh.pop %v2053
  %v2118 = vtanh.pop %v2054
  %v2119 = vtanh.pop %v2055
  %v2120 = vtanh.pop %v2056
  %v2121 = vtanh.pop %v2057
  %v2122 = vtanh.pop %v2058
  %v2123 = vtanh.pop %v2059
  %v2124 = vtanh.pop %v2060
  %v2125 = vtanh.pop %v2061
  %v2126 = vtanh.pop %v2062
  %v2127 = vtanh.pop %v2063
  %v2128 = vtanh.pop %v2064
  %v2129 = vtanh.pop %v2065
  %v2130 = vtanh.pop %v2066
  %v2131 = vtanh.pop %v2067
  %v2132 = vtanh.pop %v2068
  %v2133 = vtanh.pop %v2069
  %v2134 = vtanh.pop %v2070
  %v2135 = vtanh.pop %v2071
  %v2136 = vtanh.pop %v2072
  %v2137 = vtanh.pop %v2073
  %v2138 = vtanh.pop %v2074
  %v2139 = vtanh.pop %v2075
  %v2140 = vtanh.pop %v2076
  %v2141 = vtanh.pop %v2077
  %v2142 = vtanh.pop %v2078
  %v2143 = vtanh.pop %v2079
  %v2144 = vtanh.pop %v2080
  %v2145 = vtanh.pop %v2081
  %v2146 = vtanh.pop %v2082
  %v2147 = vtanh.pop %v2083
  %v2148 = vtanh.pop %v2084
  %v2149 = vtanh.pop %v2085
  %v2150 = vtanh.pop %v2086
  %v2151 = vtanh.pop %v2087
  %v2152 = vtanh.pop %v2088
  %v2153 = vtanh.pop %v2089
  %v2154 = vtanh.pop %v2090
  %v2155 = vtanh.pop %v2091
  %v2156 = vtanh.pop %v2092
  %v2157 = vtanh.pop %v2093
  %v2158 = vpack.c.bf16 %v2096, %v2094
  %v2159 = vpack.c.bf16 %v2097, %v2095
  %v2160 = vpack.c.bf16 %v2100, %v2098
  %v2161 = vpack.c.bf16 %v2101, %v2099
  %v2162 = vpack.c.bf16 %v2104, %v2102
  %v2163 = vpack.c.bf16 %v2105, %v2103
  %v2164 = vpack.c.bf16 %v2108, %v2106
  %v2165 = vpack.c.bf16 %v2109, %v2107
  %v2166 = vpack.c.bf16 %v2112, %v2110
  %v2167 = vpack.c.bf16 %v2113, %v2111
  %v2168 = vpack.c.bf16 %v2116, %v2114
  %v2169 = vpack.c.bf16 %v2117, %v2115
  %v2170 = vpack.c.bf16 %v2120, %v2118
  %v2171 = vpack.c.bf16 %v2121, %v2119
  %v2172 = vpack.c.bf16 %v2124, %v2122
  %v2173 = vpack.c.bf16 %v2125, %v2123
  %v2174 = vpack.c.bf16 %v2128, %v2126
  %v2175 = vpack.c.bf16 %v2129, %v2127
  %v2176 = vpack.c.bf16 %v2132, %v2130
  %v2177 = vpack.c.bf16 %v2133, %v2131
  %v2178 = vpack.c.bf16 %v2136, %v2134
  %v2179 = vpack.c.bf16 %v2137, %v2135
  %v2180 = vpack.c.bf16 %v2140, %v2138
  %v2181 = vpack.c.bf16 %v2141, %v2139
  %v2182 = vpack.c.bf16 %v2144, %v2142
  %v2183 = vpack.c.bf16 %v2145, %v2143
  %v2184 = vpack.c.bf16 %v2148, %v2146
  %v2185 = vpack.c.bf16 %v2149, %v2147
  %v2186 = vpack.c.bf16 %v2152, %v2150
  %v2187 = vpack.c.bf16 %v2153, %v2151
  %v2188 = vpack.c.bf16 %v2156, %v2154
  %v2189 = vpack.c.bf16 %v2157, %v2155
  %v2190 = vld [vmem:[%s3] sm:$0xf]
  %v2191 = vld [vmem:[%s3 + $0x4] sm:$0xf]
  %v2192 = vld [vmem:[%s3 + $0x8] sm:$0xf]
  %v2193 = vld [vmem:[%s3 + $0xc] sm:$0xf]
  %v2194 = vld [vmem:[%s3 + $0x10] sm:$0xf]
  %v2195 = vld [vmem:[%s3 + $0x14] sm:$0xf]
  %v2196 = vld [vmem:[%s3 + $0x18] sm:$0xf]
  %v2197 = vld [vmem:[%s3 + $0x1c] sm:$0xf]
  %v2198 = vld [vmem:[%s3 + $0x20] sm:$0xf]
  %v2199 = vld [vmem:[%s3 + $0x24] sm:$0xf]
  %v2200 = vld [vmem:[%s3 + $0x28] sm:$0xf]
  %v2201 = vld [vmem:[%s3 + $0x2c] sm:$0xf]
  %v2202 = vld [vmem:[%s3 + $0x30] sm:$0xf]
  %v2203 = vld [vmem:[%s3 + $0x34] sm:$0xf]
  %v2204 = vld [vmem:[%s3 + $0x38] sm:$0xf]
  %v2205 = vld [vmem:[%s3 + $0x3c] sm:$0xf]
  %v2206 = vld [vmem:[%s3 + $0x40] sm:$0xf]
  %v2207 = vld [vmem:[%s3 + $0x44] sm:$0xf]
  %v2208 = vld [vmem:[%s3 + $0x48] sm:$0xf]
  %v2209 = vld [vmem:[%s3 + $0x4c] sm:$0xf]
  %v2210 = vld [vmem:[%s3 + $0x50] sm:$0xf]
  %v2232 = vunpack.c.l.b16 %v2190
  %v2233 = vunpack.c.l.b16 %v2191
  %v2234 = vunpack.c.l.b16 %v2192
  %v2235 = vunpack.c.l.b16 %v2193
  %v2236 = vunpack.c.l.b16 %v2194
  %v2237 = vunpack.c.l.b16 %v2195
  %v2238 = vunpack.c.l.b16 %v2196
  %v2239 = vunpack.c.l.b16 %v2197
  %v2240 = vunpack.c.l.b16 %v2198
  %v2241 = vunpack.c.l.b16 %v2199
  %v2242 = vunpack.c.l.b16 %v2200
  %v2243 = vunpack.c.l.b16 %v2201
  %v2244 = vunpack.c.l.b16 %v2202
  %v2245 = vunpack.c.l.b16 %v2203
  %v2246 = vunpack.c.l.b16 %v2204
  %v2247 = vunpack.c.l.b16 %v2205
  %v2248 = vunpack.c.l.b16 %v2206
  %v2249 = vunpack.c.l.b16 %v2207
  %v2250 = vunpack.c.l.b16 %v2208
  %v2251 = vunpack.c.l.b16 %v2209
  %v2252 = vunpack.c.l.b16 %v2210
  %v2253 = vpack.c.b16 %v2233, %v2232
  %v2254 = vpack.c.b16 %v2235, %v2234
  %v2255 = vpack.c.b16 %v2237, %v2236
  %v2256 = vpack.c.b16 %v2239, %v2238
  %v2257 = vpack.c.b16 %v2241, %v2240
  %v2258 = vpack.c.b16 %v2243, %v2242
  %v2259 = vpack.c.b16 %v2245, %v2244
  %v2260 = vpack.c.b16 %v2247, %v2246
  %v2261 = vpack.c.b16 %v2249, %v2248
  %v2262 = vpack.c.b16 %v2251, %v2250
  %v2263 = vpack.c.b16 %v2252, %v2252
  %vm2274 = vcmask 326656
  %v2276 = vsel %vm2274, %v2159, 0
  %v2279 = vsel %vm2274, %v2161, 0
  %v2282 = vsel %vm2274, %v2163, 0
  %v2285 = vsel %vm2274, %v2165, 0
  %v2288 = vsel %vm2274, %v2167, 0
  %v2291 = vsel %vm2274, %v2169, 0
  %v2294 = vsel %vm2274, %v2171, 0
  %v2297 = vsel %vm2274, %v2173, 0
  %v2300 = vsel %vm2274, %v2175, 0
  %v2303 = vsel %vm2274, %v2177, 0
  %v2306 = vsel %vm2274, %v2179, 0
  %v2309 = vsel %vm2274, %v2181, 0
  %v2312 = vsel %vm2274, %v2183, 0
  %v2315 = vsel %vm2274, %v2185, 0
  %v2318 = vsel %vm2274, %v2187, 0
  %v2321 = vsel %vm2274, %v2189, 0
  %v2324 = vsel %vm1596, %v2263, 0
  %2326 = vmatpush.bf16.msra.mxu0 %v2260
  %2327 = vmatpush.bf16.msra.mxu0 %v2259
  %2328 = vmatpush.bf16.msra.mxu0 %v2258
  %2329 = vmatpush.bf16.msra.mxu0 %v2257
  %2330 = vmatpush.bf16.msra.mxu0 %v2256
  %2331 = vmatpush.bf16.msra.mxu0 %v2255
  %2332 = vmatpush.bf16.msra.mxu0 %v2254
  %2333 = vmatpush.bf16.msra.mxu0 %v2253
  %2334 = vmatmul.bf16.gmra.mxu0 %v2158
  %v2335 = vpop.f32.mrf.mxu0
  %v2336 = vadd.f32 0.0, %v2335
  %v2337 = vpop.f32.mrf.mxu0
  %v2338 = vadd.f32 0.0, %v2337
  %2339 = vmatmul.bf16.gmra.mxu0 %v2160
  %v2340 = vpop.f32.mrf.mxu0
  %v2341 = vadd.f32 0.0, %v2340
  %v2342 = vpop.f32.mrf.mxu0
  %v2343 = vadd.f32 0.0, %v2342
  %2344 = vmatmul.bf16.gmra.mxu0 %v2162
  %v2345 = vpop.f32.mrf.mxu0
  %v2346 = vadd.f32 0.0, %v2345
  %v2347 = vpop.f32.mrf.mxu0
  %v2348 = vadd.f32 0.0, %v2347
  %2349 = vmatmul.bf16.gmra.mxu0 %v2164
  %v2350 = vpop.f32.mrf.mxu0
  %v2351 = vadd.f32 0.0, %v2350
  %v2352 = vpop.f32.mrf.mxu0
  %v2353 = vadd.f32 0.0, %v2352
  %2354 = vmatmul.bf16.gmra.mxu0 %v2166
  %v2355 = vpop.f32.mrf.mxu0
  %v2356 = vadd.f32 0.0, %v2355
  %v2357 = vpop.f32.mrf.mxu0
  %v2358 = vadd.f32 0.0, %v2357
  %2359 = vmatmul.bf16.gmra.mxu0 %v2168
  %v2360 = vpop.f32.mrf.mxu0
  %v2361 = vadd.f32 0.0, %v2360
  %v2362 = vpop.f32.mrf.mxu0
  %v2363 = vadd.f32 0.0, %v2362
  %2364 = vmatmul.bf16.gmra.mxu0 %v2170
  %v2365 = vpop.f32.mrf.mxu0
  %v2366 = vadd.f32 0.0, %v2365
  %v2367 = vpop.f32.mrf.mxu0
  %v2368 = vadd.f32 0.0, %v2367
  %2369 = vmatmul.bf16.gmra.mxu0 %v2172
  %v2370 = vpop.f32.mrf.mxu0
  %v2371 = vadd.f32 0.0, %v2370
  %v2372 = vpop.f32.mrf.mxu0
  %v2373 = vadd.f32 0.0, %v2372
  %2374 = vmatmul.bf16.gmra.mxu0 %v2174
  %v2375 = vpop.f32.mrf.mxu0
  %v2376 = vadd.f32 0.0, %v2375
  %v2377 = vpop.f32.mrf.mxu0
  %v2378 = vadd.f32 0.0, %v2377
  %2379 = vmatmul.bf16.gmra.mxu0 %v2176
  %v2380 = vpop.f32.mrf.mxu0
  %v2381 = vadd.f32 0.0, %v2380
  %v2382 = vpop.f32.mrf.mxu0
  %v2383 = vadd.f32 0.0, %v2382
  %2384 = vmatmul.bf16.gmra.mxu0 %v2178
  %v2385 = vpop.f32.mrf.mxu0
  %v2386 = vadd.f32 0.0, %v2385
  %v2387 = vpop.f32.mrf.mxu0
  %v2388 = vadd.f32 0.0, %v2387
  %2389 = vmatmul.bf16.gmra.mxu0 %v2180
  %v2390 = vpop.f32.mrf.mxu0
  %v2391 = vadd.f32 0.0, %v2390
  %v2392 = vpop.f32.mrf.mxu0
  %v2393 = vadd.f32 0.0, %v2392
  %2394 = vmatmul.bf16.gmra.mxu0 %v2182
  %v2395 = vpop.f32.mrf.mxu0
  %v2396 = vadd.f32 0.0, %v2395
  %v2397 = vpop.f32.mrf.mxu0
  %v2398 = vadd.f32 0.0, %v2397
  %2399 = vmatmul.bf16.gmra.mxu0 %v2184
  %v2400 = vpop.f32.mrf.mxu0
  %v2401 = vadd.f32 0.0, %v2400
  %v2402 = vpop.f32.mrf.mxu0
  %v2403 = vadd.f32 0.0, %v2402
  %2404 = vmatmul.bf16.gmra.mxu0 %v2186
  %v2405 = vpop.f32.mrf.mxu0
  %v2406 = vadd.f32 0.0, %v2405
  %v2407 = vpop.f32.mrf.mxu0
  %v2408 = vadd.f32 0.0, %v2407
  %2409 = vmatmul.bf16.gmra.mxu0 %v2188
  %v2410 = vpop.f32.mrf.mxu0
  %v2411 = vadd.f32 0.0, %v2410
  %v2412 = vpop.f32.mrf.mxu0
  %v2413 = vadd.f32 0.0, %v2412
  %2414 = vdwg.mxu0
  %2415 = vmatpush.bf16.msra.mxu0 0
  %2416 = vmatpush.bf16.msra.mxu0 0
  %2417 = vmatpush.bf16.msra.mxu0 0
  %2418 = vmatpush.bf16.msra.mxu0 0
  %2419 = vmatpush.bf16.msra.mxu0 0
  %2420 = vmatpush.bf16.msra.mxu0 %v2324
  %2421 = vmatpush.bf16.msra.mxu0 %v2262
  %2422 = vmatpush.bf16.msra.mxu0 %v2261
  %2423 = vmatmul.bf16.gmra.mxu0 %v2276
  %v2424 = vpop.f32.mrf.mxu0
  %v2425 = vadd.f32 %v2336, %v2424
  %v2426 = vpop.f32.mrf.mxu0
  %v2427 = vadd.f32 %v2338, %v2426
  %2428 = vmatmul.bf16.gmra.mxu0 %v2279
  %v2429 = vpop.f32.mrf.mxu0
  %v2430 = vadd.f32 %v2341, %v2429
  %v2431 = vpop.f32.mrf.mxu0
  %v2432 = vadd.f32 %v2343, %v2431
  %2433 = vmatmul.bf16.gmra.mxu0 %v2282
  %v2434 = vpop.f32.mrf.mxu0
  %v2435 = vadd.f32 %v2346, %v2434
  %v2436 = vpop.f32.mrf.mxu0
  %v2437 = vadd.f32 %v2348, %v2436
  %2438 = vmatmul.bf16.gmra.mxu0 %v2285
  %v2439 = vpop.f32.mrf.mxu0
  %v2440 = vadd.f32 %v2351, %v2439
  %v2441 = vpop.f32.mrf.mxu0
  %v2442 = vadd.f32 %v2353, %v2441
  %2443 = vmatmul.bf16.gmra.mxu0 %v2288
  %v2444 = vpop.f32.mrf.mxu0
  %v2445 = vadd.f32 %v2356, %v2444
  %v2446 = vpop.f32.mrf.mxu0
  %v2447 = vadd.f32 %v2358, %v2446
  %2448 = vmatmul.bf16.gmra.mxu0 %v2291
  %v2449 = vpop.f32.mrf.mxu0
  %v2450 = vadd.f32 %v2361, %v2449
  %v2451 = vpop.f32.mrf.mxu0
  %v2452 = vadd.f32 %v2363, %v2451
  %2453 = vmatmul.bf16.gmra.mxu0 %v2294
  %v2454 = vpop.f32.mrf.mxu0
  %v2455 = vadd.f32 %v2366, %v2454
  %v2456 = vpop.f32.mrf.mxu0
  %v2457 = vadd.f32 %v2368, %v2456
  %2458 = vmatmul.bf16.gmra.mxu0 %v2297
  %v2459 = vpop.f32.mrf.mxu0
  %v2460 = vadd.f32 %v2371, %v2459
  %v2461 = vpop.f32.mrf.mxu0
  %v2462 = vadd.f32 %v2373, %v2461
  %2463 = vmatmul.bf16.gmra.mxu0 %v2300
  %v2464 = vpop.f32.mrf.mxu0
  %v2465 = vadd.f32 %v2376, %v2464
  %v2466 = vpop.f32.mrf.mxu0
  %v2467 = vadd.f32 %v2378, %v2466
  %2468 = vmatmul.bf16.gmra.mxu0 %v2303
  %v2469 = vpop.f32.mrf.mxu0
  %v2470 = vadd.f32 %v2381, %v2469
  %v2471 = vpop.f32.mrf.mxu0
  %v2472 = vadd.f32 %v2383, %v2471
  %2473 = vmatmul.bf16.gmra.mxu0 %v2306
  %v2474 = vpop.f32.mrf.mxu0
  %v2475 = vadd.f32 %v2386, %v2474
  %v2476 = vpop.f32.mrf.mxu0
  %v2477 = vadd.f32 %v2388, %v2476
  %2478 = vmatmul.bf16.gmra.mxu0 %v2309
  %v2479 = vpop.f32.mrf.mxu0
  %v2480 = vadd.f32 %v2391, %v2479
  %v2481 = vpop.f32.mrf.mxu0
  %v2482 = vadd.f32 %v2393, %v2481
  %2483 = vmatmul.bf16.gmra.mxu0 %v2312
  %v2484 = vpop.f32.mrf.mxu0
  %v2485 = vadd.f32 %v2396, %v2484
  %v2486 = vpop.f32.mrf.mxu0
  %v2487 = vadd.f32 %v2398, %v2486
  %2488 = vmatmul.bf16.gmra.mxu0 %v2315
  %v2489 = vpop.f32.mrf.mxu0
  %v2490 = vadd.f32 %v2401, %v2489
  %v2491 = vpop.f32.mrf.mxu0
  %v2492 = vadd.f32 %v2403, %v2491
  %2493 = vmatmul.bf16.gmra.mxu0 %v2318
  %v2494 = vpop.f32.mrf.mxu0
  %v2495 = vadd.f32 %v2406, %v2494
  %v2496 = vpop.f32.mrf.mxu0
  %v2497 = vadd.f32 %v2408, %v2496
  %2498 = vmatmul.bf16.gmra.mxu0 %v2321
  %v2499 = vpop.f32.mrf.mxu0
  %v2500 = vadd.f32 %v2411, %v2499
  %v2501 = vpop.f32.mrf.mxu0
  %v2502 = vadd.f32 %v2413, %v2501
  %2503 = vdwg.mxu0
  %v2536 = vrot.slane %v2425, 1
  %v2537 = vrot.slane %v2427, 1
  %v2538 = vsel %vm129, %v2536, %v2537
  %v2539 = vrot.slane %v2430, 1
  %v2540 = vsel %vm129, %v2537, %v2539
  %v2541 = vrot.slane %v2432, 1
  %v2542 = vsel %vm129, %v2539, %v2541
  %v2543 = vrot.slane %v2435, 1
  %v2544 = vsel %vm129, %v2541, %v2543
  %v2545 = vrot.slane %v2437, 1
  %v2546 = vsel %vm129, %v2543, %v2545
  %v2547 = vrot.slane %v2440, 1
  %v2548 = vsel %vm129, %v2545, %v2547
  %v2549 = vrot.slane %v2442, 1
  %v2550 = vsel %vm129, %v2547, %v2549
  %v2551 = vrot.slane %v2445, 1
  %v2552 = vsel %vm129, %v2549, %v2551
  %v2553 = vrot.slane %v2447, 1
  %v2554 = vsel %vm129, %v2551, %v2553
  %v2555 = vrot.slane %v2450, 1
  %v2556 = vsel %vm129, %v2553, %v2555
  %v2557 = vrot.slane %v2452, 1
  %v2558 = vsel %vm129, %v2555, %v2557
  %v2559 = vrot.slane %v2455, 1
  %v2560 = vsel %vm129, %v2557, %v2559
  %v2561 = vrot.slane %v2457, 1
  %v2562 = vsel %vm129, %v2559, %v2561
  %v2563 = vrot.slane %v2460, 1
  %v2564 = vsel %vm129, %v2561, %v2563
  %v2565 = vrot.slane %v2462, 1
  %v2566 = vsel %vm129, %v2563, %v2565
  %v2567 = vrot.slane %v2465, 1
  %v2568 = vsel %vm129, %v2565, %v2567
  %v2569 = vrot.slane %v2467, 1
  %v2570 = vsel %vm129, %v2567, %v2569
  %v2571 = vrot.slane %v2470, 1
  %v2572 = vsel %vm129, %v2569, %v2571
  %v2573 = vrot.slane %v2472, 1
  %v2574 = vsel %vm129, %v2571, %v2573
  %v2575 = vrot.slane %v2475, 1
  %v2576 = vsel %vm129, %v2573, %v2575
  %v2577 = vrot.slane %v2477, 1
  %v2578 = vsel %vm129, %v2575, %v2577
  %v2579 = vrot.slane %v2480, 1
  %v2580 = vsel %vm129, %v2577, %v2579
  %v2581 = vrot.slane %v2482, 1
  %v2582 = vsel %vm129, %v2579, %v2581
  %v2583 = vrot.slane %v2485, 1
  %v2584 = vsel %vm129, %v2581, %v2583
  %v2585 = vrot.slane %v2487, 1
  %v2586 = vsel %vm129, %v2583, %v2585
  %v2587 = vrot.slane %v2490, 1
  %v2588 = vsel %vm129, %v2585, %v2587
  %v2589 = vrot.slane %v2492, 1
  %v2590 = vsel %vm129, %v2587, %v2589
  %v2591 = vrot.slane %v2495, 1
  %v2592 = vsel %vm129, %v2589, %v2591
  %v2593 = vrot.slane %v2497, 1
  %v2594 = vsel %vm129, %v2591, %v2593
  %v2595 = vrot.slane %v2500, 1
  %v2596 = vsel %vm129, %v2593, %v2595
  %v2597 = vrot.slane %v2502, 1
  %v2598 = vsel %vm129, %v2595, %v2597
  %v2631 = vsel %vm129, %v2597, 0.0
  %v2632 = vadd.f32 %v2425, %v2538
  %v2633 = vadd.f32 %v2427, %v2540
  %v2634 = vadd.f32 %v2430, %v2542
  %v2635 = vadd.f32 %v2432, %v2544
  %v2636 = vadd.f32 %v2435, %v2546
  %v2637 = vadd.f32 %v2437, %v2548
  %v2638 = vadd.f32 %v2440, %v2550
  %v2639 = vadd.f32 %v2442, %v2552
  %v2640 = vadd.f32 %v2445, %v2554
  %v2641 = vadd.f32 %v2447, %v2556
  %v2642 = vadd.f32 %v2450, %v2558
  %v2643 = vadd.f32 %v2452, %v2560
  %v2644 = vadd.f32 %v2455, %v2562
  %v2645 = vadd.f32 %v2457, %v2564
  %v2646 = vadd.f32 %v2460, %v2566
  %v2647 = vadd.f32 %v2462, %v2568
  %v2648 = vadd.f32 %v2465, %v2570
  %v2649 = vadd.f32 %v2467, %v2572
  %v2650 = vadd.f32 %v2470, %v2574
  %v2651 = vadd.f32 %v2472, %v2576
  %v2652 = vadd.f32 %v2475, %v2578
  %v2653 = vadd.f32 %v2477, %v2580
  %v2654 = vadd.f32 %v2480, %v2582
  %v2655 = vadd.f32 %v2482, %v2584
  %v2656 = vadd.f32 %v2485, %v2586
  %v2657 = vadd.f32 %v2487, %v2588
  %v2658 = vadd.f32 %v2490, %v2590
  %v2659 = vadd.f32 %v2492, %v2592
  %v2660 = vadd.f32 %v2495, %v2594
  %v2661 = vadd.f32 %v2497, %v2596
  %v2662 = vadd.f32 %v2500, %v2598
  %v2663 = vadd.f32 %v2502, %v2631
  %v2664 = vtanh.pop %v2632
  %v2665 = vtanh.pop %v2633
  %v2666 = vtanh.pop %v2634
  %v2667 = vtanh.pop %v2635
  %v2668 = vtanh.pop %v2636
  %v2669 = vtanh.pop %v2637
  %v2670 = vtanh.pop %v2638
  %v2671 = vtanh.pop %v2639
  %v2672 = vtanh.pop %v2640
  %v2673 = vtanh.pop %v2641
  %v2674 = vtanh.pop %v2642
  %v2675 = vtanh.pop %v2643
  %v2676 = vtanh.pop %v2644
  %v2677 = vtanh.pop %v2645
  %v2678 = vtanh.pop %v2646
  %v2679 = vtanh.pop %v2647
  %v2680 = vtanh.pop %v2648
  %v2681 = vtanh.pop %v2649
  %v2682 = vtanh.pop %v2650
  %v2683 = vtanh.pop %v2651
  %v2684 = vtanh.pop %v2652
  %v2685 = vtanh.pop %v2653
  %v2686 = vtanh.pop %v2654
  %v2687 = vtanh.pop %v2655
  %v2688 = vtanh.pop %v2656
  %v2689 = vtanh.pop %v2657
  %v2690 = vtanh.pop %v2658
  %v2691 = vtanh.pop %v2659
  %v2692 = vtanh.pop %v2660
  %v2693 = vtanh.pop %v2661
  %v2694 = vtanh.pop %v2662
  %v2695 = vtanh.pop %v2663
  %v2696 = vpack.c.bf16 %v2665, %v2664
  %v2697 = vpack.c.bf16 %v2667, %v2666
  %v2698 = vpack.c.bf16 %v2669, %v2668
  %v2699 = vpack.c.bf16 %v2671, %v2670
  %v2700 = vpack.c.bf16 %v2673, %v2672
  %v2701 = vpack.c.bf16 %v2675, %v2674
  %v2702 = vpack.c.bf16 %v2677, %v2676
  %v2703 = vpack.c.bf16 %v2679, %v2678
  %v2704 = vpack.c.bf16 %v2681, %v2680
  %v2705 = vpack.c.bf16 %v2683, %v2682
  %v2706 = vpack.c.bf16 %v2685, %v2684
  %v2707 = vpack.c.bf16 %v2687, %v2686
  %v2708 = vpack.c.bf16 %v2689, %v2688
  %v2709 = vpack.c.bf16 %v2691, %v2690
  %v2710 = vpack.c.bf16 %v2693, %v2692
  %v2711 = vpack.c.bf16 %v2695, %v2694
  %v2712 = vld [vmem:[%s4] sm:$0xff]
  %v2713 = vld [vmem:[%s4 + $0x8] sm:$0xff]
  %v2714 = vld [vmem:[%s4 + $0x10] sm:$0xff]
  %v2715 = vld [vmem:[%s4 + $0x18] sm:$0xff]
  %v2716 = vld [vmem:[%s4 + $0x20] sm:$0xff]
  %v2717 = vld [vmem:[%s4 + $0x28] sm:$0xff]
  %v2718 = vld [vmem:[%s4 + $0x30] sm:$0xff]
  %v2719 = vld [vmem:[%s4 + $0x38] sm:$0xff]
  %v2720 = vld [vmem:[%s4 + $0x40] sm:$0xff]
  %v2721 = vld [vmem:[%s4 + $0x48] sm:$0xff]
  %v2722 = vld [vmem:[%s4 + $0x50] sm:$0x33]
  %v2755 = vrot.slane %v2664, 2
  %v2756 = vrot.slane %v2665, 2
  %v2757 = vsel %vm740, %v2755, %v2756
  %v2758 = vrot.slane %v2666, 2
  %v2759 = vsel %vm740, %v2756, %v2758
  %v2760 = vrot.slane %v2667, 2
  %v2761 = vsel %vm740, %v2758, %v2760
  %v2762 = vrot.slane %v2668, 2
  %v2763 = vsel %vm740, %v2760, %v2762
  %v2764 = vrot.slane %v2669, 2
  %v2765 = vsel %vm740, %v2762, %v2764
  %v2766 = vrot.slane %v2670, 2
  %v2767 = vsel %vm740, %v2764, %v2766
  %v2768 = vrot.slane %v2671, 2
  %v2769 = vsel %vm740, %v2766, %v2768
  %v2770 = vrot.slane %v2672, 2
  %v2771 = vsel %vm740, %v2768, %v2770
  %v2772 = vrot.slane %v2673, 2
  %v2773 = vsel %vm740, %v2770, %v2772
  %v2774 = vrot.slane %v2674, 2
  %v2775 = vsel %vm740, %v2772, %v2774
  %v2776 = vrot.slane %v2675, 2
  %v2777 = vsel %vm740, %v2774, %v2776
  %v2778 = vrot.slane %v2676, 2
  %v2779 = vsel %vm740, %v2776, %v2778
  %v2780 = vrot.slane %v2677, 2
  %v2781 = vsel %vm740, %v2778, %v2780
  %v2782 = vrot.slane %v2678, 2
  %v2783 = vsel %vm740, %v2780, %v2782
  %v2784 = vrot.slane %v2679, 2
  %v2785 = vsel %vm740, %v2782, %v2784
  %v2786 = vrot.slane %v2680, 2
  %v2787 = vsel %vm740, %v2784, %v2786
  %v2788 = vrot.slane %v2681, 2
  %v2789 = vsel %vm740, %v2786, %v2788
  %v2790 = vrot.slane %v2682, 2
  %v2791 = vsel %vm740, %v2788, %v2790
  %v2792 = vrot.slane %v2683, 2
  %v2793 = vsel %vm740, %v2790, %v2792
  %v2794 = vrot.slane %v2684, 2
  %v2795 = vsel %vm740, %v2792, %v2794
  %v2796 = vrot.slane %v2685, 2
  %v2797 = vsel %vm740, %v2794, %v2796
  %v2798 = vrot.slane %v2686, 2
  %v2799 = vsel %vm740, %v2796, %v2798
  %v2800 = vrot.slane %v2687, 2
  %v2801 = vsel %vm740, %v2798, %v2800
  %v2802 = vrot.slane %v2688, 2
  %v2803 = vsel %vm740, %v2800, %v2802
  %v2804 = vrot.slane %v2689, 2
  %v2805 = vsel %vm740, %v2802, %v2804
  %v2806 = vrot.slane %v2690, 2
  %v2807 = vsel %vm740, %v2804, %v2806
  %v2808 = vrot.slane %v2691, 2
  %v2809 = vsel %vm740, %v2806, %v2808
  %v2810 = vrot.slane %v2692, 2
  %v2811 = vsel %vm740, %v2808, %v2810
  %v2812 = vrot.slane %v2693, 2
  %v2813 = vsel %vm740, %v2810, %v2812
  %v2814 = vrot.slane %v2694, 2
  %v2815 = vsel %vm740, %v2812, %v2814
  %v2816 = vrot.slane %v2695, 2
  %v2817 = vsel %vm740, %v2814, %v2816
  %v2850 = vsel %vm740, %v2816, 0.0
  %v2851 = vpack.c.bf16 %v2759, %v2757
  %v2852 = vpack.c.bf16 %v2763, %v2761
  %v2853 = vpack.c.bf16 %v2767, %v2765
  %v2854 = vpack.c.bf16 %v2771, %v2769
  %v2855 = vpack.c.bf16 %v2775, %v2773
  %v2856 = vpack.c.bf16 %v2779, %v2777
  %v2857 = vpack.c.bf16 %v2783, %v2781
  %v2858 = vpack.c.bf16 %v2787, %v2785
  %v2859 = vpack.c.bf16 %v2791, %v2789
  %v2860 = vpack.c.bf16 %v2795, %v2793
  %v2861 = vpack.c.bf16 %v2799, %v2797
  %v2862 = vpack.c.bf16 %v2803, %v2801
  %v2863 = vpack.c.bf16 %v2807, %v2805
  %v2864 = vpack.c.bf16 %v2811, %v2809
  %v2865 = vpack.c.bf16 %v2815, %v2813
  %v2866 = vpack.c.bf16 %v2850, %v2817
  %s2867 = scalar_lea.vmem %s4, 88
  %v2868 = vld [vmem:[%s2867] sm:$0xff]
  %v2869 = vld [vmem:[%s2867 + $0x8] sm:$0xff]
  %v2870 = vld [vmem:[%s2867 + $0x10] sm:$0xff]
  %v2871 = vld [vmem:[%s2867 + $0x18] sm:$0xff]
  %v2872 = vld [vmem:[%s2867 + $0x20] sm:$0xff]
  %v2873 = vld [vmem:[%s2867 + $0x28] sm:$0xff]
  %v2874 = vld [vmem:[%s2867 + $0x30] sm:$0xff]
  %v2875 = vld [vmem:[%s2867 + $0x38] sm:$0xff]
  %v2876 = vld [vmem:[%s2867 + $0x40] sm:$0xff]
  %v2877 = vld [vmem:[%s2867 + $0x48] sm:$0xff]
  %v2878 = vld [vmem:[%s2867 + $0x50] sm:$0x33]
  %v2890 = vunpack.c.l.b16 %v2868
  %v2891 = vunpack.c.h.b16 %v2868
  %v2892 = vunpack.c.l.b16 %v2869
  %v2893 = vunpack.c.h.b16 %v2869
  %v2894 = vunpack.c.l.b16 %v2870
  %v2895 = vunpack.c.h.b16 %v2870
  %v2896 = vunpack.c.l.b16 %v2871
  %v2897 = vunpack.c.h.b16 %v2871
  %v2898 = vunpack.c.l.b16 %v2872
  %v2899 = vunpack.c.h.b16 %v2872
  %v2900 = vunpack.c.l.b16 %v2873
  %v2901 = vunpack.c.h.b16 %v2873
  %v2902 = vunpack.c.l.b16 %v2874
  %v2903 = vunpack.c.h.b16 %v2874
  %v2904 = vunpack.c.l.b16 %v2875
  %v2905 = vunpack.c.h.b16 %v2875
  %v2906 = vunpack.c.l.b16 %v2876
  %v2907 = vunpack.c.h.b16 %v2876
  %v2908 = vunpack.c.l.b16 %v2877
  %v2909 = vunpack.c.h.b16 %v2877
  %v2910 = vunpack.c.l.b16 %v2878
  %v2911 = vunpack.c.h.b16 %v2878
  %v2912 = vpack.c.b16 %v2892, %v2890
  %v2913 = vpack.c.b16 %v2893, %v2891
  %v2914 = vpack.c.b16 %v2896, %v2894
  %v2915 = vpack.c.b16 %v2897, %v2895
  %v2916 = vpack.c.b16 %v2900, %v2898
  %v2917 = vpack.c.b16 %v2901, %v2899
  %v2918 = vpack.c.b16 %v2904, %v2902
  %v2919 = vpack.c.b16 %v2905, %v2903
  %v2920 = vpack.c.b16 %v2908, %v2906
  %v2921 = vpack.c.b16 %v2909, %v2907
  %v2922 = vpack.c.b16 %v2910, %v2910
  %v2923 = vpack.c.b16 %v2911, %v2911
  %vm2934 = vcmask 687104
  %v2936 = vsel %vm2934, %v2851, 0
  %v2939 = vsel %vm2934, %v2852, 0
  %v2942 = vsel %vm2934, %v2853, 0
  %v2945 = vsel %vm2934, %v2854, 0
  %v2948 = vsel %vm2934, %v2855, 0
  %v2951 = vsel %vm2934, %v2856, 0
  %v2954 = vsel %vm2934, %v2857, 0
  %v2957 = vsel %vm2934, %v2858, 0
  %v2960 = vsel %vm2934, %v2859, 0
  %v2963 = vsel %vm2934, %v2860, 0
  %v2966 = vsel %vm2934, %v2861, 0
  %v2969 = vsel %vm2934, %v2862, 0
  %v2972 = vsel %vm2934, %v2863, 0
  %v2975 = vsel %vm2934, %v2864, 0
  %v2978 = vsel %vm2934, %v2865, 0
  %v2981 = vsel %vm2934, %v2866, 0
  %vm2983 = vcmask 1041408
  %v2985 = vsel %vm2983, %v2922, 0
  %v2988 = vsel %vm2983, %v2923, 0
  %2990 = vmatpush.bf16.msra.mxu0 0
  %2991 = vmatpush.bf16.msra.mxu0 0
  %2992 = vmatpush.bf16.msra.mxu0 %v2985
  %2993 = vmatpush.bf16.msra.mxu0 %v2920
  %2994 = vmatpush.bf16.msra.mxu0 %v2918
  %2995 = vmatpush.bf16.msra.mxu0 %v2916
  %2996 = vmatpush.bf16.msra.mxu0 %v2914
  %2997 = vmatpush.bf16.msra.mxu0 %v2912
  %2998 = vmatmul.bf16.gmra.mxu0 %v2936
  %v2999 = vpop.f32.mrf.mxu0
  %v3000 = vadd.f32 0.0, %v2999
  %v3001 = vpop.f32.mrf.mxu0
  %v3002 = vadd.f32 0.0, %v3001
  %3003 = vmatmul.bf16.gmra.mxu0 %v2939
  %v3004 = vpop.f32.mrf.mxu0
  %v3005 = vadd.f32 0.0, %v3004
  %v3006 = vpop.f32.mrf.mxu0
  %v3007 = vadd.f32 0.0, %v3006
  %3008 = vmatmul.bf16.gmra.mxu0 %v2942
  %v3009 = vpop.f32.mrf.mxu0
  %v3010 = vadd.f32 0.0, %v3009
  %v3011 = vpop.f32.mrf.mxu0
  %v3012 = vadd.f32 0.0, %v3011
  %3013 = vmatmul.bf16.gmra.mxu0 %v2945
  %v3014 = vpop.f32.mrf.mxu0
  %v3015 = vadd.f32 0.0, %v3014
  %v3016 = vpop.f32.mrf.mxu0
  %v3017 = vadd.f32 0.0, %v3016
  %3018 = vmatmul.bf16.gmra.mxu0 %v2948
  %v3019 = vpop.f32.mrf.mxu0
  %v3020 = vadd.f32 0.0, %v3019
  %v3021 = vpop.f32.mrf.mxu0
  %v3022 = vadd.f32 0.0, %v3021
  %3023 = vmatmul.bf16.gmra.mxu0 %v2951
  %v3024 = vpop.f32.mrf.mxu0
  %v3025 = vadd.f32 0.0, %v3024
  %v3026 = vpop.f32.mrf.mxu0
  %v3027 = vadd.f32 0.0, %v3026
  %3028 = vmatmul.bf16.gmra.mxu0 %v2954
  %v3029 = vpop.f32.mrf.mxu0
  %v3030 = vadd.f32 0.0, %v3029
  %v3031 = vpop.f32.mrf.mxu0
  %v3032 = vadd.f32 0.0, %v3031
  %3033 = vmatmul.bf16.gmra.mxu0 %v2957
  %v3034 = vpop.f32.mrf.mxu0
  %v3035 = vadd.f32 0.0, %v3034
  %v3036 = vpop.f32.mrf.mxu0
  %v3037 = vadd.f32 0.0, %v3036
  %3038 = vmatmul.bf16.gmra.mxu0 %v2960
  %v3039 = vpop.f32.mrf.mxu0
  %v3040 = vadd.f32 0.0, %v3039
  %v3041 = vpop.f32.mrf.mxu0
  %v3042 = vadd.f32 0.0, %v3041
  %3043 = vmatmul.bf16.gmra.mxu0 %v2963
  %v3044 = vpop.f32.mrf.mxu0
  %v3045 = vadd.f32 0.0, %v3044
  %v3046 = vpop.f32.mrf.mxu0
  %v3047 = vadd.f32 0.0, %v3046
  %3048 = vmatmul.bf16.gmra.mxu0 %v2966
  %v3049 = vpop.f32.mrf.mxu0
  %v3050 = vadd.f32 0.0, %v3049
  %v3051 = vpop.f32.mrf.mxu0
  %v3052 = vadd.f32 0.0, %v3051
  %3053 = vmatmul.bf16.gmra.mxu0 %v2969
  %v3054 = vpop.f32.mrf.mxu0
  %v3055 = vadd.f32 0.0, %v3054
  %v3056 = vpop.f32.mrf.mxu0
  %v3057 = vadd.f32 0.0, %v3056
  %3058 = vmatmul.bf16.gmra.mxu0 %v2972
  %v3059 = vpop.f32.mrf.mxu0
  %v3060 = vadd.f32 0.0, %v3059
  %v3061 = vpop.f32.mrf.mxu0
  %v3062 = vadd.f32 0.0, %v3061
  %3063 = vmatmul.bf16.gmra.mxu0 %v2975
  %v3064 = vpop.f32.mrf.mxu0
  %v3065 = vadd.f32 0.0, %v3064
  %v3066 = vpop.f32.mrf.mxu0
  %v3067 = vadd.f32 0.0, %v3066
  %3068 = vmatmul.bf16.gmra.mxu0 %v2978
  %v3069 = vpop.f32.mrf.mxu0
  %v3070 = vadd.f32 0.0, %v3069
  %v3071 = vpop.f32.mrf.mxu0
  %v3072 = vadd.f32 0.0, %v3071
  %3073 = vmatmul.bf16.gmra.mxu0 %v2981
  %v3074 = vpop.f32.mrf.mxu0
  %v3075 = vadd.f32 0.0, %v3074
  %v3076 = vpop.f32.mrf.mxu0
  %v3077 = vadd.f32 0.0, %v3076
  %3078 = vdwg.mxu0
  %3079 = vmatpush.bf16.msra.mxu0 0
  %3080 = vmatpush.bf16.msra.mxu0 0
  %3081 = vmatpush.bf16.msra.mxu0 %v2988
  %3082 = vmatpush.bf16.msra.mxu0 %v2921
  %3083 = vmatpush.bf16.msra.mxu0 %v2919
  %3084 = vmatpush.bf16.msra.mxu0 %v2917
  %3085 = vmatpush.bf16.msra.mxu0 %v2915
  %3086 = vmatpush.bf16.msra.mxu0 %v2913
  %3087 = vmatmul.bf16.gmra.mxu0 %v2936
  %v3088 = vpop.f32.mrf.mxu0
  %v3089 = vadd.f32 0.0, %v3088
  %v3090 = vpop.f32.mrf.mxu0
  %v3091 = vadd.f32 0.0, %v3090
  %3092 = vmatmul.bf16.gmra.mxu0 %v2939
  %v3093 = vpop.f32.mrf.mxu0
  %v3094 = vadd.f32 0.0, %v3093
  %v3095 = vpop.f32.mrf.mxu0
  %v3096 = vadd.f32 0.0, %v3095
  %3097 = vmatmul.bf16.gmra.mxu0 %v2942
  %v3098 = vpop.f32.mrf.mxu0
  %v3099 = vadd.f32 0.0, %v3098
  %v3100 = vpop.f32.mrf.mxu0
  %v3101 = vadd.f32 0.0, %v3100
  %3102 = vmatmul.bf16.gmra.mxu0 %v2945
  %v3103 = vpop.f32.mrf.mxu0
  %v3104 = vadd.f32 0.0, %v3103
  %v3105 = vpop.f32.mrf.mxu0
  %v3106 = vadd.f32 0.0, %v3105
  %3107 = vmatmul.bf16.gmra.mxu0 %v2948
  %v3108 = vpop.f32.mrf.mxu0
  %v3109 = vadd.f32 0.0, %v3108
  %v3110 = vpop.f32.mrf.mxu0
  %v3111 = vadd.f32 0.0, %v3110
  %3112 = vmatmul.bf16.gmra.mxu0 %v2951
  %v3113 = vpop.f32.mrf.mxu0
  %v3114 = vadd.f32 0.0, %v3113
  %v3115 = vpop.f32.mrf.mxu0
  %v3116 = vadd.f32 0.0, %v3115
  %3117 = vmatmul.bf16.gmra.mxu0 %v2954
  %v3118 = vpop.f32.mrf.mxu0
  %v3119 = vadd.f32 0.0, %v3118
  %v3120 = vpop.f32.mrf.mxu0
  %v3121 = vadd.f32 0.0, %v3120
  %3122 = vmatmul.bf16.gmra.mxu0 %v2957
  %v3123 = vpop.f32.mrf.mxu0
  %v3124 = vadd.f32 0.0, %v3123
  %v3125 = vpop.f32.mrf.mxu0
  %v3126 = vadd.f32 0.0, %v3125
  %3127 = vmatmul.bf16.gmra.mxu0 %v2960
  %v3128 = vpop.f32.mrf.mxu0
  %v3129 = vadd.f32 0.0, %v3128
  %v3130 = vpop.f32.mrf.mxu0
  %v3131 = vadd.f32 0.0, %v3130
  %3132 = vmatmul.bf16.gmra.mxu0 %v2963
  %v3133 = vpop.f32.mrf.mxu0
  %v3134 = vadd.f32 0.0, %v3133
  %v3135 = vpop.f32.mrf.mxu0
  %v3136 = vadd.f32 0.0, %v3135
  %3137 = vmatmul.bf16.gmra.mxu0 %v2966
  %v3138 = vpop.f32.mrf.mxu0
  %v3139 = vadd.f32 0.0, %v3138
  %v3140 = vpop.f32.mrf.mxu0
  %v3141 = vadd.f32 0.0, %v3140
  %3142 = vmatmul.bf16.gmra.mxu0 %v2969
  %v3143 = vpop.f32.mrf.mxu0
  %v3144 = vadd.f32 0.0, %v3143
  %v3145 = vpop.f32.mrf.mxu0
  %v3146 = vadd.f32 0.0, %v3145
  %3147 = vmatmul.bf16.gmra.mxu0 %v2972
  %v3148 = vpop.f32.mrf.mxu0
  %v3149 = vadd.f32 0.0, %v3148
  %v3150 = vpop.f32.mrf.mxu0
  %v3151 = vadd.f32 0.0, %v3150
  %3152 = vmatmul.bf16.gmra.mxu0 %v2975
  %v3153 = vpop.f32.mrf.mxu0
  %v3154 = vadd.f32 0.0, %v3153
  %v3155 = vpop.f32.mrf.mxu0
  %v3156 = vadd.f32 0.0, %v3155
  %3157 = vmatmul.bf16.gmra.mxu0 %v2978
  %v3158 = vpop.f32.mrf.mxu0
  %v3159 = vadd.f32 0.0, %v3158
  %v3160 = vpop.f32.mrf.mxu0
  %v3161 = vadd.f32 0.0, %v3160
  %3162 = vmatmul.bf16.gmra.mxu0 %v2981
  %v3163 = vpop.f32.mrf.mxu0
  %v3164 = vadd.f32 0.0, %v3163
  %v3165 = vpop.f32.mrf.mxu0
  %v3166 = vadd.f32 0.0, %v3165
  %3167 = vdwg.mxu0
  %v3179 = vunpack.c.l.b16 %v2712
  %v3180 = vunpack.c.h.b16 %v2712
  %v3181 = vunpack.c.l.b16 %v2713
  %v3182 = vunpack.c.h.b16 %v2713
  %v3183 = vunpack.c.l.b16 %v2714
  %v3184 = vunpack.c.h.b16 %v2714
  %v3185 = vunpack.c.l.b16 %v2715
  %v3186 = vunpack.c.h.b16 %v2715
  %v3187 = vunpack.c.l.b16 %v2716
  %v3188 = vunpack.c.h.b16 %v2716
  %v3189 = vunpack.c.l.b16 %v2717
  %v3190 = vunpack.c.h.b16 %v2717
  %v3191 = vunpack.c.l.b16 %v2718
  %v3192 = vunpack.c.h.b16 %v2718
  %v3193 = vunpack.c.l.b16 %v2719
  %v3194 = vunpack.c.h.b16 %v2719
  %v3195 = vunpack.c.l.b16 %v2720
  %v3196 = vunpack.c.h.b16 %v2720
  %v3197 = vunpack.c.l.b16 %v2721
  %v3198 = vunpack.c.h.b16 %v2721
  %v3199 = vunpack.c.l.b16 %v2722
  %v3200 = vunpack.c.h.b16 %v2722
  %v3201 = vpack.c.b16 %v3181, %v3179
  %v3202 = vpack.c.b16 %v3182, %v3180
  %v3203 = vpack.c.b16 %v3185, %v3183
  %v3204 = vpack.c.b16 %v3186, %v3184
  %v3205 = vpack.c.b16 %v3189, %v3187
  %v3206 = vpack.c.b16 %v3190, %v3188
  %v3207 = vpack.c.b16 %v3193, %v3191
  %v3208 = vpack.c.b16 %v3194, %v3192
  %v3209 = vpack.c.b16 %v3197, %v3195
  %v3210 = vpack.c.b16 %v3198, %v3196
  %v3211 = vpack.c.b16 %v3199, %v3199
  %v3212 = vpack.c.b16 %v3200, %v3200
  %v3224 = vsel %vm2934, %v2696, 0
  %v3227 = vsel %vm2934, %v2697, 0
  %v3230 = vsel %vm2934, %v2698, 0
  %v3233 = vsel %vm2934, %v2699, 0
  %v3236 = vsel %vm2934, %v2700, 0
  %v3239 = vsel %vm2934, %v2701, 0
  %v3242 = vsel %vm2934, %v2702, 0
  %v3245 = vsel %vm2934, %v2703, 0
  %v3248 = vsel %vm2934, %v2704, 0
  %v3251 = vsel %vm2934, %v2705, 0
  %v3254 = vsel %vm2934, %v2706, 0
  %v3257 = vsel %vm2934, %v2707, 0
  %v3260 = vsel %vm2934, %v2708, 0
  %v3263 = vsel %vm2934, %v2709, 0
  %v3266 = vsel %vm2934, %v2710, 0
  %v3269 = vsel %vm2934, %v2711, 0
  %v3272 = vsel %vm2983, %v3211, 0
  %v3275 = vsel %vm2983, %v3212, 0
  %3277 = vmatpush.bf16.msra.mxu0 0
  %3278 = vmatpush.bf16.msra.mxu0 0
  %3279 = vmatpush.bf16.msra.mxu0 %v3272
  %3280 = vmatpush.bf16.msra.mxu0 %v3209
  %3281 = vmatpush.bf16.msra.mxu0 %v3207
  %3282 = vmatpush.bf16.msra.mxu0 %v3205
  %3283 = vmatpush.bf16.msra.mxu0 %v3203
  %3284 = vmatpush.bf16.msra.mxu0 %v3201
  %3285 = vmatmul.bf16.gmra.mxu0 %v3224
  %v3286 = vpop.f32.mrf.mxu0
  %v3287 = vadd.f32 %v3000, %v3286
  %v3288 = vpop.f32.mrf.mxu0
  %v3289 = vadd.f32 %v3002, %v3288
  %3290 = vmatmul.bf16.gmra.mxu0 %v3227
  %v3291 = vpop.f32.mrf.mxu0
  %v3292 = vadd.f32 %v3005, %v3291
  %v3293 = vpop.f32.mrf.mxu0
  %v3294 = vadd.f32 %v3007, %v3293
  %3295 = vmatmul.bf16.gmra.mxu0 %v3230
  %v3296 = vpop.f32.mrf.mxu0
  %v3297 = vadd.f32 %v3010, %v3296
  %v3298 = vpop.f32.mrf.mxu0
  %v3299 = vadd.f32 %v3012, %v3298
  %3300 = vmatmul.bf16.gmra.mxu0 %v3233
  %v3301 = vpop.f32.mrf.mxu0
  %v3302 = vadd.f32 %v3015, %v3301
  %v3303 = vpop.f32.mrf.mxu0
  %v3304 = vadd.f32 %v3017, %v3303
  %3305 = vmatmul.bf16.gmra.mxu0 %v3236
  %v3306 = vpop.f32.mrf.mxu0
  %v3307 = vadd.f32 %v3020, %v3306
  %v3308 = vpop.f32.mrf.mxu0
  %v3309 = vadd.f32 %v3022, %v3308
  %3310 = vmatmul.bf16.gmra.mxu0 %v3239
  %v3311 = vpop.f32.mrf.mxu0
  %v3312 = vadd.f32 %v3025, %v3311
  %v3313 = vpop.f32.mrf.mxu0
  %v3314 = vadd.f32 %v3027, %v3313
  %3315 = vmatmul.bf16.gmra.mxu0 %v3242
  %v3316 = vpop.f32.mrf.mxu0
  %v3317 = vadd.f32 %v3030, %v3316
  %v3318 = vpop.f32.mrf.mxu0
  %v3319 = vadd.f32 %v3032, %v3318
  %3320 = vmatmul.bf16.gmra.mxu0 %v3245
  %v3321 = vpop.f32.mrf.mxu0
  %v3322 = vadd.f32 %v3035, %v3321
  %v3323 = vpop.f32.mrf.mxu0
  %v3324 = vadd.f32 %v3037, %v3323
  %3325 = vmatmul.bf16.gmra.mxu0 %v3248
  %v3326 = vpop.f32.mrf.mxu0
  %v3327 = vadd.f32 %v3040, %v3326
  %v3328 = vpop.f32.mrf.mxu0
  %v3329 = vadd.f32 %v3042, %v3328
  %3330 = vmatmul.bf16.gmra.mxu0 %v3251
  %v3331 = vpop.f32.mrf.mxu0
  %v3332 = vadd.f32 %v3045, %v3331
  %v3333 = vpop.f32.mrf.mxu0
  %v3334 = vadd.f32 %v3047, %v3333
  %3335 = vmatmul.bf16.gmra.mxu0 %v3254
  %v3336 = vpop.f32.mrf.mxu0
  %v3337 = vadd.f32 %v3050, %v3336
  %v3338 = vpop.f32.mrf.mxu0
  %v3339 = vadd.f32 %v3052, %v3338
  %3340 = vmatmul.bf16.gmra.mxu0 %v3257
  %v3341 = vpop.f32.mrf.mxu0
  %v3342 = vadd.f32 %v3055, %v3341
  %v3343 = vpop.f32.mrf.mxu0
  %v3344 = vadd.f32 %v3057, %v3343
  %3345 = vmatmul.bf16.gmra.mxu0 %v3260
  %v3346 = vpop.f32.mrf.mxu0
  %v3347 = vadd.f32 %v3060, %v3346
  %v3348 = vpop.f32.mrf.mxu0
  %v3349 = vadd.f32 %v3062, %v3348
  %3350 = vmatmul.bf16.gmra.mxu0 %v3263
  %v3351 = vpop.f32.mrf.mxu0
  %v3352 = vadd.f32 %v3065, %v3351
  %v3353 = vpop.f32.mrf.mxu0
  %v3354 = vadd.f32 %v3067, %v3353
  %3355 = vmatmul.bf16.gmra.mxu0 %v3266
  %v3356 = vpop.f32.mrf.mxu0
  %v3357 = vadd.f32 %v3070, %v3356
  %v3358 = vpop.f32.mrf.mxu0
  %v3359 = vadd.f32 %v3072, %v3358
  %3360 = vmatmul.bf16.gmra.mxu0 %v3269
  %v3361 = vpop.f32.mrf.mxu0
  %v3362 = vadd.f32 %v3075, %v3361
  %v3363 = vpop.f32.mrf.mxu0
  %v3364 = vadd.f32 %v3077, %v3363
  %3365 = vdwg.mxu0
  %3366 = vmatpush.bf16.msra.mxu0 0
  %3367 = vmatpush.bf16.msra.mxu0 0
  %3368 = vmatpush.bf16.msra.mxu0 %v3275
  %3369 = vmatpush.bf16.msra.mxu0 %v3210
  %3370 = vmatpush.bf16.msra.mxu0 %v3208
  %3371 = vmatpush.bf16.msra.mxu0 %v3206
  %3372 = vmatpush.bf16.msra.mxu0 %v3204
  %3373 = vmatpush.bf16.msra.mxu0 %v3202
  %3374 = vmatmul.bf16.gmra.mxu0 %v3224
  %v3375 = vpop.f32.mrf.mxu0
  %v3376 = vadd.f32 %v3089, %v3375
  %v3377 = vpop.f32.mrf.mxu0
  %v3378 = vadd.f32 %v3091, %v3377
  %3379 = vmatmul.bf16.gmra.mxu0 %v3227
  %v3380 = vpop.f32.mrf.mxu0
  %v3381 = vadd.f32 %v3094, %v3380
  %v3382 = vpop.f32.mrf.mxu0
  %v3383 = vadd.f32 %v3096, %v3382
  %3384 = vmatmul.bf16.gmra.mxu0 %v3230
  %v3385 = vpop.f32.mrf.mxu0
  %v3386 = vadd.f32 %v3099, %v3385
  %v3387 = vpop.f32.mrf.mxu0
  %v3388 = vadd.f32 %v3101, %v3387
  %3389 = vmatmul.bf16.gmra.mxu0 %v3233
  %v3390 = vpop.f32.mrf.mxu0
  %v3391 = vadd.f32 %v3104, %v3390
  %v3392 = vpop.f32.mrf.mxu0
  %v3393 = vadd.f32 %v3106, %v3392
  %3394 = vmatmul.bf16.gmra.mxu0 %v3236
  %v3395 = vpop.f32.mrf.mxu0
  %v3396 = vadd.f32 %v3109, %v3395
  %v3397 = vpop.f32.mrf.mxu0
  %v3398 = vadd.f32 %v3111, %v3397
  %3399 = vmatmul.bf16.gmra.mxu0 %v3239
  %v3400 = vpop.f32.mrf.mxu0
  %v3401 = vadd.f32 %v3114, %v3400
  %v3402 = vpop.f32.mrf.mxu0
  %v3403 = vadd.f32 %v3116, %v3402
  %3404 = vmatmul.bf16.gmra.mxu0 %v3242
  %v3405 = vpop.f32.mrf.mxu0
  %v3406 = vadd.f32 %v3119, %v3405
  %v3407 = vpop.f32.mrf.mxu0
  %v3408 = vadd.f32 %v3121, %v3407
  %3409 = vmatmul.bf16.gmra.mxu0 %v3245
  %v3410 = vpop.f32.mrf.mxu0
  %v3411 = vadd.f32 %v3124, %v3410
  %v3412 = vpop.f32.mrf.mxu0
  %v3413 = vadd.f32 %v3126, %v3412
  %3414 = vmatmul.bf16.gmra.mxu0 %v3248
  %v3415 = vpop.f32.mrf.mxu0
  %v3416 = vadd.f32 %v3129, %v3415
  %v3417 = vpop.f32.mrf.mxu0
  %v3418 = vadd.f32 %v3131, %v3417
  %3419 = vmatmul.bf16.gmra.mxu0 %v3251
  %v3420 = vpop.f32.mrf.mxu0
  %v3421 = vadd.f32 %v3134, %v3420
  %v3422 = vpop.f32.mrf.mxu0
  %v3423 = vadd.f32 %v3136, %v3422
  %3424 = vmatmul.bf16.gmra.mxu0 %v3254
  %v3425 = vpop.f32.mrf.mxu0
  %v3426 = vadd.f32 %v3139, %v3425
  %v3427 = vpop.f32.mrf.mxu0
  %v3428 = vadd.f32 %v3141, %v3427
  %3429 = vmatmul.bf16.gmra.mxu0 %v3257
  %v3430 = vpop.f32.mrf.mxu0
  %v3431 = vadd.f32 %v3144, %v3430
  %v3432 = vpop.f32.mrf.mxu0
  %v3433 = vadd.f32 %v3146, %v3432
  %3434 = vmatmul.bf16.gmra.mxu0 %v3260
  %v3435 = vpop.f32.mrf.mxu0
  %v3436 = vadd.f32 %v3149, %v3435
  %v3437 = vpop.f32.mrf.mxu0
  %v3438 = vadd.f32 %v3151, %v3437
  %3439 = vmatmul.bf16.gmra.mxu0 %v3263
  %v3440 = vpop.f32.mrf.mxu0
  %v3441 = vadd.f32 %v3154, %v3440
  %v3442 = vpop.f32.mrf.mxu0
  %v3443 = vadd.f32 %v3156, %v3442
  %3444 = vmatmul.bf16.gmra.mxu0 %v3266
  %v3445 = vpop.f32.mrf.mxu0
  %v3446 = vadd.f32 %v3159, %v3445
  %v3447 = vpop.f32.mrf.mxu0
  %v3448 = vadd.f32 %v3161, %v3447
  %3449 = vmatmul.bf16.gmra.mxu0 %v3269
  %v3450 = vpop.f32.mrf.mxu0
  %v3451 = vadd.f32 %v3164, %v3450
  %v3452 = vpop.f32.mrf.mxu0
  %v3453 = vadd.f32 %v3166, %v3452
  %3454 = vdwg.mxu0
  %v3455 = vrot.slane %v2664, 4
  %v3456 = vrot.slane %v2665, 4
  %v3457 = vsel %vm1596, %v3455, %v3456
  %v3458 = vrot.slane %v2666, 4
  %v3459 = vsel %vm1596, %v3456, %v3458
  %v3460 = vrot.slane %v2667, 4
  %v3461 = vsel %vm1596, %v3458, %v3460
  %v3462 = vrot.slane %v2668, 4
  %v3463 = vsel %vm1596, %v3460, %v3462
  %v3464 = vrot.slane %v2669, 4
  %v3465 = vsel %vm1596, %v3462, %v3464
  %v3466 = vrot.slane %v2670, 4
  %v3467 = vsel %vm1596, %v3464, %v3466
  %v3468 = vrot.slane %v2671, 4
  %v3469 = vsel %vm1596, %v3466, %v3468
  %v3470 = vrot.slane %v2672, 4
  %v3471 = vsel %vm1596, %v3468, %v3470
  %v3472 = vrot.slane %v2673, 4
  %v3473 = vsel %vm1596, %v3470, %v3472
  %v3474 = vrot.slane %v2674, 4
  %v3475 = vsel %vm1596, %v3472, %v3474
  %v3476 = vrot.slane %v2675, 4
  %v3477 = vsel %vm1596, %v3474, %v3476
  %v3478 = vrot.slane %v2676, 4
  %v3479 = vsel %vm1596, %v3476, %v3478
  %v3480 = vrot.slane %v2677, 4
  %v3481 = vsel %vm1596, %v3478, %v3480
  %v3482 = vrot.slane %v2678, 4
  %v3483 = vsel %vm1596, %v3480, %v3482
  %v3484 = vrot.slane %v2679, 4
  %v3485 = vsel %vm1596, %v3482, %v3484
  %v3486 = vrot.slane %v2680, 4
  %v3487 = vsel %vm1596, %v3484, %v3486
  %v3488 = vrot.slane %v2681, 4
  %v3489 = vsel %vm1596, %v3486, %v3488
  %v3490 = vrot.slane %v2682, 4
  %v3491 = vsel %vm1596, %v3488, %v3490
  %v3492 = vrot.slane %v2683, 4
  %v3493 = vsel %vm1596, %v3490, %v3492
  %v3494 = vrot.slane %v2684, 4
  %v3495 = vsel %vm1596, %v3492, %v3494
  %v3496 = vrot.slane %v2685, 4
  %v3497 = vsel %vm1596, %v3494, %v3496
  %v3498 = vrot.slane %v2686, 4
  %v3499 = vsel %vm1596, %v3496, %v3498
  %v3500 = vrot.slane %v2687, 4
  %v3501 = vsel %vm1596, %v3498, %v3500
  %v3502 = vrot.slane %v2688, 4
  %v3503 = vsel %vm1596, %v3500, %v3502
  %v3504 = vrot.slane %v2689, 4
  %v3505 = vsel %vm1596, %v3502, %v3504
  %v3506 = vrot.slane %v2690, 4
  %v3507 = vsel %vm1596, %v3504, %v3506
  %v3508 = vrot.slane %v2691, 4
  %v3509 = vsel %vm1596, %v3506, %v3508
  %v3510 = vrot.slane %v2692, 4
  %v3511 = vsel %vm1596, %v3508, %v3510
  %v3512 = vrot.slane %v2693, 4
  %v3513 = vsel %vm1596, %v3510, %v3512
  %v3514 = vrot.slane %v2694, 4
  %v3515 = vsel %vm1596, %v3512, %v3514
  %v3516 = vrot.slane %v2695, 4
  %v3517 = vsel %vm1596, %v3514, %v3516
  %v3550 = vsel %vm1596, %v3516, 0.0
  %v3551 = vpack.c.bf16 %v3459, %v3457
  %v3552 = vpack.c.bf16 %v3463, %v3461
  %v3553 = vpack.c.bf16 %v3467, %v3465
  %v3554 = vpack.c.bf16 %v3471, %v3469
  %v3555 = vpack.c.bf16 %v3475, %v3473
  %v3556 = vpack.c.bf16 %v3479, %v3477
  %v3557 = vpack.c.bf16 %v3483, %v3481
  %v3558 = vpack.c.bf16 %v3487, %v3485
  %v3559 = vpack.c.bf16 %v3491, %v3489
  %v3560 = vpack.c.bf16 %v3495, %v3493
  %v3561 = vpack.c.bf16 %v3499, %v3497
  %v3562 = vpack.c.bf16 %v3503, %v3501
  %v3563 = vpack.c.bf16 %v3507, %v3505
  %v3564 = vpack.c.bf16 %v3511, %v3509
  %v3565 = vpack.c.bf16 %v3515, %v3513
  %v3566 = vpack.c.bf16 %v3550, %v3517
  %s3567 = scalar_lea.vmem %s4, 176
  %v3568 = vld [vmem:[%s3567] sm:$0xff]
  %v3569 = vld [vmem:[%s3567 + $0x8] sm:$0xff]
  %v3570 = vld [vmem:[%s3567 + $0x10] sm:$0xff]
  %v3571 = vld [vmem:[%s3567 + $0x18] sm:$0xff]
  %v3572 = vld [vmem:[%s3567 + $0x20] sm:$0xff]
  %v3573 = vld [vmem:[%s3567 + $0x28] sm:$0xff]
  %v3574 = vld [vmem:[%s3567 + $0x30] sm:$0xff]
  %v3575 = vld [vmem:[%s3567 + $0x38] sm:$0xff]
  %v3576 = vld [vmem:[%s3567 + $0x40] sm:$0xff]
  %v3577 = vld [vmem:[%s3567 + $0x48] sm:$0xff]
  %v3578 = vld [vmem:[%s3567 + $0x50] sm:$0x33]
  %v3590 = vunpack.c.l.b16 %v3568
  %v3591 = vunpack.c.h.b16 %v3568
  %v3592 = vunpack.c.l.b16 %v3569
  %v3593 = vunpack.c.h.b16 %v3569
  %v3594 = vunpack.c.l.b16 %v3570
  %v3595 = vunpack.c.h.b16 %v3570
  %v3596 = vunpack.c.l.b16 %v3571
  %v3597 = vunpack.c.h.b16 %v3571
  %v3598 = vunpack.c.l.b16 %v3572
  %v3599 = vunpack.c.h.b16 %v3572
  %v3600 = vunpack.c.l.b16 %v3573
  %v3601 = vunpack.c.h.b16 %v3573
  %v3602 = vunpack.c.l.b16 %v3574
  %v3603 = vunpack.c.h.b16 %v3574
  %v3604 = vunpack.c.l.b16 %v3575
  %v3605 = vunpack.c.h.b16 %v3575
  %v3606 = vunpack.c.l.b16 %v3576
  %v3607 = vunpack.c.h.b16 %v3576
  %v3608 = vunpack.c.l.b16 %v3577
  %v3609 = vunpack.c.h.b16 %v3577
  %v3610 = vunpack.c.l.b16 %v3578
  %v3611 = vunpack.c.h.b16 %v3578
  %v3612 = vpack.c.b16 %v3592, %v3590
  %v3613 = vpack.c.b16 %v3593, %v3591
  %v3614 = vpack.c.b16 %v3596, %v3594
  %v3615 = vpack.c.b16 %v3597, %v3595
  %v3616 = vpack.c.b16 %v3600, %v3598
  %v3617 = vpack.c.b16 %v3601, %v3599
  %v3618 = vpack.c.b16 %v3604, %v3602
  %v3619 = vpack.c.b16 %v3605, %v3603
  %v3620 = vpack.c.b16 %v3608, %v3606
  %v3621 = vpack.c.b16 %v3609, %v3607
  %v3622 = vpack.c.b16 %v3610, %v3610
  %v3623 = vpack.c.b16 %v3611, %v3611
  %v3635 = vsel %vm2934, %v3551, 0
  %v3638 = vsel %vm2934, %v3552, 0
  %v3641 = vsel %vm2934, %v3553, 0
  %v3644 = vsel %vm2934, %v3554, 0
  %v3647 = vsel %vm2934, %v3555, 0
  %v3650 = vsel %vm2934, %v3556, 0
  %v3653 = vsel %vm2934, %v3557, 0
  %v3656 = vsel %vm2934, %v3558, 0
  %v3659 = vsel %vm2934, %v3559, 0
  %v3662 = vsel %vm2934, %v3560, 0
  %v3665 = vsel %vm2934, %v3561, 0
  %v3668 = vsel %vm2934, %v3562, 0
  %v3671 = vsel %vm2934, %v3563, 0
  %v3674 = vsel %vm2934, %v3564, 0
  %v3677 = vsel %vm2934, %v3565, 0
  %v3680 = vsel %vm2934, %v3566, 0
  %v3683 = vsel %vm2983, %v3622, 0
  %v3686 = vsel %vm2983, %v3623, 0
  %3688 = vmatpush.bf16.msra.mxu0 0
  %3689 = vmatpush.bf16.msra.mxu0 0
  %3690 = vmatpush.bf16.msra.mxu0 %v3683
  %3691 = vmatpush.bf16.msra.mxu0 %v3620
  %3692 = vmatpush.bf16.msra.mxu0 %v3618
  %3693 = vmatpush.bf16.msra.mxu0 %v3616
  %3694 = vmatpush.bf16.msra.mxu0 %v3614
  %3695 = vmatpush.bf16.msra.mxu0 %v3612
  %3696 = vmatmul.bf16.gmra.mxu0 %v3635
  %v3697 = vpop.f32.mrf.mxu0
  %v3698 = vadd.f32 0.0, %v3697
  %v3699 = vpop.f32.mrf.mxu0
  %v3700 = vadd.f32 0.0, %v3699
  %3701 = vmatmul.bf16.gmra.mxu0 %v3638
  %v3702 = vpop.f32.mrf.mxu0
  %v3703 = vadd.f32 0.0, %v3702
  %v3704 = vpop.f32.mrf.mxu0
  %v3705 = vadd.f32 0.0, %v3704
  %3706 = vmatmul.bf16.gmra.mxu0 %v3641
  %v3707 = vpop.f32.mrf.mxu0
  %v3708 = vadd.f32 0.0, %v3707
  %v3709 = vpop.f32.mrf.mxu0
  %v3710 = vadd.f32 0.0, %v3709
  %3711 = vmatmul.bf16.gmra.mxu0 %v3644
  %v3712 = vpop.f32.mrf.mxu0
  %v3713 = vadd.f32 0.0, %v3712
  %v3714 = vpop.f32.mrf.mxu0
  %v3715 = vadd.f32 0.0, %v3714
  %3716 = vmatmul.bf16.gmra.mxu0 %v3647
  %v3717 = vpop.f32.mrf.mxu0
  %v3718 = vadd.f32 0.0, %v3717
  %v3719 = vpop.f32.mrf.mxu0
  %v3720 = vadd.f32 0.0, %v3719
  %3721 = vmatmul.bf16.gmra.mxu0 %v3650
  %v3722 = vpop.f32.mrf.mxu0
  %v3723 = vadd.f32 0.0, %v3722
  %v3724 = vpop.f32.mrf.mxu0
  %v3725 = vadd.f32 0.0, %v3724
  %3726 = vmatmul.bf16.gmra.mxu0 %v3653
  %v3727 = vpop.f32.mrf.mxu0
  %v3728 = vadd.f32 0.0, %v3727
  %v3729 = vpop.f32.mrf.mxu0
  %v3730 = vadd.f32 0.0, %v3729
  %3731 = vmatmul.bf16.gmra.mxu0 %v3656
  %v3732 = vpop.f32.mrf.mxu0
  %v3733 = vadd.f32 0.0, %v3732
  %v3734 = vpop.f32.mrf.mxu0
  %v3735 = vadd.f32 0.0, %v3734
  %3736 = vmatmul.bf16.gmra.mxu0 %v3659
  %v3737 = vpop.f32.mrf.mxu0
  %v3738 = vadd.f32 0.0, %v3737
  %v3739 = vpop.f32.mrf.mxu0
  %v3740 = vadd.f32 0.0, %v3739
  %3741 = vmatmul.bf16.gmra.mxu0 %v3662
  %v3742 = vpop.f32.mrf.mxu0
  %v3743 = vadd.f32 0.0, %v3742
  %v3744 = vpop.f32.mrf.mxu0
  %v3745 = vadd.f32 0.0, %v3744
  %3746 = vmatmul.bf16.gmra.mxu0 %v3665
  %v3747 = vpop.f32.mrf.mxu0
  %v3748 = vadd.f32 0.0, %v3747
  %v3749 = vpop.f32.mrf.mxu0
  %v3750 = vadd.f32 0.0, %v3749
  %3751 = vmatmul.bf16.gmra.mxu0 %v3668
  %v3752 = vpop.f32.mrf.mxu0
  %v3753 = vadd.f32 0.0, %v3752
  %v3754 = vpop.f32.mrf.mxu0
  %v3755 = vadd.f32 0.0, %v3754
  %3756 = vmatmul.bf16.gmra.mxu0 %v3671
  %v3757 = vpop.f32.mrf.mxu0
  %v3758 = vadd.f32 0.0, %v3757
  %v3759 = vpop.f32.mrf.mxu0
  %v3760 = vadd.f32 0.0, %v3759
  %3761 = vmatmul.bf16.gmra.mxu0 %v3674
  %v3762 = vpop.f32.mrf.mxu0
  %v3763 = vadd.f32 0.0, %v3762
  %v3764 = vpop.f32.mrf.mxu0
  %v3765 = vadd.f32 0.0, %v3764
  %3766 = vmatmul.bf16.gmra.mxu0 %v3677
  %v3767 = vpop.f32.mrf.mxu0
  %v3768 = vadd.f32 0.0, %v3767
  %v3769 = vpop.f32.mrf.mxu0
  %v3770 = vadd.f32 0.0, %v3769
  %3771 = vmatmul.bf16.gmra.mxu0 %v3680
  %v3772 = vpop.f32.mrf.mxu0
  %v3773 = vadd.f32 0.0, %v3772
  %v3774 = vpop.f32.mrf.mxu0
  %v3775 = vadd.f32 0.0, %v3774
  %3776 = vdwg.mxu0
  %3777 = vmatpush.bf16.msra.mxu0 0
  %3778 = vmatpush.bf16.msra.mxu0 0
  %3779 = vmatpush.bf16.msra.mxu0 %v3686
  %3780 = vmatpush.bf16.msra.mxu0 %v3621
  %3781 = vmatpush.bf16.msra.mxu0 %v3619
  %3782 = vmatpush.bf16.msra.mxu0 %v3617
  %3783 = vmatpush.bf16.msra.mxu0 %v3615
  %3784 = vmatpush.bf16.msra.mxu0 %v3613
  %3785 = vmatmul.bf16.gmra.mxu0 %v3635
  %v3786 = vpop.f32.mrf.mxu0
  %v3787 = vadd.f32 0.0, %v3786
  %v3788 = vpop.f32.mrf.mxu0
  %v3789 = vadd.f32 0.0, %v3788
  %3790 = vmatmul.bf16.gmra.mxu0 %v3638
  %v3791 = vpop.f32.mrf.mxu0
  %v3792 = vadd.f32 0.0, %v3791
  %v3793 = vpop.f32.mrf.mxu0
  %v3794 = vadd.f32 0.0, %v3793
  %3795 = vmatmul.bf16.gmra.mxu0 %v3641
  %v3796 = vpop.f32.mrf.mxu0
  %v3797 = vadd.f32 0.0, %v3796
  %v3798 = vpop.f32.mrf.mxu0
  %v3799 = vadd.f32 0.0, %v3798
  %3800 = vmatmul.bf16.gmra.mxu0 %v3644
  %v3801 = vpop.f32.mrf.mxu0
  %v3802 = vadd.f32 0.0, %v3801
  %v3803 = vpop.f32.mrf.mxu0
  %v3804 = vadd.f32 0.0, %v3803
  %3805 = vmatmul.bf16.gmra.mxu0 %v3647
  %v3806 = vpop.f32.mrf.mxu0
  %v3807 = vadd.f32 0.0, %v3806
  %v3808 = vpop.f32.mrf.mxu0
  %v3809 = vadd.f32 0.0, %v3808
  %3810 = vmatmul.bf16.gmra.mxu0 %v3650
  %v3811 = vpop.f32.mrf.mxu0
  %v3812 = vadd.f32 0.0, %v3811
  %v3813 = vpop.f32.mrf.mxu0
  %v3814 = vadd.f32 0.0, %v3813
  %3815 = vmatmul.bf16.gmra.mxu0 %v3653
  %v3816 = vpop.f32.mrf.mxu0
  %v3817 = vadd.f32 0.0, %v3816
  %v3818 = vpop.f32.mrf.mxu0
  %v3819 = vadd.f32 0.0, %v3818
  %3820 = vmatmul.bf16.gmra.mxu0 %v3656
  %v3821 = vpop.f32.mrf.mxu0
  %v3822 = vadd.f32 0.0, %v3821
  %v3823 = vpop.f32.mrf.mxu0
  %v3824 = vadd.f32 0.0, %v3823
  %3825 = vmatmul.bf16.gmra.mxu0 %v3659
  %v3826 = vpop.f32.mrf.mxu0
  %v3827 = vadd.f32 0.0, %v3826
  %v3828 = vpop.f32.mrf.mxu0
  %v3829 = vadd.f32 0.0, %v3828
  %3830 = vmatmul.bf16.gmra.mxu0 %v3662
  %v3831 = vpop.f32.mrf.mxu0
  %v3832 = vadd.f32 0.0, %v3831
  %v3833 = vpop.f32.mrf.mxu0
  %v3834 = vadd.f32 0.0, %v3833
  %3835 = vmatmul.bf16.gmra.mxu0 %v3665
  %v3836 = vpop.f32.mrf.mxu0
  %v3837 = vadd.f32 0.0, %v3836
  %v3838 = vpop.f32.mrf.mxu0
  %v3839 = vadd.f32 0.0, %v3838
  %3840 = vmatmul.bf16.gmra.mxu0 %v3668
  %v3841 = vpop.f32.mrf.mxu0
  %v3842 = vadd.f32 0.0, %v3841
  %v3843 = vpop.f32.mrf.mxu0
  %v3844 = vadd.f32 0.0, %v3843
  %3845 = vmatmul.bf16.gmra.mxu0 %v3671
  %v3846 = vpop.f32.mrf.mxu0
  %v3847 = vadd.f32 0.0, %v3846
  %v3848 = vpop.f32.mrf.mxu0
  %v3849 = vadd.f32 0.0, %v3848
  %3850 = vmatmul.bf16.gmra.mxu0 %v3674
  %v3851 = vpop.f32.mrf.mxu0
  %v3852 = vadd.f32 0.0, %v3851
  %v3853 = vpop.f32.mrf.mxu0
  %v3854 = vadd.f32 0.0, %v3853
  %3855 = vmatmul.bf16.gmra.mxu0 %v3677
  %v3856 = vpop.f32.mrf.mxu0
  %v3857 = vadd.f32 0.0, %v3856
  %v3858 = vpop.f32.mrf.mxu0
  %v3859 = vadd.f32 0.0, %v3858
  %3860 = vmatmul.bf16.gmra.mxu0 %v3680
  %v3861 = vpop.f32.mrf.mxu0
  %v3862 = vadd.f32 0.0, %v3861
  %v3863 = vpop.f32.mrf.mxu0
  %v3864 = vadd.f32 0.0, %v3863
  %3865 = vdwg.mxu0
  %v3866 = vadd.f32 %v3287, %v3698
  %v3867 = vadd.f32 %v3376, %v3787
  %v3868 = vadd.f32 %v3289, %v3700
  %v3869 = vadd.f32 %v3378, %v3789
  %v3870 = vadd.f32 %v3292, %v3703
  %v3871 = vadd.f32 %v3381, %v3792
  %v3872 = vadd.f32 %v3294, %v3705
  %v3873 = vadd.f32 %v3383, %v3794
  %v3874 = vadd.f32 %v3297, %v3708
  %v3875 = vadd.f32 %v3386, %v3797
  %v3876 = vadd.f32 %v3299, %v3710
  %v3877 = vadd.f32 %v3388, %v3799
  %v3878 = vadd.f32 %v3302, %v3713
  %v3879 = vadd.f32 %v3391, %v3802
  %v3880 = vadd.f32 %v3304, %v3715
  %v3881 = vadd.f32 %v3393, %v3804
  %v3882 = vadd.f32 %v3307, %v3718
  %v3883 = vadd.f32 %v3396, %v3807
  %v3884 = vadd.f32 %v3309, %v3720
  %v3885 = vadd.f32 %v3398, %v3809
  %v3886 = vadd.f32 %v3312, %v3723
  %v3887 = vadd.f32 %v3401, %v3812
  %v3888 = vadd.f32 %v3314, %v3725
  %v3889 = vadd.f32 %v3403, %v3814
  %v3890 = vadd.f32 %v3317, %v3728
  %v3891 = vadd.f32 %v3406, %v3817
  %v3892 = vadd.f32 %v3319, %v3730
  %v3893 = vadd.f32 %v3408, %v3819
  %v3894 = vadd.f32 %v3322, %v3733
  %v3895 = vadd.f32 %v3411, %v3822
  %v3896 = vadd.f32 %v3324, %v3735
  %v3897 = vadd.f32 %v3413, %v3824
  %v3898 = vadd.f32 %v3327, %v3738
  %v3899 = vadd.f32 %v3416, %v3827
  %v3900 = vadd.f32 %v3329, %v3740
  %v3901 = vadd.f32 %v3418, %v3829
  %v3902 = vadd.f32 %v3332, %v3743
  %v3903 = vadd.f32 %v3421, %v3832
  %v3904 = vadd.f32 %v3334, %v3745
  %v3905 = vadd.f32 %v3423, %v3834
  %v3906 = vadd.f32 %v3337, %v3748
  %v3907 = vadd.f32 %v3426, %v3837
  %v3908 = vadd.f32 %v3339, %v3750
  %v3909 = vadd.f32 %v3428, %v3839
  %v3910 = vadd.f32 %v3342, %v3753
  %v3911 = vadd.f32 %v3431, %v3842
  %v3912 = vadd.f32 %v3344, %v3755
  %v3913 = vadd.f32 %v3433, %v3844
  %v3914 = vadd.f32 %v3347, %v3758
  %v3915 = vadd.f32 %v3436, %v3847
  %v3916 = vadd.f32 %v3349, %v3760
  %v3917 = vadd.f32 %v3438, %v3849
  %v3918 = vadd.f32 %v3352, %v3763
  %v3919 = vadd.f32 %v3441, %v3852
  %v3920 = vadd.f32 %v3354, %v3765
  %v3921 = vadd.f32 %v3443, %v3854
  %v3922 = vadd.f32 %v3357, %v3768
  %v3923 = vadd.f32 %v3446, %v3857
  %v3924 = vadd.f32 %v3359, %v3770
  %v3925 = vadd.f32 %v3448, %v3859
  %v3926 = vadd.f32 %v3362, %v3773
  %v3927 = vadd.f32 %v3451, %v3862
  %v3928 = vadd.f32 %v3364, %v3775
  %v3929 = vadd.f32 %v3453, %v3864
  %v3930 = vrot.slane %v2664, 6
  %v3931 = vrot.slane %v2665, 6
  %v3932 = vsel %vm2983, %v3930, %v3931
  %v3933 = vrot.slane %v2666, 6
  %v3934 = vsel %vm2983, %v3931, %v3933
  %v3935 = vrot.slane %v2667, 6
  %v3936 = vsel %vm2983, %v3933, %v3935
  %v3937 = vrot.slane %v2668, 6
  %v3938 = vsel %vm2983, %v3935, %v3937
  %v3939 = vrot.slane %v2669, 6
  %v3940 = vsel %vm2983, %v3937, %v3939
  %v3941 = vrot.slane %v2670, 6
  %v3942 = vsel %vm2983, %v3939, %v3941
  %v3943 = vrot.slane %v2671, 6
  %v3944 = vsel %vm2983, %v3941, %v3943
  %v3945 = vrot.slane %v2672, 6
  %v3946 = vsel %vm2983, %v3943, %v3945
  %v3947 = vrot.slane %v2673, 6
  %v3948 = vsel %vm2983, %v3945, %v3947
  %v3949 = vrot.slane %v2674, 6
  %v3950 = vsel %vm2983, %v3947, %v3949
  %v3951 = vrot.slane %v2675, 6
  %v3952 = vsel %vm2983, %v3949, %v3951
  %v3953 = vrot.slane %v2676, 6
  %v3954 = vsel %vm2983, %v3951, %v3953
  %v3955 = vrot.slane %v2677, 6
  %v3956 = vsel %vm2983, %v3953, %v3955
  %v3957 = vrot.slane %v2678, 6
  %v3958 = vsel %vm2983, %v3955, %v3957
  %v3959 = vrot.slane %v2679, 6
  %v3960 = vsel %vm2983, %v3957, %v3959
  %v3961 = vrot.slane %v2680, 6
  %v3962 = vsel %vm2983, %v3959, %v3961
  %v3963 = vrot.slane %v2681, 6
  %v3964 = vsel %vm2983, %v3961, %v3963
  %v3965 = vrot.slane %v2682, 6
  %v3966 = vsel %vm2983, %v3963, %v3965
  %v3967 = vrot.slane %v2683, 6
  %v3968 = vsel %vm2983, %v3965, %v3967
  %v3969 = vrot.slane %v2684, 6
  %v3970 = vsel %vm2983, %v3967, %v3969
  %v3971 = vrot.slane %v2685, 6
  %v3972 = vsel %vm2983, %v3969, %v3971
  %v3973 = vrot.slane %v2686, 6
  %v3974 = vsel %vm2983, %v3971, %v3973
  %v3975 = vrot.slane %v2687, 6
  %v3976 = vsel %vm2983, %v3973, %v3975
  %v3977 = vrot.slane %v2688, 6
  %v3978 = vsel %vm2983, %v3975, %v3977
  %v3979 = vrot.slane %v2689, 6
  %v3980 = vsel %vm2983, %v3977, %v3979
  %v3981 = vrot.slane %v2690, 6
  %v3982 = vsel %vm2983, %v3979, %v3981
  %v3983 = vrot.slane %v2691, 6
  %v3984 = vsel %vm2983, %v3981, %v3983
  %v3985 = vrot.slane %v2692, 6
  %v3986 = vsel %vm2983, %v3983, %v3985
  %v3987 = vrot.slane %v2693, 6
  %v3988 = vsel %vm2983, %v3985, %v3987
  %v3989 = vrot.slane %v2694, 6
  %v3990 = vsel %vm2983, %v3987, %v3989
  %v3991 = vrot.slane %v2695, 6
  %v3992 = vsel %vm2983, %v3989, %v3991
  %v4025 = vsel %vm2983, %v3991, 0.0
  %v4026 = vpack.c.bf16 %v3934, %v3932
  %v4027 = vpack.c.bf16 %v3938, %v3936
  %v4028 = vpack.c.bf16 %v3942, %v3940
  %v4029 = vpack.c.bf16 %v3946, %v3944
  %v4030 = vpack.c.bf16 %v3950, %v3948
  %v4031 = vpack.c.bf16 %v3954, %v3952
  %v4032 = vpack.c.bf16 %v3958, %v3956
  %v4033 = vpack.c.bf16 %v3962, %v3960
  %v4034 = vpack.c.bf16 %v3966, %v3964
  %v4035 = vpack.c.bf16 %v3970, %v3968
  %v4036 = vpack.c.bf16 %v3974, %v3972
  %v4037 = vpack.c.bf16 %v3978, %v3976
  %v4038 = vpack.c.bf16 %v3982, %v3980
  %v4039 = vpack.c.bf16 %v3986, %v3984
  %v4040 = vpack.c.bf16 %v3990, %v3988
  %v4041 = vpack.c.bf16 %v4025, %v3992
  %s4042 = scalar_lea.vmem %s4, 264
  %v4043 = vld [vmem:[%s4042] sm:$0xff]
  %v4044 = vld [vmem:[%s4042 + $0x8] sm:$0xff]
  %v4045 = vld [vmem:[%s4042 + $0x10] sm:$0xff]
  %v4046 = vld [vmem:[%s4042 + $0x18] sm:$0xff]
  %v4047 = vld [vmem:[%s4042 + $0x20] sm:$0xff]
  %v4048 = vld [vmem:[%s4042 + $0x28] sm:$0xff]
  %v4049 = vld [vmem:[%s4042 + $0x30] sm:$0xff]
  %v4050 = vld [vmem:[%s4042 + $0x38] sm:$0xff]
  %v4051 = vld [vmem:[%s4042 + $0x40] sm:$0xff]
  %v4052 = vld [vmem:[%s4042 + $0x48] sm:$0xff]
  %v4053 = vld [vmem:[%s4042 + $0x50] sm:$0x33]
  %v4065 = vunpack.c.l.b16 %v4043
  %v4066 = vunpack.c.h.b16 %v4043
  %v4067 = vunpack.c.l.b16 %v4044
  %v4068 = vunpack.c.h.b16 %v4044
  %v4069 = vunpack.c.l.b16 %v4045
  %v4070 = vunpack.c.h.b16 %v4045
  %v4071 = vunpack.c.l.b16 %v4046
  %v4072 = vunpack.c.h.b16 %v4046
  %v4073 = vunpack.c.l.b16 %v4047
  %v4074 = vunpack.c.h.b16 %v4047
  %v4075 = vunpack.c.l.b16 %v4048
  %v4076 = vunpack.c.h.b16 %v4048
  %v4077 = vunpack.c.l.b16 %v4049
  %v4078 = vunpack.c.h.b16 %v4049
  %v4079 = vunpack.c.l.b16 %v4050
  %v4080 = vunpack.c.h.b16 %v4050
  %v4081 = vunpack.c.l.b16 %v4051
  %v4082 = vunpack.c.h.b16 %v4051
  %v4083 = vunpack.c.l.b16 %v4052
  %v4084 = vunpack.c.h.b16 %v4052
  %v4085 = vunpack.c.l.b16 %v4053
  %v4086 = vunpack.c.h.b16 %v4053
  %v4087 = vpack.c.b16 %v4067, %v4065
  %v4088 = vpack.c.b16 %v4068, %v4066
  %v4089 = vpack.c.b16 %v4071, %v4069
  %v4090 = vpack.c.b16 %v4072, %v4070
  %v4091 = vpack.c.b16 %v4075, %v4073
  %v4092 = vpack.c.b16 %v4076, %v4074
  %v4093 = vpack.c.b16 %v4079, %v4077
  %v4094 = vpack.c.b16 %v4080, %v4078
  %v4095 = vpack.c.b16 %v4083, %v4081
  %v4096 = vpack.c.b16 %v4084, %v4082
  %v4097 = vpack.c.b16 %v4085, %v4085
  %v4098 = vpack.c.b16 %v4086, %v4086
  %v4110 = vsel %vm2934, %v4026, 0
  %v4113 = vsel %vm2934, %v4027, 0
  %v4116 = vsel %vm2934, %v4028, 0
  %v4119 = vsel %vm2934, %v4029, 0
  %v4122 = vsel %vm2934, %v4030, 0
  %v4125 = vsel %vm2934, %v4031, 0
  %v4128 = vsel %vm2934, %v4032, 0
  %v4131 = vsel %vm2934, %v4033, 0
  %v4134 = vsel %vm2934, %v4034, 0
  %v4137 = vsel %vm2934, %v4035, 0
  %v4140 = vsel %vm2934, %v4036, 0
  %v4143 = vsel %vm2934, %v4037, 0
  %v4146 = vsel %vm2934, %v4038, 0
  %v4149 = vsel %vm2934, %v4039, 0
  %v4152 = vsel %vm2934, %v4040, 0
  %v4155 = vsel %vm2934, %v4041, 0
  %v4158 = vsel %vm2983, %v4097, 0
  %v4161 = vsel %vm2983, %v4098, 0
  %4163 = vmatpush.bf16.msra.mxu0 0
  %4164 = vmatpush.bf16.msra.mxu0 0
  %4165 = vmatpush.bf16.msra.mxu0 %v4158
  %4166 = vmatpush.bf16.msra.mxu0 %v4095
  %4167 = vmatpush.bf16.msra.mxu0 %v4093
  %4168 = vmatpush.bf16.msra.mxu0 %v4091
  %4169 = vmatpush.bf16.msra.mxu0 %v4089
  %4170 = vmatpush.bf16.msra.mxu0 %v4087
  %4171 = vmatmul.bf16.gmra.mxu0 %v4110
  %v4172 = vpop.f32.mrf.mxu0
  %v4173 = vadd.f32 0.0, %v4172
  %v4174 = vpop.f32.mrf.mxu0
  %v4175 = vadd.f32 0.0, %v4174
  %4176 = vmatmul.bf16.gmra.mxu0 %v4113
  %v4177 = vpop.f32.mrf.mxu0
  %v4178 = vadd.f32 0.0, %v4177
  %v4179 = vpop.f32.mrf.mxu0
  %v4180 = vadd.f32 0.0, %v4179
  %4181 = vmatmul.bf16.gmra.mxu0 %v4116
  %v4182 = vpop.f32.mrf.mxu0
  %v4183 = vadd.f32 0.0, %v4182
  %v4184 = vpop.f32.mrf.mxu0
  %v4185 = vadd.f32 0.0, %v4184
  %4186 = vmatmul.bf16.gmra.mxu0 %v4119
  %v4187 = vpop.f32.mrf.mxu0
  %v4188 = vadd.f32 0.0, %v4187
  %v4189 = vpop.f32.mrf.mxu0
  %v4190 = vadd.f32 0.0, %v4189
  %4191 = vmatmul.bf16.gmra.mxu0 %v4122
  %v4192 = vpop.f32.mrf.mxu0
  %v4193 = vadd.f32 0.0, %v4192
  %v4194 = vpop.f32.mrf.mxu0
  %v4195 = vadd.f32 0.0, %v4194
  %4196 = vmatmul.bf16.gmra.mxu0 %v4125
  %v4197 = vpop.f32.mrf.mxu0
  %v4198 = vadd.f32 0.0, %v4197
  %v4199 = vpop.f32.mrf.mxu0
  %v4200 = vadd.f32 0.0, %v4199
  %4201 = vmatmul.bf16.gmra.mxu0 %v4128
  %v4202 = vpop.f32.mrf.mxu0
  %v4203 = vadd.f32 0.0, %v4202
  %v4204 = vpop.f32.mrf.mxu0
  %v4205 = vadd.f32 0.0, %v4204
  %4206 = vmatmul.bf16.gmra.mxu0 %v4131
  %v4207 = vpop.f32.mrf.mxu0
  %v4208 = vadd.f32 0.0, %v4207
  %v4209 = vpop.f32.mrf.mxu0
  %v4210 = vadd.f32 0.0, %v4209
  %4211 = vmatmul.bf16.gmra.mxu0 %v4134
  %v4212 = vpop.f32.mrf.mxu0
  %v4213 = vadd.f32 0.0, %v4212
  %v4214 = vpop.f32.mrf.mxu0
  %v4215 = vadd.f32 0.0, %v4214
  %4216 = vmatmul.bf16.gmra.mxu0 %v4137
  %v4217 = vpop.f32.mrf.mxu0
  %v4218 = vadd.f32 0.0, %v4217
  %v4219 = vpop.f32.mrf.mxu0
  %v4220 = vadd.f32 0.0, %v4219
  %4221 = vmatmul.bf16.gmra.mxu0 %v4140
  %v4222 = vpop.f32.mrf.mxu0
  %v4223 = vadd.f32 0.0, %v4222
  %v4224 = vpop.f32.mrf.mxu0
  %v4225 = vadd.f32 0.0, %v4224
  %4226 = vmatmul.bf16.gmra.mxu0 %v4143
  %v4227 = vpop.f32.mrf.mxu0
  %v4228 = vadd.f32 0.0, %v4227
  %v4229 = vpop.f32.mrf.mxu0
  %v4230 = vadd.f32 0.0, %v4229
  %4231 = vmatmul.bf16.gmra.mxu0 %v4146
  %v4232 = vpop.f32.mrf.mxu0
  %v4233 = vadd.f32 0.0, %v4232
  %v4234 = vpop.f32.mrf.mxu0
  %v4235 = vadd.f32 0.0, %v4234
  %4236 = vmatmul.bf16.gmra.mxu0 %v4149
  %v4237 = vpop.f32.mrf.mxu0
  %v4238 = vadd.f32 0.0, %v4237
  %v4239 = vpop.f32.mrf.mxu0
  %v4240 = vadd.f32 0.0, %v4239
  %4241 = vmatmul.bf16.gmra.mxu0 %v4152
  %v4242 = vpop.f32.mrf.mxu0
  %v4243 = vadd.f32 0.0, %v4242
  %v4244 = vpop.f32.mrf.mxu0
  %v4245 = vadd.f32 0.0, %v4244
  %4246 = vmatmul.bf16.gmra.mxu0 %v4155
  %v4247 = vpop.f32.mrf.mxu0
  %v4248 = vadd.f32 0.0, %v4247
  %v4249 = vpop.f32.mrf.mxu0
  %v4250 = vadd.f32 0.0, %v4249
  %4251 = vdwg.mxu0
  %4252 = vmatpush.bf16.msra.mxu0 0
  %4253 = vmatpush.bf16.msra.mxu0 0
  %4254 = vmatpush.bf16.msra.mxu0 %v4161
  %4255 = vmatpush.bf16.msra.mxu0 %v4096
  %4256 = vmatpush.bf16.msra.mxu0 %v4094
  %4257 = vmatpush.bf16.msra.mxu0 %v4092
  %4258 = vmatpush.bf16.msra.mxu0 %v4090
  %4259 = vmatpush.bf16.msra.mxu0 %v4088
  %4260 = vmatmul.bf16.gmra.mxu0 %v4110
  %v4261 = vpop.f32.mrf.mxu0
  %v4262 = vadd.f32 0.0, %v4261
  %v4263 = vpop.f32.mrf.mxu0
  %v4264 = vadd.f32 0.0, %v4263
  %4265 = vmatmul.bf16.gmra.mxu0 %v4113
  %v4266 = vpop.f32.mrf.mxu0
  %v4267 = vadd.f32 0.0, %v4266
  %v4268 = vpop.f32.mrf.mxu0
  %v4269 = vadd.f32 0.0, %v4268
  %4270 = vmatmul.bf16.gmra.mxu0 %v4116
  %v4271 = vpop.f32.mrf.mxu0
  %v4272 = vadd.f32 0.0, %v4271
  %v4273 = vpop.f32.mrf.mxu0
  %v4274 = vadd.f32 0.0, %v4273
  %4275 = vmatmul.bf16.gmra.mxu0 %v4119
  %v4276 = vpop.f32.mrf.mxu0
  %v4277 = vadd.f32 0.0, %v4276
  %v4278 = vpop.f32.mrf.mxu0
  %v4279 = vadd.f32 0.0, %v4278
  %4280 = vmatmul.bf16.gmra.mxu0 %v4122
  %v4281 = vpop.f32.mrf.mxu0
  %v4282 = vadd.f32 0.0, %v4281
  %v4283 = vpop.f32.mrf.mxu0
  %v4284 = vadd.f32 0.0, %v4283
  %4285 = vmatmul.bf16.gmra.mxu0 %v4125
  %v4286 = vpop.f32.mrf.mxu0
  %v4287 = vadd.f32 0.0, %v4286
  %v4288 = vpop.f32.mrf.mxu0
  %v4289 = vadd.f32 0.0, %v4288
  %4290 = vmatmul.bf16.gmra.mxu0 %v4128
  %v4291 = vpop.f32.mrf.mxu0
  %v4292 = vadd.f32 0.0, %v4291
  %v4293 = vpop.f32.mrf.mxu0
  %v4294 = vadd.f32 0.0, %v4293
  %4295 = vmatmul.bf16.gmra.mxu0 %v4131
  %v4296 = vpop.f32.mrf.mxu0
  %v4297 = vadd.f32 0.0, %v4296
  %v4298 = vpop.f32.mrf.mxu0
  %v4299 = vadd.f32 0.0, %v4298
  %4300 = vmatmul.bf16.gmra.mxu0 %v4134
  %v4301 = vpop.f32.mrf.mxu0
  %v4302 = vadd.f32 0.0, %v4301
  %v4303 = vpop.f32.mrf.mxu0
  %v4304 = vadd.f32 0.0, %v4303
  %4305 = vmatmul.bf16.gmra.mxu0 %v4137
  %v4306 = vpop.f32.mrf.mxu0
  %v4307 = vadd.f32 0.0, %v4306
  %v4308 = vpop.f32.mrf.mxu0
  %v4309 = vadd.f32 0.0, %v4308
  %4310 = vmatmul.bf16.gmra.mxu0 %v4140
  %v4311 = vpop.f32.mrf.mxu0
  %v4312 = vadd.f32 0.0, %v4311
  %v4313 = vpop.f32.mrf.mxu0
  %v4314 = vadd.f32 0.0, %v4313
  %4315 = vmatmul.bf16.gmra.mxu0 %v4143
  %v4316 = vpop.f32.mrf.mxu0
  %v4317 = vadd.f32 0.0, %v4316
  %v4318 = vpop.f32.mrf.mxu0
  %v4319 = vadd.f32 0.0, %v4318
  %4320 = vmatmul.bf16.gmra.mxu0 %v4146
  %v4321 = vpop.f32.mrf.mxu0
  %v4322 = vadd.f32 0.0, %v4321
  %v4323 = vpop.f32.mrf.mxu0
  %v4324 = vadd.f32 0.0, %v4323
  %4325 = vmatmul.bf16.gmra.mxu0 %v4149
  %v4326 = vpop.f32.mrf.mxu0
  %v4327 = vadd.f32 0.0, %v4326
  %v4328 = vpop.f32.mrf.mxu0
  %v4329 = vadd.f32 0.0, %v4328
  %4330 = vmatmul.bf16.gmra.mxu0 %v4152
  %v4331 = vpop.f32.mrf.mxu0
  %v4332 = vadd.f32 0.0, %v4331
  %v4333 = vpop.f32.mrf.mxu0
  %v4334 = vadd.f32 0.0, %v4333
  %4335 = vmatmul.bf16.gmra.mxu0 %v4155
  %v4336 = vpop.f32.mrf.mxu0
  %v4337 = vadd.f32 0.0, %v4336
  %v4338 = vpop.f32.mrf.mxu0
  %v4339 = vadd.f32 0.0, %v4338
  %4340 = vdwg.mxu0
  %v4341 = vadd.f32 %v3866, %v4173
  %v4342 = vadd.f32 %v3867, %v4262
  %v4343 = vadd.f32 %v3868, %v4175
  %v4344 = vadd.f32 %v3869, %v4264
  %v4345 = vadd.f32 %v3870, %v4178
  %v4346 = vadd.f32 %v3871, %v4267
  %v4347 = vadd.f32 %v3872, %v4180
  %v4348 = vadd.f32 %v3873, %v4269
  %v4349 = vadd.f32 %v3874, %v4183
  %v4350 = vadd.f32 %v3875, %v4272
  %v4351 = vadd.f32 %v3876, %v4185
  %v4352 = vadd.f32 %v3877, %v4274
  %v4353 = vadd.f32 %v3878, %v4188
  %v4354 = vadd.f32 %v3879, %v4277
  %v4355 = vadd.f32 %v3880, %v4190
  %v4356 = vadd.f32 %v3881, %v4279
  %v4357 = vadd.f32 %v3882, %v4193
  %v4358 = vadd.f32 %v3883, %v4282
  %v4359 = vadd.f32 %v3884, %v4195
  %v4360 = vadd.f32 %v3885, %v4284
  %v4361 = vadd.f32 %v3886, %v4198
  %v4362 = vadd.f32 %v3887, %v4287
  %v4363 = vadd.f32 %v3888, %v4200
  %v4364 = vadd.f32 %v3889, %v4289
  %v4365 = vadd.f32 %v3890, %v4203
  %v4366 = vadd.f32 %v3891, %v4292
  %v4367 = vadd.f32 %v3892, %v4205
  %v4368 = vadd.f32 %v3893, %v4294
  %v4369 = vadd.f32 %v3894, %v4208
  %v4370 = vadd.f32 %v3895, %v4297
  %v4371 = vadd.f32 %v3896, %v4210
  %v4372 = vadd.f32 %v3897, %v4299
  %v4373 = vadd.f32 %v3898, %v4213
  %v4374 = vadd.f32 %v3899, %v4302
  %v4375 = vadd.f32 %v3900, %v4215
  %v4376 = vadd.f32 %v3901, %v4304
  %v4377 = vadd.f32 %v3902, %v4218
  %v4378 = vadd.f32 %v3903, %v4307
  %v4379 = vadd.f32 %v3904, %v4220
  %v4380 = vadd.f32 %v3905, %v4309
  %v4381 = vadd.f32 %v3906, %v4223
  %v4382 = vadd.f32 %v3907, %v4312
  %v4383 = vadd.f32 %v3908, %v4225
  %v4384 = vadd.f32 %v3909, %v4314
  %v4385 = vadd.f32 %v3910, %v4228
  %v4386 = vadd.f32 %v3911, %v4317
  %v4387 = vadd.f32 %v3912, %v4230
  %v4388 = vadd.f32 %v3913, %v4319
  %v4389 = vadd.f32 %v3914, %v4233
  %v4390 = vadd.f32 %v3915, %v4322
  %v4391 = vadd.f32 %v3916, %v4235
  %v4392 = vadd.f32 %v3917, %v4324
  %v4393 = vadd.f32 %v3918, %v4238
  %v4394 = vadd.f32 %v3919, %v4327
  %v4395 = vadd.f32 %v3920, %v4240
  %v4396 = vadd.f32 %v3921, %v4329
  %v4397 = vadd.f32 %v3922, %v4243
  %v4398 = vadd.f32 %v3923, %v4332
  %v4399 = vadd.f32 %v3924, %v4245
  %v4400 = vadd.f32 %v3925, %v4334
  %v4401 = vadd.f32 %v3926, %v4248
  %v4402 = vadd.f32 %v3927, %v4337
  %v4403 = vadd.f32 %v3928, %v4250
  %v4404 = vadd.f32 %v3929, %v4339
  %v4405 = vpack.c.bf16 %v2666, %v2665
  %v4406 = vpack.c.bf16 %v2668, %v2667
  %v4407 = vpack.c.bf16 %v2670, %v2669
  %v4408 = vpack.c.bf16 %v2672, %v2671
  %v4409 = vpack.c.bf16 %v2674, %v2673
  %v4410 = vpack.c.bf16 %v2676, %v2675
  %v4411 = vpack.c.bf16 %v2678, %v2677
  %v4412 = vpack.c.bf16 %v2680, %v2679
  %v4413 = vpack.c.bf16 %v2682, %v2681
  %v4414 = vpack.c.bf16 %v2684, %v2683
  %v4415 = vpack.c.bf16 %v2686, %v2685
  %v4416 = vpack.c.bf16 %v2688, %v2687
  %v4417 = vpack.c.bf16 %v2690, %v2689
  %v4418 = vpack.c.bf16 %v2692, %v2691
  %v4419 = vpack.c.bf16 %v2694, %v2693
  %v4420 = vpack.c.bf16 0.0, %v2695
  %s4421 = scalar_lea.vmem %s4, 352
  %v4422 = vld [vmem:[%s4421] sm:$0xff]
  %v4423 = vld [vmem:[%s4421 + $0x8] sm:$0xff]
  %v4424 = vld [vmem:[%s4421 + $0x10] sm:$0xff]
  %v4425 = vld [vmem:[%s4421 + $0x18] sm:$0xff]
  %v4426 = vld [vmem:[%s4421 + $0x20] sm:$0xff]
  %v4427 = vld [vmem:[%s4421 + $0x28] sm:$0xff]
  %v4428 = vld [vmem:[%s4421 + $0x30] sm:$0xff]
  %v4429 = vld [vmem:[%s4421 + $0x38] sm:$0xff]
  %v4430 = vld [vmem:[%s4421 + $0x40] sm:$0xff]
  %v4431 = vld [vmem:[%s4421 + $0x48] sm:$0xff]
  %v4432 = vld [vmem:[%s4421 + $0x50] sm:$0x33]
  %v4444 = vunpack.c.l.b16 %v4422
  %v4445 = vunpack.c.h.b16 %v4422
  %v4446 = vunpack.c.l.b16 %v4423
  %v4447 = vunpack.c.h.b16 %v4423
  %v4448 = vunpack.c.l.b16 %v4424
  %v4449 = vunpack.c.h.b16 %v4424
  %v4450 = vunpack.c.l.b16 %v4425
  %v4451 = vunpack.c.h.b16 %v4425
  %v4452 = vunpack.c.l.b16 %v4426
  %v4453 = vunpack.c.h.b16 %v4426
  %v4454 = vunpack.c.l.b16 %v4427
  %v4455 = vunpack.c.h.b16 %v4427
  %v4456 = vunpack.c.l.b16 %v4428
  %v4457 = vunpack.c.h.b16 %v4428
  %v4458 = vunpack.c.l.b16 %v4429
  %v4459 = vunpack.c.h.b16 %v4429
  %v4460 = vunpack.c.l.b16 %v4430
  %v4461 = vunpack.c.h.b16 %v4430
  %v4462 = vunpack.c.l.b16 %v4431
  %v4463 = vunpack.c.h.b16 %v4431
  %v4464 = vunpack.c.l.b16 %v4432
  %v4465 = vunpack.c.h.b16 %v4432
  %v4466 = vpack.c.b16 %v4446, %v4444
  %v4467 = vpack.c.b16 %v4447, %v4445
  %v4468 = vpack.c.b16 %v4450, %v4448
  %v4469 = vpack.c.b16 %v4451, %v4449
  %v4470 = vpack.c.b16 %v4454, %v4452
  %v4471 = vpack.c.b16 %v4455, %v4453
  %v4472 = vpack.c.b16 %v4458, %v4456
  %v4473 = vpack.c.b16 %v4459, %v4457
  %v4474 = vpack.c.b16 %v4462, %v4460
  %v4475 = vpack.c.b16 %v4463, %v4461
  %v4476 = vpack.c.b16 %v4464, %v4464
  %v4477 = vpack.c.b16 %v4465, %v4465
  %v4489 = vsel %vm2934, %v4405, 0
  %v4492 = vsel %vm2934, %v4406, 0
  %v4495 = vsel %vm2934, %v4407, 0
  %v4498 = vsel %vm2934, %v4408, 0
  %v4501 = vsel %vm2934, %v4409, 0
  %v4504 = vsel %vm2934, %v4410, 0
  %v4507 = vsel %vm2934, %v4411, 0
  %v4510 = vsel %vm2934, %v4412, 0
  %v4513 = vsel %vm2934, %v4413, 0
  %v4516 = vsel %vm2934, %v4414, 0
  %v4519 = vsel %vm2934, %v4415, 0
  %v4522 = vsel %vm2934, %v4416, 0
  %v4525 = vsel %vm2934, %v4417, 0
  %v4528 = vsel %vm2934, %v4418, 0
  %v4531 = vsel %vm2934, %v4419, 0
  %v4534 = vsel %vm2934, %v4420, 0
  %v4537 = vsel %vm2983, %v4476, 0
  %v4540 = vsel %vm2983, %v4477, 0
  %4542 = vmatpush.bf16.msra.mxu0 0
  %4543 = vmatpush.bf16.msra.mxu0 0
  %4544 = vmatpush.bf16.msra.mxu0 %v4537
  %4545 = vmatpush.bf16.msra.mxu0 %v4474
  %4546 = vmatpush.bf16.msra.mxu0 %v4472
  %4547 = vmatpush.bf16.msra.mxu0 %v4470
  %4548 = vmatpush.bf16.msra.mxu0 %v4468
  %4549 = vmatpush.bf16.msra.mxu0 %v4466
  %4550 = vmatmul.bf16.gmra.mxu0 %v4489
  %v4551 = vpop.f32.mrf.mxu0
  %v4552 = vadd.f32 0.0, %v4551
  %v4553 = vpop.f32.mrf.mxu0
  %v4554 = vadd.f32 0.0, %v4553
  %4555 = vmatmul.bf16.gmra.mxu0 %v4492
  %v4556 = vpop.f32.mrf.mxu0
  %v4557 = vadd.f32 0.0, %v4556
  %v4558 = vpop.f32.mrf.mxu0
  %v4559 = vadd.f32 0.0, %v4558
  %4560 = vmatmul.bf16.gmra.mxu0 %v4495
  %v4561 = vpop.f32.mrf.mxu0
  %v4562 = vadd.f32 0.0, %v4561
  %v4563 = vpop.f32.mrf.mxu0
  %v4564 = vadd.f32 0.0, %v4563
  %4565 = vmatmul.bf16.gmra.mxu0 %v4498
  %v4566 = vpop.f32.mrf.mxu0
  %v4567 = vadd.f32 0.0, %v4566
  %v4568 = vpop.f32.mrf.mxu0
  %v4569 = vadd.f32 0.0, %v4568
  %4570 = vmatmul.bf16.gmra.mxu0 %v4501
  %v4571 = vpop.f32.mrf.mxu0
  %v4572 = vadd.f32 0.0, %v4571
  %v4573 = vpop.f32.mrf.mxu0
  %v4574 = vadd.f32 0.0, %v4573
  %4575 = vmatmul.bf16.gmra.mxu0 %v4504
  %v4576 = vpop.f32.mrf.mxu0
  %v4577 = vadd.f32 0.0, %v4576
  %v4578 = vpop.f32.mrf.mxu0
  %v4579 = vadd.f32 0.0, %v4578
  %4580 = vmatmul.bf16.gmra.mxu0 %v4507
  %v4581 = vpop.f32.mrf.mxu0
  %v4582 = vadd.f32 0.0, %v4581
  %v4583 = vpop.f32.mrf.mxu0
  %v4584 = vadd.f32 0.0, %v4583
  %4585 = vmatmul.bf16.gmra.mxu0 %v4510
  %v4586 = vpop.f32.mrf.mxu0
  %v4587 = vadd.f32 0.0, %v4586
  %v4588 = vpop.f32.mrf.mxu0
  %v4589 = vadd.f32 0.0, %v4588
  %4590 = vmatmul.bf16.gmra.mxu0 %v4513
  %v4591 = vpop.f32.mrf.mxu0
  %v4592 = vadd.f32 0.0, %v4591
  %v4593 = vpop.f32.mrf.mxu0
  %v4594 = vadd.f32 0.0, %v4593
  %4595 = vmatmul.bf16.gmra.mxu0 %v4516
  %v4596 = vpop.f32.mrf.mxu0
  %v4597 = vadd.f32 0.0, %v4596
  %v4598 = vpop.f32.mrf.mxu0
  %v4599 = vadd.f32 0.0, %v4598
  %4600 = vmatmul.bf16.gmra.mxu0 %v4519
  %v4601 = vpop.f32.mrf.mxu0
  %v4602 = vadd.f32 0.0, %v4601
  %v4603 = vpop.f32.mrf.mxu0
  %v4604 = vadd.f32 0.0, %v4603
  %4605 = vmatmul.bf16.gmra.mxu0 %v4522
  %v4606 = vpop.f32.mrf.mxu0
  %v4607 = vadd.f32 0.0, %v4606
  %v4608 = vpop.f32.mrf.mxu0
  %v4609 = vadd.f32 0.0, %v4608
  %4610 = vmatmul.bf16.gmra.mxu0 %v4525
  %v4611 = vpop.f32.mrf.mxu0
  %v4612 = vadd.f32 0.0, %v4611
  %v4613 = vpop.f32.mrf.mxu0
  %v4614 = vadd.f32 0.0, %v4613
  %4615 = vmatmul.bf16.gmra.mxu0 %v4528
  %v4616 = vpop.f32.mrf.mxu0
  %v4617 = vadd.f32 0.0, %v4616
  %v4618 = vpop.f32.mrf.mxu0
  %v4619 = vadd.f32 0.0, %v4618
  %4620 = vmatmul.bf16.gmra.mxu0 %v4531
  %v4621 = vpop.f32.mrf.mxu0
  %v4622 = vadd.f32 0.0, %v4621
  %v4623 = vpop.f32.mrf.mxu0
  %v4624 = vadd.f32 0.0, %v4623
  %4625 = vmatmul.bf16.gmra.mxu0 %v4534
  %v4626 = vpop.f32.mrf.mxu0
  %v4627 = vadd.f32 0.0, %v4626
  %v4628 = vpop.f32.mrf.mxu0
  %v4629 = vadd.f32 0.0, %v4628
  %4630 = vdwg.mxu0
  %4631 = vmatpush.bf16.msra.mxu0 0
  %4632 = vmatpush.bf16.msra.mxu0 0
  %4633 = vmatpush.bf16.msra.mxu0 %v4540
  %4634 = vmatpush.bf16.msra.mxu0 %v4475
  %4635 = vmatpush.bf16.msra.mxu0 %v4473
  %4636 = vmatpush.bf16.msra.mxu0 %v4471
  %4637 = vmatpush.bf16.msra.mxu0 %v4469
  %4638 = vmatpush.bf16.msra.mxu0 %v4467
  %4639 = vmatmul.bf16.gmra.mxu0 %v4489
  %v4640 = vpop.f32.mrf.mxu0
  %v4641 = vadd.f32 0.0, %v4640
  %v4642 = vpop.f32.mrf.mxu0
  %v4643 = vadd.f32 0.0, %v4642
  %4644 = vmatmul.bf16.gmra.mxu0 %v4492
  %v4645 = vpop.f32.mrf.mxu0
  %v4646 = vadd.f32 0.0, %v4645
  %v4647 = vpop.f32.mrf.mxu0
  %v4648 = vadd.f32 0.0, %v4647
  %4649 = vmatmul.bf16.gmra.mxu0 %v4495
  %v4650 = vpop.f32.mrf.mxu0
  %v4651 = vadd.f32 0.0, %v4650
  %v4652 = vpop.f32.mrf.mxu0
  %v4653 = vadd.f32 0.0, %v4652
  %4654 = vmatmul.bf16.gmra.mxu0 %v4498
  %v4655 = vpop.f32.mrf.mxu0
  %v4656 = vadd.f32 0.0, %v4655
  %v4657 = vpop.f32.mrf.mxu0
  %v4658 = vadd.f32 0.0, %v4657
  %4659 = vmatmul.bf16.gmra.mxu0 %v4501
  %v4660 = vpop.f32.mrf.mxu0
  %v4661 = vadd.f32 0.0, %v4660
  %v4662 = vpop.f32.mrf.mxu0
  %v4663 = vadd.f32 0.0, %v4662
  %4664 = vmatmul.bf16.gmra.mxu0 %v4504
  %v4665 = vpop.f32.mrf.mxu0
  %v4666 = vadd.f32 0.0, %v4665
  %v4667 = vpop.f32.mrf.mxu0
  %v4668 = vadd.f32 0.0, %v4667
  %4669 = vmatmul.bf16.gmra.mxu0 %v4507
  %v4670 = vpop.f32.mrf.mxu0
  %v4671 = vadd.f32 0.0, %v4670
  %v4672 = vpop.f32.mrf.mxu0
  %v4673 = vadd.f32 0.0, %v4672
  %4674 = vmatmul.bf16.gmra.mxu0 %v4510
  %v4675 = vpop.f32.mrf.mxu0
  %v4676 = vadd.f32 0.0, %v4675
  %v4677 = vpop.f32.mrf.mxu0
  %v4678 = vadd.f32 0.0, %v4677
  %4679 = vmatmul.bf16.gmra.mxu0 %v4513
  %v4680 = vpop.f32.mrf.mxu0
  %v4681 = vadd.f32 0.0, %v4680
  %v4682 = vpop.f32.mrf.mxu0
  %v4683 = vadd.f32 0.0, %v4682
  %4684 = vmatmul.bf16.gmra.mxu0 %v4516
  %v4685 = vpop.f32.mrf.mxu0
  %v4686 = vadd.f32 0.0, %v4685
  %v4687 = vpop.f32.mrf.mxu0
  %v4688 = vadd.f32 0.0, %v4687
  %4689 = vmatmul.bf16.gmra.mxu0 %v4519
  %v4690 = vpop.f32.mrf.mxu0
  %v4691 = vadd.f32 0.0, %v4690
  %v4692 = vpop.f32.mrf.mxu0
  %v4693 = vadd.f32 0.0, %v4692
  %4694 = vmatmul.bf16.gmra.mxu0 %v4522
  %v4695 = vpop.f32.mrf.mxu0
  %v4696 = vadd.f32 0.0, %v4695
  %v4697 = vpop.f32.mrf.mxu0
  %v4698 = vadd.f32 0.0, %v4697
  %4699 = vmatmul.bf16.gmra.mxu0 %v4525
  %v4700 = vpop.f32.mrf.mxu0
  %v4701 = vadd.f32 0.0, %v4700
  %v4702 = vpop.f32.mrf.mxu0
  %v4703 = vadd.f32 0.0, %v4702
  %4704 = vmatmul.bf16.gmra.mxu0 %v4528
  %v4705 = vpop.f32.mrf.mxu0
  %v4706 = vadd.f32 0.0, %v4705
  %v4707 = vpop.f32.mrf.mxu0
  %v4708 = vadd.f32 0.0, %v4707
  %4709 = vmatmul.bf16.gmra.mxu0 %v4531
  %v4710 = vpop.f32.mrf.mxu0
  %v4711 = vadd.f32 0.0, %v4710
  %v4712 = vpop.f32.mrf.mxu0
  %v4713 = vadd.f32 0.0, %v4712
  %4714 = vmatmul.bf16.gmra.mxu0 %v4534
  %v4715 = vpop.f32.mrf.mxu0
  %v4716 = vadd.f32 0.0, %v4715
  %v4717 = vpop.f32.mrf.mxu0
  %v4718 = vadd.f32 0.0, %v4717
  %4719 = vdwg.mxu0
  %v4720 = vadd.f32 %v4341, %v4552
  %v4721 = vadd.f32 %v4342, %v4641
  %v4722 = vadd.f32 %v4343, %v4554
  %v4723 = vadd.f32 %v4344, %v4643
  %v4724 = vadd.f32 %v4345, %v4557
  %v4725 = vadd.f32 %v4346, %v4646
  %v4726 = vadd.f32 %v4347, %v4559
  %v4727 = vadd.f32 %v4348, %v4648
  %v4728 = vadd.f32 %v4349, %v4562
  %v4729 = vadd.f32 %v4350, %v4651
  %v4730 = vadd.f32 %v4351, %v4564
  %v4731 = vadd.f32 %v4352, %v4653
  %v4732 = vadd.f32 %v4353, %v4567
  %v4733 = vadd.f32 %v4354, %v4656
  %v4734 = vadd.f32 %v4355, %v4569
  %v4735 = vadd.f32 %v4356, %v4658
  %v4736 = vadd.f32 %v4357, %v4572
  %v4737 = vadd.f32 %v4358, %v4661
  %v4738 = vadd.f32 %v4359, %v4574
  %v4739 = vadd.f32 %v4360, %v4663
  %v4740 = vadd.f32 %v4361, %v4577
  %v4741 = vadd.f32 %v4362, %v4666
  %v4742 = vadd.f32 %v4363, %v4579
  %v4743 = vadd.f32 %v4364, %v4668
  %v4744 = vadd.f32 %v4365, %v4582
  %v4745 = vadd.f32 %v4366, %v4671
  %v4746 = vadd.f32 %v4367, %v4584
  %v4747 = vadd.f32 %v4368, %v4673
  %v4748 = vadd.f32 %v4369, %v4587
  %v4749 = vadd.f32 %v4370, %v4676
  %v4750 = vadd.f32 %v4371, %v4589
  %v4751 = vadd.f32 %v4372, %v4678
  %v4752 = vadd.f32 %v4373, %v4592
  %v4753 = vadd.f32 %v4374, %v4681
  %v4754 = vadd.f32 %v4375, %v4594
  %v4755 = vadd.f32 %v4376, %v4683
  %v4756 = vadd.f32 %v4377, %v4597
  %v4757 = vadd.f32 %v4378, %v4686
  %v4758 = vadd.f32 %v4379, %v4599
  %v4759 = vadd.f32 %v4380, %v4688
  %v4760 = vadd.f32 %v4381, %v4602
  %v4761 = vadd.f32 %v4382, %v4691
  %v4762 = vadd.f32 %v4383, %v4604
  %v4763 = vadd.f32 %v4384, %v4693
  %v4764 = vadd.f32 %v4385, %v4607
  %v4765 = vadd.f32 %v4386, %v4696
  %v4766 = vadd.f32 %v4387, %v4609
  %v4767 = vadd.f32 %v4388, %v4698
  %v4768 = vadd.f32 %v4389, %v4612
  %v4769 = vadd.f32 %v4390, %v4701
  %v4770 = vadd.f32 %v4391, %v4614
  %v4771 = vadd.f32 %v4392, %v4703
  %v4772 = vadd.f32 %v4393, %v4617
  %v4773 = vadd.f32 %v4394, %v4706
  %v4774 = vadd.f32 %v4395, %v4619
  %v4775 = vadd.f32 %v4396, %v4708
  %v4776 = vadd.f32 %v4397, %v4622
  %v4777 = vadd.f32 %v4398, %v4711
  %v4778 = vadd.f32 %v4399, %v4624
  %v4779 = vadd.f32 %v4400, %v4713
  %v4780 = vadd.f32 %v4401, %v4627
  %v4781 = vadd.f32 %v4402, %v4716
  %v4782 = vadd.f32 %v4403, %v4629
  %v4783 = vadd.f32 %v4404, %v4718
  %v4784 = vld [vmem:[%s5] sm:$0x3]
  %v4786 = vperm.slane %v4784, 0
  %v4787 = vperm.slane %v4784, 1
  %v4790 = vadd.f32 %v4720, %v4786
  %v4791 = vadd.f32 %v4721, %v4787
  %v4792 = vadd.f32 %v4722, %v4786
  %v4793 = vadd.f32 %v4723, %v4787
  %v4794 = vadd.f32 %v4724, %v4786
  %v4795 = vadd.f32 %v4725, %v4787
  %v4796 = vadd.f32 %v4726, %v4786
  %v4797 = vadd.f32 %v4727, %v4787
  %v4798 = vadd.f32 %v4728, %v4786
  %v4799 = vadd.f32 %v4729, %v4787
  %v4800 = vadd.f32 %v4730, %v4786
  %v4801 = vadd.f32 %v4731, %v4787
  %v4802 = vadd.f32 %v4732, %v4786
  %v4803 = vadd.f32 %v4733, %v4787
  %v4804 = vadd.f32 %v4734, %v4786
  %v4805 = vadd.f32 %v4735, %v4787
  %v4806 = vadd.f32 %v4736, %v4786
  %v4807 = vadd.f32 %v4737, %v4787
  %v4808 = vadd.f32 %v4738, %v4786
  %v4809 = vadd.f32 %v4739, %v4787
  %v4810 = vadd.f32 %v4740, %v4786
  %v4811 = vadd.f32 %v4741, %v4787
  %v4812 = vadd.f32 %v4742, %v4786
  %v4813 = vadd.f32 %v4743, %v4787
  %v4814 = vadd.f32 %v4744, %v4786
  %v4815 = vadd.f32 %v4745, %v4787
  %v4816 = vadd.f32 %v4746, %v4786
  %v4817 = vadd.f32 %v4747, %v4787
  %v4818 = vadd.f32 %v4748, %v4786
  %v4819 = vadd.f32 %v4749, %v4787
  %v4820 = vadd.f32 %v4750, %v4786
  %v4821 = vadd.f32 %v4751, %v4787
  %v4822 = vadd.f32 %v4752, %v4786
  %v4823 = vadd.f32 %v4753, %v4787
  %v4824 = vadd.f32 %v4754, %v4786
  %v4825 = vadd.f32 %v4755, %v4787
  %v4826 = vadd.f32 %v4756, %v4786
  %v4827 = vadd.f32 %v4757, %v4787
  %v4828 = vadd.f32 %v4758, %v4786
  %v4829 = vadd.f32 %v4759, %v4787
  %v4830 = vadd.f32 %v4760, %v4786
  %v4831 = vadd.f32 %v4761, %v4787
  %v4832 = vadd.f32 %v4762, %v4786
  %v4833 = vadd.f32 %v4763, %v4787
  %v4834 = vadd.f32 %v4764, %v4786
  %v4835 = vadd.f32 %v4765, %v4787
  %v4836 = vadd.f32 %v4766, %v4786
  %v4837 = vadd.f32 %v4767, %v4787
  %v4838 = vadd.f32 %v4768, %v4786
  %v4839 = vadd.f32 %v4769, %v4787
  %v4840 = vadd.f32 %v4770, %v4786
  %v4841 = vadd.f32 %v4771, %v4787
  %v4842 = vadd.f32 %v4772, %v4786
  %v4843 = vadd.f32 %v4773, %v4787
  %v4844 = vadd.f32 %v4774, %v4786
  %v4845 = vadd.f32 %v4775, %v4787
  %v4846 = vadd.f32 %v4776, %v4786
  %v4847 = vadd.f32 %v4777, %v4787
  %v4848 = vadd.f32 %v4778, %v4786
  %v4849 = vadd.f32 %v4779, %v4787
  %v4850 = vadd.f32 %v4780, %v4786
  %v4851 = vadd.f32 %v4781, %v4787
  %v4852 = vadd.f32 %v4782, %v4786
  %v4853 = vadd.f32 %v4783, %v4787
  %v4854 = vtanh.pop %v4790
  %v4855 = vtanh.pop %v4791
  %v4856 = vtanh.pop %v4792
  %v4857 = vtanh.pop %v4793
  %v4858 = vtanh.pop %v4794
  %v4859 = vtanh.pop %v4795
  %v4860 = vtanh.pop %v4796
  %v4861 = vtanh.pop %v4797
  %v4862 = vtanh.pop %v4798
  %v4863 = vtanh.pop %v4799
  %v4864 = vtanh.pop %v4800
  %v4865 = vtanh.pop %v4801
  %v4866 = vtanh.pop %v4802
  %v4867 = vtanh.pop %v4803
  %v4868 = vtanh.pop %v4804
  %v4869 = vtanh.pop %v4805
  %v4870 = vtanh.pop %v4806
  %v4871 = vtanh.pop %v4807
  %v4872 = vtanh.pop %v4808
  %v4873 = vtanh.pop %v4809
  %v4874 = vtanh.pop %v4810
  %v4875 = vtanh.pop %v4811
  %v4876 = vtanh.pop %v4812
  %v4877 = vtanh.pop %v4813
  %v4878 = vtanh.pop %v4814
  %v4879 = vtanh.pop %v4815
  %v4880 = vtanh.pop %v4816
  %v4881 = vtanh.pop %v4817
  %v4882 = vtanh.pop %v4818
  %v4883 = vtanh.pop %v4819
  %v4884 = vtanh.pop %v4820
  %v4885 = vtanh.pop %v4821
  %v4886 = vtanh.pop %v4822
  %v4887 = vtanh.pop %v4823
  %v4888 = vtanh.pop %v4824
  %v4889 = vtanh.pop %v4825
  %v4890 = vtanh.pop %v4826
  %v4891 = vtanh.pop %v4827
  %v4892 = vtanh.pop %v4828
  %v4893 = vtanh.pop %v4829
  %v4894 = vtanh.pop %v4830
  %v4895 = vtanh.pop %v4831
  %v4896 = vtanh.pop %v4832
  %v4897 = vtanh.pop %v4833
  %v4898 = vtanh.pop %v4834
  %v4899 = vtanh.pop %v4835
  %v4900 = vtanh.pop %v4836
  %v4901 = vtanh.pop %v4837
  %v4902 = vtanh.pop %v4838
  %v4903 = vtanh.pop %v4839
  %v4904 = vtanh.pop %v4840
  %v4905 = vtanh.pop %v4841
  %v4906 = vtanh.pop %v4842
  %v4907 = vtanh.pop %v4843
  %v4908 = vtanh.pop %v4844
  %v4909 = vtanh.pop %v4845
  %v4910 = vtanh.pop %v4846
  %v4911 = vtanh.pop %v4847
  %v4912 = vtanh.pop %v4848
  %v4913 = vtanh.pop %v4849
  %v4914 = vtanh.pop %v4850
  %v4915 = vtanh.pop %v4851
  %v4916 = vtanh.pop %v4852
  %v4917 = vtanh.pop %v4853
  %v4918 = vpack.c.bf16 %v4856, %v4854
  %v4919 = vpack.c.bf16 %v4857, %v4855
  %v4920 = vpack.c.bf16 %v4860, %v4858
  %v4921 = vpack.c.bf16 %v4861, %v4859
  %v4922 = vpack.c.bf16 %v4864, %v4862
  %v4923 = vpack.c.bf16 %v4865, %v4863
  %v4924 = vpack.c.bf16 %v4868, %v4866
  %v4925 = vpack.c.bf16 %v4869, %v4867
  %v4926 = vpack.c.bf16 %v4872, %v4870
  %v4927 = vpack.c.bf16 %v4873, %v4871
  %v4928 = vpack.c.bf16 %v4876, %v4874
  %v4929 = vpack.c.bf16 %v4877, %v4875
  %v4930 = vpack.c.bf16 %v4880, %v4878
  %v4931 = vpack.c.bf16 %v4881, %v4879
  %v4932 = vpack.c.bf16 %v4884, %v4882
  %v4933 = vpack.c.bf16 %v4885, %v4883
  %v4934 = vpack.c.bf16 %v4888, %v4886
  %v4935 = vpack.c.bf16 %v4889, %v4887
  %v4936 = vpack.c.bf16 %v4892, %v4890
  %v4937 = vpack.c.bf16 %v4893, %v4891
  %v4938 = vpack.c.bf16 %v4896, %v4894
  %v4939 = vpack.c.bf16 %v4897, %v4895
  %v4940 = vpack.c.bf16 %v4900, %v4898
  %v4941 = vpack.c.bf16 %v4901, %v4899
  %v4942 = vpack.c.bf16 %v4904, %v4902
  %v4943 = vpack.c.bf16 %v4905, %v4903
  %v4944 = vpack.c.bf16 %v4908, %v4906
  %v4945 = vpack.c.bf16 %v4909, %v4907
  %v4946 = vpack.c.bf16 %v4912, %v4910
  %v4947 = vpack.c.bf16 %v4913, %v4911
  %v4948 = vpack.c.bf16 %v4916, %v4914
  %v4949 = vpack.c.bf16 %v4917, %v4915
  %v4950 = vld [vmem:[%s6] sm:$0xf]
  %v4951 = vld [vmem:[%s6 + $0x4] sm:$0xf]
  %v4952 = vld [vmem:[%s6 + $0x8] sm:$0xf]
  %v4953 = vld [vmem:[%s6 + $0xc] sm:$0xf]
  %v4954 = vld [vmem:[%s6 + $0x10] sm:$0xf]
  %v4955 = vld [vmem:[%s6 + $0x14] sm:$0xf]
  %v4956 = vld [vmem:[%s6 + $0x18] sm:$0xf]
  %v4957 = vld [vmem:[%s6 + $0x1c] sm:$0xf]
  %v4958 = vld [vmem:[%s6 + $0x20] sm:$0xf]
  %v4959 = vld [vmem:[%s6 + $0x24] sm:$0xf]
  %v4960 = vld [vmem:[%s6 + $0x28] sm:$0xf]
  %v4961 = vld [vmem:[%s6 + $0x2c] sm:$0xf]
  %v4962 = vld [vmem:[%s6 + $0x30] sm:$0xf]
  %v4963 = vld [vmem:[%s6 + $0x34] sm:$0xf]
  %v4964 = vld [vmem:[%s6 + $0x38] sm:$0xf]
  %v4965 = vld [vmem:[%s6 + $0x3c] sm:$0xf]
  %v4966 = vld [vmem:[%s6 + $0x40] sm:$0xf]
  %v4967 = vld [vmem:[%s6 + $0x44] sm:$0xf]
  %v4968 = vld [vmem:[%s6 + $0x48] sm:$0xf]
  %v4969 = vld [vmem:[%s6 + $0x4c] sm:$0xf]
  %v4990 = vunpack.c.l.b16 %v4950
  %v4991 = vunpack.c.l.b16 %v4951
  %v4992 = vunpack.c.l.b16 %v4952
  %v4993 = vunpack.c.l.b16 %v4953
  %v4994 = vunpack.c.l.b16 %v4954
  %v4995 = vunpack.c.l.b16 %v4955
  %v4996 = vunpack.c.l.b16 %v4956
  %v4997 = vunpack.c.l.b16 %v4957
  %v4998 = vunpack.c.l.b16 %v4958
  %v4999 = vunpack.c.l.b16 %v4959
  %v5000 = vunpack.c.l.b16 %v4960
  %v5001 = vunpack.c.l.b16 %v4961
  %v5002 = vunpack.c.l.b16 %v4962
  %v5003 = vunpack.c.l.b16 %v4963
  %v5004 = vunpack.c.l.b16 %v4964
  %v5005 = vunpack.c.l.b16 %v4965
  %v5006 = vunpack.c.l.b16 %v4966
  %v5007 = vunpack.c.l.b16 %v4967
  %v5008 = vunpack.c.l.b16 %v4968
  %v5009 = vunpack.c.l.b16 %v4969
  %v5010 = vpack.c.b16 %v4991, %v4990
  %v5011 = vpack.c.b16 %v4993, %v4992
  %v5012 = vpack.c.b16 %v4995, %v4994
  %v5013 = vpack.c.b16 %v4997, %v4996
  %v5014 = vpack.c.b16 %v4999, %v4998
  %v5015 = vpack.c.b16 %v5001, %v5000
  %v5016 = vpack.c.b16 %v5003, %v5002
  %v5017 = vpack.c.b16 %v5005, %v5004
  %v5018 = vpack.c.b16 %v5007, %v5006
  %v5019 = vpack.c.b16 %v5009, %v5008
  %v5031 = vsel %vm267, %v4919, 0
  %v5034 = vsel %vm267, %v4921, 0
  %v5037 = vsel %vm267, %v4923, 0
  %v5040 = vsel %vm267, %v4925, 0
  %v5043 = vsel %vm267, %v4927, 0
  %v5046 = vsel %vm267, %v4929, 0
  %v5049 = vsel %vm267, %v4931, 0
  %v5052 = vsel %vm267, %v4933, 0
  %v5055 = vsel %vm267, %v4935, 0
  %v5058 = vsel %vm267, %v4937, 0
  %v5061 = vsel %vm267, %v4939, 0
  %v5064 = vsel %vm267, %v4941, 0
  %v5067 = vsel %vm267, %v4943, 0
  %v5070 = vsel %vm267, %v4945, 0
  %v5073 = vsel %vm267, %v4947, 0
  %v5076 = vsel %vm267, %v4949, 0
  %5078 = vmatpush.bf16.msra.mxu0 %v5017
  %5079 = vmatpush.bf16.msra.mxu0 %v5016
  %5080 = vmatpush.bf16.msra.mxu0 %v5015
  %5081 = vmatpush.bf16.msra.mxu0 %v5014
  %5082 = vmatpush.bf16.msra.mxu0 %v5013
  %5083 = vmatpush.bf16.msra.mxu0 %v5012
  %5084 = vmatpush.bf16.msra.mxu0 %v5011
  %5085 = vmatpush.bf16.msra.mxu0 %v5010
  %5086 = vmatmul.bf16.gmra.mxu0 %v4918
  %v5087 = vpop.f32.mrf.mxu0
  %v5088 = vadd.f32 0.0, %v5087
  %v5089 = vpop.f32.mrf.mxu0
  %v5090 = vadd.f32 0.0, %v5089
  %5091 = vmatmul.bf16.gmra.mxu0 %v4920
  %v5092 = vpop.f32.mrf.mxu0
  %v5093 = vadd.f32 0.0, %v5092
  %v5094 = vpop.f32.mrf.mxu0
  %v5095 = vadd.f32 0.0, %v5094
  %5096 = vmatmul.bf16.gmra.mxu0 %v4922
  %v5097 = vpop.f32.mrf.mxu0
  %v5098 = vadd.f32 0.0, %v5097
  %v5099 = vpop.f32.mrf.mxu0
  %v5100 = vadd.f32 0.0, %v5099
  %5101 = vmatmul.bf16.gmra.mxu0 %v4924
  %v5102 = vpop.f32.mrf.mxu0
  %v5103 = vadd.f32 0.0, %v5102
  %v5104 = vpop.f32.mrf.mxu0
  %v5105 = vadd.f32 0.0, %v5104
  %5106 = vmatmul.bf16.gmra.mxu0 %v4926
  %v5107 = vpop.f32.mrf.mxu0
  %v5108 = vadd.f32 0.0, %v5107
  %v5109 = vpop.f32.mrf.mxu0
  %v5110 = vadd.f32 0.0, %v5109
  %5111 = vmatmul.bf16.gmra.mxu0 %v4928
  %v5112 = vpop.f32.mrf.mxu0
  %v5113 = vadd.f32 0.0, %v5112
  %v5114 = vpop.f32.mrf.mxu0
  %v5115 = vadd.f32 0.0, %v5114
  %5116 = vmatmul.bf16.gmra.mxu0 %v4930
  %v5117 = vpop.f32.mrf.mxu0
  %v5118 = vadd.f32 0.0, %v5117
  %v5119 = vpop.f32.mrf.mxu0
  %v5120 = vadd.f32 0.0, %v5119
  %5121 = vmatmul.bf16.gmra.mxu0 %v4932
  %v5122 = vpop.f32.mrf.mxu0
  %v5123 = vadd.f32 0.0, %v5122
  %v5124 = vpop.f32.mrf.mxu0
  %v5125 = vadd.f32 0.0, %v5124
  %5126 = vmatmul.bf16.gmra.mxu0 %v4934
  %v5127 = vpop.f32.mrf.mxu0
  %v5128 = vadd.f32 0.0, %v5127
  %v5129 = vpop.f32.mrf.mxu0
  %v5130 = vadd.f32 0.0, %v5129
  %5131 = vmatmul.bf16.gmra.mxu0 %v4936
  %v5132 = vpop.f32.mrf.mxu0
  %v5133 = vadd.f32 0.0, %v5132
  %v5134 = vpop.f32.mrf.mxu0
  %v5135 = vadd.f32 0.0, %v5134
  %5136 = vmatmul.bf16.gmra.mxu0 %v4938
  %v5137 = vpop.f32.mrf.mxu0
  %v5138 = vadd.f32 0.0, %v5137
  %v5139 = vpop.f32.mrf.mxu0
  %v5140 = vadd.f32 0.0, %v5139
  %5141 = vmatmul.bf16.gmra.mxu0 %v4940
  %v5142 = vpop.f32.mrf.mxu0
  %v5143 = vadd.f32 0.0, %v5142
  %v5144 = vpop.f32.mrf.mxu0
  %v5145 = vadd.f32 0.0, %v5144
  %5146 = vmatmul.bf16.gmra.mxu0 %v4942
  %v5147 = vpop.f32.mrf.mxu0
  %v5148 = vadd.f32 0.0, %v5147
  %v5149 = vpop.f32.mrf.mxu0
  %v5150 = vadd.f32 0.0, %v5149
  %5151 = vmatmul.bf16.gmra.mxu0 %v4944
  %v5152 = vpop.f32.mrf.mxu0
  %v5153 = vadd.f32 0.0, %v5152
  %v5154 = vpop.f32.mrf.mxu0
  %v5155 = vadd.f32 0.0, %v5154
  %5156 = vmatmul.bf16.gmra.mxu0 %v4946
  %v5157 = vpop.f32.mrf.mxu0
  %v5158 = vadd.f32 0.0, %v5157
  %v5159 = vpop.f32.mrf.mxu0
  %v5160 = vadd.f32 0.0, %v5159
  %5161 = vmatmul.bf16.gmra.mxu0 %v4948
  %v5162 = vpop.f32.mrf.mxu0
  %v5163 = vadd.f32 0.0, %v5162
  %v5164 = vpop.f32.mrf.mxu0
  %v5165 = vadd.f32 0.0, %v5164
  %5166 = vdwg.mxu0
  %5167 = vmatpush.bf16.msra.mxu0 0
  %5168 = vmatpush.bf16.msra.mxu0 0
  %5169 = vmatpush.bf16.msra.mxu0 0
  %5170 = vmatpush.bf16.msra.mxu0 0
  %5171 = vmatpush.bf16.msra.mxu0 0
  %5172 = vmatpush.bf16.msra.mxu0 0
  %5173 = vmatpush.bf16.msra.mxu0 %v5019
  %5174 = vmatpush.bf16.msra.mxu0 %v5018
  %5175 = vmatmul.bf16.gmra.mxu0 %v5031
  %v5176 = vpop.f32.mrf.mxu0
  %v5177 = vadd.f32 %v5088, %v5176
  %v5178 = vpop.f32.mrf.mxu0
  %v5179 = vadd.f32 %v5090, %v5178
  %5180 = vmatmul.bf16.gmra.mxu0 %v5034
  %v5181 = vpop.f32.mrf.mxu0
  %v5182 = vadd.f32 %v5093, %v5181
  %v5183 = vpop.f32.mrf.mxu0
  %v5184 = vadd.f32 %v5095, %v5183
  %5185 = vmatmul.bf16.gmra.mxu0 %v5037
  %v5186 = vpop.f32.mrf.mxu0
  %v5187 = vadd.f32 %v5098, %v5186
  %v5188 = vpop.f32.mrf.mxu0
  %v5189 = vadd.f32 %v5100, %v5188
  %5190 = vmatmul.bf16.gmra.mxu0 %v5040
  %v5191 = vpop.f32.mrf.mxu0
  %v5192 = vadd.f32 %v5103, %v5191
  %v5193 = vpop.f32.mrf.mxu0
  %v5194 = vadd.f32 %v5105, %v5193
  %5195 = vmatmul.bf16.gmra.mxu0 %v5043
  %v5196 = vpop.f32.mrf.mxu0
  %v5197 = vadd.f32 %v5108, %v5196
  %v5198 = vpop.f32.mrf.mxu0
  %v5199 = vadd.f32 %v5110, %v5198
  %5200 = vmatmul.bf16.gmra.mxu0 %v5046
  %v5201 = vpop.f32.mrf.mxu0
  %v5202 = vadd.f32 %v5113, %v5201
  %v5203 = vpop.f32.mrf.mxu0
  %v5204 = vadd.f32 %v5115, %v5203
  %5205 = vmatmul.bf16.gmra.mxu0 %v5049
  %v5206 = vpop.f32.mrf.mxu0
  %v5207 = vadd.f32 %v5118, %v5206
  %v5208 = vpop.f32.mrf.mxu0
  %v5209 = vadd.f32 %v5120, %v5208
  %5210 = vmatmul.bf16.gmra.mxu0 %v5052
  %v5211 = vpop.f32.mrf.mxu0
  %v5212 = vadd.f32 %v5123, %v5211
  %v5213 = vpop.f32.mrf.mxu0
  %v5214 = vadd.f32 %v5125, %v5213
  %5215 = vmatmul.bf16.gmra.mxu0 %v5055
  %v5216 = vpop.f32.mrf.mxu0
  %v5217 = vadd.f32 %v5128, %v5216
  %v5218 = vpop.f32.mrf.mxu0
  %v5219 = vadd.f32 %v5130, %v5218
  %5220 = vmatmul.bf16.gmra.mxu0 %v5058
  %v5221 = vpop.f32.mrf.mxu0
  %v5222 = vadd.f32 %v5133, %v5221
  %v5223 = vpop.f32.mrf.mxu0
  %v5224 = vadd.f32 %v5135, %v5223
  %5225 = vmatmul.bf16.gmra.mxu0 %v5061
  %v5226 = vpop.f32.mrf.mxu0
  %v5227 = vadd.f32 %v5138, %v5226
  %v5228 = vpop.f32.mrf.mxu0
  %v5229 = vadd.f32 %v5140, %v5228
  %5230 = vmatmul.bf16.gmra.mxu0 %v5064
  %v5231 = vpop.f32.mrf.mxu0
  %v5232 = vadd.f32 %v5143, %v5231
  %v5233 = vpop.f32.mrf.mxu0
  %v5234 = vadd.f32 %v5145, %v5233
  %5235 = vmatmul.bf16.gmra.mxu0 %v5067
  %v5236 = vpop.f32.mrf.mxu0
  %v5237 = vadd.f32 %v5148, %v5236
  %v5238 = vpop.f32.mrf.mxu0
  %v5239 = vadd.f32 %v5150, %v5238
  %5240 = vmatmul.bf16.gmra.mxu0 %v5070
  %v5241 = vpop.f32.mrf.mxu0
  %v5242 = vadd.f32 %v5153, %v5241
  %v5243 = vpop.f32.mrf.mxu0
  %v5244 = vadd.f32 %v5155, %v5243
  %5245 = vmatmul.bf16.gmra.mxu0 %v5073
  %v5246 = vpop.f32.mrf.mxu0
  %v5247 = vadd.f32 %v5158, %v5246
  %v5248 = vpop.f32.mrf.mxu0
  %v5249 = vadd.f32 %v5160, %v5248
  %5250 = vmatmul.bf16.gmra.mxu0 %v5076
  %v5251 = vpop.f32.mrf.mxu0
  %v5252 = vadd.f32 %v5163, %v5251
  %v5253 = vpop.f32.mrf.mxu0
  %v5254 = vadd.f32 %v5165, %v5253
  %5255 = vdwg.mxu0
  %v5288 = vrot.slane %v5177, 2
  %v5289 = vrot.slane %v5179, 2
  %v5290 = vsel %vm740, %v5288, %v5289
  %v5291 = vrot.slane %v5182, 2
  %v5292 = vsel %vm740, %v5289, %v5291
  %v5293 = vrot.slane %v5184, 2
  %v5294 = vsel %vm740, %v5291, %v5293
  %v5295 = vrot.slane %v5187, 2
  %v5296 = vsel %vm740, %v5293, %v5295
  %v5297 = vrot.slane %v5189, 2
  %v5298 = vsel %vm740, %v5295, %v5297
  %v5299 = vrot.slane %v5192, 2
  %v5300 = vsel %vm740, %v5297, %v5299
  %v5301 = vrot.slane %v5194, 2
  %v5302 = vsel %vm740, %v5299, %v5301
  %v5303 = vrot.slane %v5197, 2
  %v5304 = vsel %vm740, %v5301, %v5303
  %v5305 = vrot.slane %v5199, 2
  %v5306 = vsel %vm740, %v5303, %v5305
  %v5307 = vrot.slane %v5202, 2
  %v5308 = vsel %vm740, %v5305, %v5307
  %v5309 = vrot.slane %v5204, 2
  %v5310 = vsel %vm740, %v5307, %v5309
  %v5311 = vrot.slane %v5207, 2
  %v5312 = vsel %vm740, %v5309, %v5311
  %v5313 = vrot.slane %v5209, 2
  %v5314 = vsel %vm740, %v5311, %v5313
  %v5315 = vrot.slane %v5212, 2
  %v5316 = vsel %vm740, %v5313, %v5315
  %v5317 = vrot.slane %v5214, 2
  %v5318 = vsel %vm740, %v5315, %v5317
  %v5319 = vrot.slane %v5217, 2
  %v5320 = vsel %vm740, %v5317, %v5319
  %v5321 = vrot.slane %v5219, 2
  %v5322 = vsel %vm740, %v5319, %v5321
  %v5323 = vrot.slane %v5222, 2
  %v5324 = vsel %vm740, %v5321, %v5323
  %v5325 = vrot.slane %v5224, 2
  %v5326 = vsel %vm740, %v5323, %v5325
  %v5327 = vrot.slane %v5227, 2
  %v5328 = vsel %vm740, %v5325, %v5327
  %v5329 = vrot.slane %v5229, 2
  %v5330 = vsel %vm740, %v5327, %v5329
  %v5331 = vrot.slane %v5232, 2
  %v5332 = vsel %vm740, %v5329, %v5331
  %v5333 = vrot.slane %v5234, 2
  %v5334 = vsel %vm740, %v5331, %v5333
  %v5335 = vrot.slane %v5237, 2
  %v5336 = vsel %vm740, %v5333, %v5335
  %v5337 = vrot.slane %v5239, 2
  %v5338 = vsel %vm740, %v5335, %v5337
  %v5339 = vrot.slane %v5242, 2
  %v5340 = vsel %vm740, %v5337, %v5339
  %v5341 = vrot.slane %v5244, 2
  %v5342 = vsel %vm740, %v5339, %v5341
  %v5343 = vrot.slane %v5247, 2
  %v5344 = vsel %vm740, %v5341, %v5343
  %v5345 = vrot.slane %v5249, 2
  %v5346 = vsel %vm740, %v5343, %v5345
  %v5347 = vrot.slane %v5252, 2
  %v5348 = vsel %vm740, %v5345, %v5347
  %v5349 = vrot.slane %v5254, 2
  %v5350 = vsel %vm740, %v5347, %v5349
  %v5383 = vsel %vm740, %v5349, 0.0
  %v5384 = vadd.f32 %v5177, %v5290
  %v5385 = vadd.f32 %v5179, %v5292
  %v5386 = vadd.f32 %v5182, %v5294
  %v5387 = vadd.f32 %v5184, %v5296
  %v5388 = vadd.f32 %v5187, %v5298
  %v5389 = vadd.f32 %v5189, %v5300
  %v5390 = vadd.f32 %v5192, %v5302
  %v5391 = vadd.f32 %v5194, %v5304
  %v5392 = vadd.f32 %v5197, %v5306
  %v5393 = vadd.f32 %v5199, %v5308
  %v5394 = vadd.f32 %v5202, %v5310
  %v5395 = vadd.f32 %v5204, %v5312
  %v5396 = vadd.f32 %v5207, %v5314
  %v5397 = vadd.f32 %v5209, %v5316
  %v5398 = vadd.f32 %v5212, %v5318
  %v5399 = vadd.f32 %v5214, %v5320
  %v5400 = vadd.f32 %v5217, %v5322
  %v5401 = vadd.f32 %v5219, %v5324
  %v5402 = vadd.f32 %v5222, %v5326
  %v5403 = vadd.f32 %v5224, %v5328
  %v5404 = vadd.f32 %v5227, %v5330
  %v5405 = vadd.f32 %v5229, %v5332
  %v5406 = vadd.f32 %v5232, %v5334
  %v5407 = vadd.f32 %v5234, %v5336
  %v5408 = vadd.f32 %v5237, %v5338
  %v5409 = vadd.f32 %v5239, %v5340
  %v5410 = vadd.f32 %v5242, %v5342
  %v5411 = vadd.f32 %v5244, %v5344
  %v5412 = vadd.f32 %v5247, %v5346
  %v5413 = vadd.f32 %v5249, %v5348
  %v5414 = vadd.f32 %v5252, %v5350
  %v5415 = vadd.f32 %v5254, %v5383
  %v5416 = vtanh.pop %v5384
  %v5417 = vtanh.pop %v5385
  %v5418 = vtanh.pop %v5386
  %v5419 = vtanh.pop %v5387
  %v5420 = vtanh.pop %v5388
  %v5421 = vtanh.pop %v5389
  %v5422 = vtanh.pop %v5390
  %v5423 = vtanh.pop %v5391
  %v5424 = vtanh.pop %v5392
  %v5425 = vtanh.pop %v5393
  %v5426 = vtanh.pop %v5394
  %v5427 = vtanh.pop %v5395
  %v5428 = vtanh.pop %v5396
  %v5429 = vtanh.pop %v5397
  %v5430 = vtanh.pop %v5398
  %v5431 = vtanh.pop %v5399
  %v5432 = vtanh.pop %v5400
  %v5433 = vtanh.pop %v5401
  %v5434 = vtanh.pop %v5402
  %v5435 = vtanh.pop %v5403
  %v5436 = vtanh.pop %v5404
  %v5437 = vtanh.pop %v5405
  %v5438 = vtanh.pop %v5406
  %v5439 = vtanh.pop %v5407
  %v5440 = vtanh.pop %v5408
  %v5441 = vtanh.pop %v5409
  %v5442 = vtanh.pop %v5410
  %v5443 = vtanh.pop %v5411
  %v5444 = vtanh.pop %v5412
  %v5445 = vtanh.pop %v5413
  %v5446 = vtanh.pop %v5414
  %v5447 = vtanh.pop %v5415
  %v5448 = vpack.c.bf16 %v5417, %v5416
  %v5449 = vpack.c.bf16 %v5419, %v5418
  %v5450 = vpack.c.bf16 %v5421, %v5420
  %v5451 = vpack.c.bf16 %v5423, %v5422
  %v5452 = vpack.c.bf16 %v5425, %v5424
  %v5453 = vpack.c.bf16 %v5427, %v5426
  %v5454 = vpack.c.bf16 %v5429, %v5428
  %v5455 = vpack.c.bf16 %v5431, %v5430
  %v5456 = vpack.c.bf16 %v5433, %v5432
  %v5457 = vpack.c.bf16 %v5435, %v5434
  %v5458 = vpack.c.bf16 %v5437, %v5436
  %v5459 = vpack.c.bf16 %v5439, %v5438
  %v5460 = vpack.c.bf16 %v5441, %v5440
  %v5461 = vpack.c.bf16 %v5443, %v5442
  %v5462 = vpack.c.bf16 %v5445, %v5444
  %v5463 = vpack.c.bf16 %v5447, %v5446
  %v5464 = vlaneseq
  %v5465 = vand.u32 %v5464, 127
  %v5466 = vadd.s32 %v5465, 128
  %v5467 = vlaneseq
  %v5468 = vshrl.u32 %v5467, 7
  %v5469 = vmul.u32 %v5468, 32
  %v5470 = vsub.s32 %v5465, %v5469
  %v5471 = vsub.s32 %v5466, %v5469
  %v5472 = vld [vmem:[%s8] sm:$0x1]
  %vm5473 = vcmp.eq.s32.totalorder %v5470, 0
  %vm5474 = vcmp.eq.s32.totalorder %v5471, 0
  %v5475 = vsel %vm5473, 1, 0
  %v5476 = vsel %vm5474, 1, 0
  %v5477 = vcvt.s32.f32 %v5475
  %v5478 = vcvt.s32.f32 %v5476
  %v5479 = vpack.c.bf16 %v5477, %v5477
  %v5480 = vpack.c.bf16 %v5478, %v5478
  %5481 = vmatpush.bf16.msra.mxu0 %v5455
  %5482 = vmatpush.bf16.msra.mxu0 %v5454
  %5483 = vmatpush.bf16.msra.mxu0 %v5453
  %5484 = vmatpush.bf16.msra.mxu0 %v5452
  %5485 = vmatpush.bf16.msra.mxu0 %v5451
  %5486 = vmatpush.bf16.msra.mxu0 %v5450
  %5487 = vmatpush.bf16.msra.mxu0 %v5449
  %5488 = vmatpush.bf16.msra.mxu0 %v5448
  %5489 = vmatmul.bf16.gmra.mxu0 %v5479
  %v5490 = vpop.f32.mrf.mxu0
  %v5491 = vadd.f32 0.0, %v5490
  %v5492 = vpop.f32.mrf.mxu0
  %5493 = vdwg.mxu0
  %5494 = vmatpush.bf16.msra.mxu0 %v5463
  %5495 = vmatpush.bf16.msra.mxu0 %v5462
  %5496 = vmatpush.bf16.msra.mxu0 %v5461
  %5497 = vmatpush.bf16.msra.mxu0 %v5460
  %5498 = vmatpush.bf16.msra.mxu0 %v5459
  %5499 = vmatpush.bf16.msra.mxu0 %v5458
  %5500 = vmatpush.bf16.msra.mxu0 %v5457
  %5501 = vmatpush.bf16.msra.mxu0 %v5456
  %5502 = vmatmul.bf16.gmra.mxu0 %v5480
  %v5503 = vpop.f32.mrf.mxu0
  %v5504 = vadd.f32 %v5491, %v5503
  %v5505 = vpop.f32.mrf.mxu0
  %5506 = vdwg.mxu0
  %v5507 = vpack.c.bf16 %v5504, %v5504
  %v5508 = vld [vmem:[%s7] sm:$0xf]
  %v5509 = vld [vmem:[%s7 + $0x4] sm:$0xf]
  %v5510 = vld [vmem:[%s7 + $0x8] sm:$0xf]
  %v5511 = vld [vmem:[%s7 + $0xc] sm:$0xf]
  %v5512 = vld [vmem:[%s7 + $0x10] sm:$0xf]
  %v5513 = vld [vmem:[%s7 + $0x14] sm:$0xf]
  %v5514 = vld [vmem:[%s7 + $0x18] sm:$0xf]
  %v5515 = vld [vmem:[%s7 + $0x1c] sm:$0xf]
  %v5516 = vld [vmem:[%s7 + $0x20] sm:$0xf]
  %v5517 = vld [vmem:[%s7 + $0x24] sm:$0xf]
  %v5528 = vunpack.c.l.b16 %v5508
  %v5529 = vunpack.c.l.b16 %v5509
  %v5530 = vunpack.c.l.b16 %v5510
  %v5531 = vunpack.c.l.b16 %v5511
  %v5532 = vunpack.c.l.b16 %v5512
  %v5533 = vunpack.c.l.b16 %v5513
  %v5534 = vunpack.c.l.b16 %v5514
  %v5535 = vunpack.c.l.b16 %v5515
  %v5536 = vunpack.c.l.b16 %v5516
  %v5537 = vunpack.c.l.b16 %v5517
  %v5538 = vpack.c.b16 %v5529, %v5528
  %v5539 = vpack.c.b16 %v5531, %v5530
  %v5540 = vpack.c.b16 %v5533, %v5532
  %v5541 = vpack.c.b16 %v5535, %v5534
  %v5542 = vpack.c.b16 %v5537, %v5536
  %vm5548 = vcmask 654336
  %v5550 = vsel %vm5548, %v5507, 0
  %5552 = vmatpush.bf16.msra.mxu0 0
  %5553 = vmatpush.bf16.msra.mxu0 0
  %5554 = vmatpush.bf16.msra.mxu0 0
  %5555 = vmatpush.bf16.msra.mxu0 %v5542
  %5556 = vmatpush.bf16.msra.mxu0 %v5541
  %5557 = vmatpush.bf16.msra.mxu0 %v5540
  %5558 = vmatpush.bf16.msra.mxu0 %v5539
  %5559 = vmatpush.bf16.msra.mxu0 %v5538
  %5560 = vmatmul.bf16.gmra.mxu0 %v5550
  %v5561 = vpop.f32.mrf.mxu0
  %v5562 = vadd.f32 0.0, %v5561
  %v5563 = vpop.f32.mrf.mxu0
  %5564 = vdwg.mxu0
  %v5566 = vperm.slane %v5472, 0
  %v5568 = vadd.f32 %v5566, %v5562
  %vm5569 = vcmp.eq.s32.totalorder %v5470, 4
  %vm5570 = vcmp.eq.s32.totalorder %v5471, 4
  %v5571 = vsel %vm5569, 1, 0
  %v5572 = vsel %vm5570, 1, 0
  %v5573 = vcvt.s32.f32 %v5571
  %v5574 = vcvt.s32.f32 %v5572
  %v5575 = vpack.c.bf16 %v5573, %v5573
  %v5576 = vpack.c.bf16 %v5574, %v5574
  %5577 = vmatpush.bf16.msra.mxu0 %v5455
  %5578 = vmatpush.bf16.msra.mxu0 %v5454
  %5579 = vmatpush.bf16.msra.mxu0 %v5453
  %5580 = vmatpush.bf16.msra.mxu0 %v5452
  %5581 = vmatpush.bf16.msra.mxu0 %v5451
  %5582 = vmatpush.bf16.msra.mxu0 %v5450
  %5583 = vmatpush.bf16.msra.mxu0 %v5449
  %5584 = vmatpush.bf16.msra.mxu0 %v5448
  %5585 = vmatmul.bf16.gmra.mxu0 %v5575
  %v5586 = vpop.f32.mrf.mxu0
  %v5587 = vadd.f32 0.0, %v5586
  %v5588 = vpop.f32.mrf.mxu0
  %5589 = vdwg.mxu0
  %5590 = vmatpush.bf16.msra.mxu0 %v5463
  %5591 = vmatpush.bf16.msra.mxu0 %v5462
  %5592 = vmatpush.bf16.msra.mxu0 %v5461
  %5593 = vmatpush.bf16.msra.mxu0 %v5460
  %5594 = vmatpush.bf16.msra.mxu0 %v5459
  %5595 = vmatpush.bf16.msra.mxu0 %v5458
  %5596 = vmatpush.bf16.msra.mxu0 %v5457
  %5597 = vmatpush.bf16.msra.mxu0 %v5456
  %5598 = vmatmul.bf16.gmra.mxu0 %v5576
  %v5599 = vpop.f32.mrf.mxu0
  %v5600 = vadd.f32 %v5587, %v5599
  %v5601 = vpop.f32.mrf.mxu0
  %5602 = vdwg.mxu0
  %v5603 = vpack.c.bf16 %v5600, %v5600
  %s5604 = scalar_lea.vmem %s7, 40
  %v5605 = vld [vmem:[%s5604] sm:$0xf]
  %v5606 = vld [vmem:[%s5604 + $0x4] sm:$0xf]
  %v5607 = vld [vmem:[%s5604 + $0x8] sm:$0xf]
  %v5608 = vld [vmem:[%s5604 + $0xc] sm:$0xf]
  %v5609 = vld [vmem:[%s5604 + $0x10] sm:$0xf]
  %v5610 = vld [vmem:[%s5604 + $0x14] sm:$0xf]
  %v5611 = vld [vmem:[%s5604 + $0x18] sm:$0xf]
  %v5612 = vld [vmem:[%s5604 + $0x1c] sm:$0xf]
  %v5613 = vld [vmem:[%s5604 + $0x20] sm:$0xf]
  %v5614 = vld [vmem:[%s5604 + $0x24] sm:$0xf]
  %v5625 = vunpack.c.l.b16 %v5605
  %v5626 = vunpack.c.l.b16 %v5606
  %v5627 = vunpack.c.l.b16 %v5607
  %v5628 = vunpack.c.l.b16 %v5608
  %v5629 = vunpack.c.l.b16 %v5609
  %v5630 = vunpack.c.l.b16 %v5610
  %v5631 = vunpack.c.l.b16 %v5611
  %v5632 = vunpack.c.l.b16 %v5612
  %v5633 = vunpack.c.l.b16 %v5613
  %v5634 = vunpack.c.l.b16 %v5614
  %v5635 = vpack.c.b16 %v5626, %v5625
  %v5636 = vpack.c.b16 %v5628, %v5627
  %v5637 = vpack.c.b16 %v5630, %v5629
  %v5638 = vpack.c.b16 %v5632, %v5631
  %v5639 = vpack.c.b16 %v5634, %v5633
  %v5646 = vsel %vm5548, %v5603, 0
  %5648 = vmatpush.bf16.msra.mxu0 0
  %5649 = vmatpush.bf16.msra.mxu0 0
  %5650 = vmatpush.bf16.msra.mxu0 0
  %5651 = vmatpush.bf16.msra.mxu0 %v5639
  %5652 = vmatpush.bf16.msra.mxu0 %v5638
  %5653 = vmatpush.bf16.msra.mxu0 %v5637
  %5654 = vmatpush.bf16.msra.mxu0 %v5636
  %5655 = vmatpush.bf16.msra.mxu0 %v5635
  %5656 = vmatmul.bf16.gmra.mxu0 %v5646
  %v5657 = vpop.f32.mrf.mxu0
  %v5658 = vadd.f32 0.0, %v5657
  %v5659 = vpop.f32.mrf.mxu0
  %5660 = vdwg.mxu0
  %v5661 = vadd.f32 %v5568, %v5658
  %vm5662 = vcmp.eq.s32.totalorder %v5470, 8
  %vm5663 = vcmp.eq.s32.totalorder %v5471, 8
  %v5664 = vsel %vm5662, 1, 0
  %v5665 = vsel %vm5663, 1, 0
  %v5666 = vcvt.s32.f32 %v5664
  %v5667 = vcvt.s32.f32 %v5665
  %v5668 = vpack.c.bf16 %v5666, %v5666
  %v5669 = vpack.c.bf16 %v5667, %v5667
  %5670 = vmatpush.bf16.msra.mxu0 %v5455
  %5671 = vmatpush.bf16.msra.mxu0 %v5454
  %5672 = vmatpush.bf16.msra.mxu0 %v5453
  %5673 = vmatpush.bf16.msra.mxu0 %v5452
  %5674 = vmatpush.bf16.msra.mxu0 %v5451
  %5675 = vmatpush.bf16.msra.mxu0 %v5450
  %5676 = vmatpush.bf16.msra.mxu0 %v5449
  %5677 = vmatpush.bf16.msra.mxu0 %v5448
  %5678 = vmatmul.bf16.gmra.mxu0 %v5668
  %v5679 = vpop.f32.mrf.mxu0
  %v5680 = vadd.f32 0.0, %v5679
  %v5681 = vpop.f32.mrf.mxu0
  %5682 = vdwg.mxu0
  %5683 = vmatpush.bf16.msra.mxu0 %v5463
  %5684 = vmatpush.bf16.msra.mxu0 %v5462
  %5685 = vmatpush.bf16.msra.mxu0 %v5461
  %5686 = vmatpush.bf16.msra.mxu0 %v5460
  %5687 = vmatpush.bf16.msra.mxu0 %v5459
  %5688 = vmatpush.bf16.msra.mxu0 %v5458
  %5689 = vmatpush.bf16.msra.mxu0 %v5457
  %5690 = vmatpush.bf16.msra.mxu0 %v5456
  %5691 = vmatmul.bf16.gmra.mxu0 %v5669
  %v5692 = vpop.f32.mrf.mxu0
  %v5693 = vadd.f32 %v5680, %v5692
  %v5694 = vpop.f32.mrf.mxu0
  %5695 = vdwg.mxu0
  %v5696 = vpack.c.bf16 %v5693, %v5693
  %s5697 = scalar_lea.vmem %s7, 80
  %v5698 = vld [vmem:[%s5697] sm:$0xf]
  %v5699 = vld [vmem:[%s5697 + $0x4] sm:$0xf]
  %v5700 = vld [vmem:[%s5697 + $0x8] sm:$0xf]
  %v5701 = vld [vmem:[%s5697 + $0xc] sm:$0xf]
  %v5702 = vld [vmem:[%s5697 + $0x10] sm:$0xf]
  %v5703 = vld [vmem:[%s5697 + $0x14] sm:$0xf]
  %v5704 = vld [vmem:[%s5697 + $0x18] sm:$0xf]
  %v5705 = vld [vmem:[%s5697 + $0x1c] sm:$0xf]
  %v5706 = vld [vmem:[%s5697 + $0x20] sm:$0xf]
  %v5707 = vld [vmem:[%s5697 + $0x24] sm:$0xf]
  %v5718 = vunpack.c.l.b16 %v5698
  %v5719 = vunpack.c.l.b16 %v5699
  %v5720 = vunpack.c.l.b16 %v5700
  %v5721 = vunpack.c.l.b16 %v5701
  %v5722 = vunpack.c.l.b16 %v5702
  %v5723 = vunpack.c.l.b16 %v5703
  %v5724 = vunpack.c.l.b16 %v5704
  %v5725 = vunpack.c.l.b16 %v5705
  %v5726 = vunpack.c.l.b16 %v5706
  %v5727 = vunpack.c.l.b16 %v5707
  %v5728 = vpack.c.b16 %v5719, %v5718
  %v5729 = vpack.c.b16 %v5721, %v5720
  %v5730 = vpack.c.b16 %v5723, %v5722
  %v5731 = vpack.c.b16 %v5725, %v5724
  %v5732 = vpack.c.b16 %v5727, %v5726
  %v5739 = vsel %vm5548, %v5696, 0
  %5741 = vmatpush.bf16.msra.mxu0 0
  %5742 = vmatpush.bf16.msra.mxu0 0
  %5743 = vmatpush.bf16.msra.mxu0 0
  %5744 = vmatpush.bf16.msra.mxu0 %v5732
  %5745 = vmatpush.bf16.msra.mxu0 %v5731
  %5746 = vmatpush.bf16.msra.mxu0 %v5730
  %5747 = vmatpush.bf16.msra.mxu0 %v5729
  %5748 = vmatpush.bf16.msra.mxu0 %v5728
  %5749 = vmatmul.bf16.gmra.mxu0 %v5739
  %v5750 = vpop.f32.mrf.mxu0
  %v5751 = vadd.f32 0.0, %v5750
  %v5752 = vpop.f32.mrf.mxu0
  %5753 = vdwg.mxu0
  %v5754 = vadd.f32 %v5661, %v5751
  %vm5755 = vcmp.eq.s32.totalorder %v5470, 12
  %vm5756 = vcmp.eq.s32.totalorder %v5471, 12
  %v5757 = vsel %vm5755, 1, 0
  %v5758 = vsel %vm5756, 1, 0
  %v5759 = vcvt.s32.f32 %v5757
  %v5760 = vcvt.s32.f32 %v5758
  %v5761 = vpack.c.bf16 %v5759, %v5759
  %v5762 = vpack.c.bf16 %v5760, %v5760
  %5763 = vmatpush.bf16.msra.mxu0 %v5455
  %5764 = vmatpush.bf16.msra.mxu0 %v5454
  %5765 = vmatpush.bf16.msra.mxu0 %v5453
  %5766 = vmatpush.bf16.msra.mxu0 %v5452
  %5767 = vmatpush.bf16.msra.mxu0 %v5451
  %5768 = vmatpush.bf16.msra.mxu0 %v5450
  %5769 = vmatpush.bf16.msra.mxu0 %v5449
  %5770 = vmatpush.bf16.msra.mxu0 %v5448
  %5771 = vmatmul.bf16.gmra.mxu0 %v5761
  %v5772 = vpop.f32.mrf.mxu0
  %v5773 = vadd.f32 0.0, %v5772
  %v5774 = vpop.f32.mrf.mxu0
  %5775 = vdwg.mxu0
  %5776 = vmatpush.bf16.msra.mxu0 %v5463
  %5777 = vmatpush.bf16.msra.mxu0 %v5462
  %5778 = vmatpush.bf16.msra.mxu0 %v5461
  %5779 = vmatpush.bf16.msra.mxu0 %v5460
  %5780 = vmatpush.bf16.msra.mxu0 %v5459
  %5781 = vmatpush.bf16.msra.mxu0 %v5458
  %5782 = vmatpush.bf16.msra.mxu0 %v5457
  %5783 = vmatpush.bf16.msra.mxu0 %v5456
  %5784 = vmatmul.bf16.gmra.mxu0 %v5762
  %v5785 = vpop.f32.mrf.mxu0
  %v5786 = vadd.f32 %v5773, %v5785
  %v5787 = vpop.f32.mrf.mxu0
  %5788 = vdwg.mxu0
  %v5789 = vpack.c.bf16 %v5786, %v5786
  %s5790 = scalar_lea.vmem %s7, 120
  %v5791 = vld [vmem:[%s5790] sm:$0xf]
  %v5792 = vld [vmem:[%s5790 + $0x4] sm:$0xf]
  %v5793 = vld [vmem:[%s5790 + $0x8] sm:$0xf]
  %v5794 = vld [vmem:[%s5790 + $0xc] sm:$0xf]
  %v5795 = vld [vmem:[%s5790 + $0x10] sm:$0xf]
  %v5796 = vld [vmem:[%s5790 + $0x14] sm:$0xf]
  %v5797 = vld [vmem:[%s5790 + $0x18] sm:$0xf]
  %v5798 = vld [vmem:[%s5790 + $0x1c] sm:$0xf]
  %v5799 = vld [vmem:[%s5790 + $0x20] sm:$0xf]
  %v5800 = vld [vmem:[%s5790 + $0x24] sm:$0xf]
  %v5811 = vunpack.c.l.b16 %v5791
  %v5812 = vunpack.c.l.b16 %v5792
  %v5813 = vunpack.c.l.b16 %v5793
  %v5814 = vunpack.c.l.b16 %v5794
  %v5815 = vunpack.c.l.b16 %v5795
  %v5816 = vunpack.c.l.b16 %v5796
  %v5817 = vunpack.c.l.b16 %v5797
  %v5818 = vunpack.c.l.b16 %v5798
  %v5819 = vunpack.c.l.b16 %v5799
  %v5820 = vunpack.c.l.b16 %v5800
  %v5821 = vpack.c.b16 %v5812, %v5811
  %v5822 = vpack.c.b16 %v5814, %v5813
  %v5823 = vpack.c.b16 %v5816, %v5815
  %v5824 = vpack.c.b16 %v5818, %v5817
  %v5825 = vpack.c.b16 %v5820, %v5819
  %v5832 = vsel %vm5548, %v5789, 0
  %5834 = vmatpush.bf16.msra.mxu0 0
  %5835 = vmatpush.bf16.msra.mxu0 0
  %5836 = vmatpush.bf16.msra.mxu0 0
  %5837 = vmatpush.bf16.msra.mxu0 %v5825
  %5838 = vmatpush.bf16.msra.mxu0 %v5824
  %5839 = vmatpush.bf16.msra.mxu0 %v5823
  %5840 = vmatpush.bf16.msra.mxu0 %v5822
  %5841 = vmatpush.bf16.msra.mxu0 %v5821
  %5842 = vmatmul.bf16.gmra.mxu0 %v5832
  %v5843 = vpop.f32.mrf.mxu0
  %v5844 = vadd.f32 0.0, %v5843
  %v5845 = vpop.f32.mrf.mxu0
  %5846 = vdwg.mxu0
  %v5847 = vadd.f32 %v5754, %v5844
  %vm5848 = vcmp.eq.s32.totalorder %v5470, 16
  %vm5849 = vcmp.eq.s32.totalorder %v5471, 16
  %v5850 = vsel %vm5848, 1, 0
  %v5851 = vsel %vm5849, 1, 0
  %v5852 = vcvt.s32.f32 %v5850
  %v5853 = vcvt.s32.f32 %v5851
  %v5854 = vpack.c.bf16 %v5852, %v5852
  %v5855 = vpack.c.bf16 %v5853, %v5853
  %5856 = vmatpush.bf16.msra.mxu0 %v5455
  %5857 = vmatpush.bf16.msra.mxu0 %v5454
  %5858 = vmatpush.bf16.msra.mxu0 %v5453
  %5859 = vmatpush.bf16.msra.mxu0 %v5452
  %5860 = vmatpush.bf16.msra.mxu0 %v5451
  %5861 = vmatpush.bf16.msra.mxu0 %v5450
  %5862 = vmatpush.bf16.msra.mxu0 %v5449
  %5863 = vmatpush.bf16.msra.mxu0 %v5448
  %5864 = vmatmul.bf16.gmra.mxu0 %v5854
  %v5865 = vpop.f32.mrf.mxu0
  %v5866 = vadd.f32 0.0, %v5865
  %v5867 = vpop.f32.mrf.mxu0
  %5868 = vdwg.mxu0
  %5869 = vmatpush.bf16.msra.mxu0 %v5463
  %5870 = vmatpush.bf16.msra.mxu0 %v5462
  %5871 = vmatpush.bf16.msra.mxu0 %v5461
  %5872 = vmatpush.bf16.msra.mxu0 %v5460
  %5873 = vmatpush.bf16.msra.mxu0 %v5459
  %5874 = vmatpush.bf16.msra.mxu0 %v5458
  %5875 = vmatpush.bf16.msra.mxu0 %v5457
  %5876 = vmatpush.bf16.msra.mxu0 %v5456
  %5877 = vmatmul.bf16.gmra.mxu0 %v5855
  %v5878 = vpop.f32.mrf.mxu0
  %v5879 = vadd.f32 %v5866, %v5878
  %v5880 = vpop.f32.mrf.mxu0
  %5881 = vdwg.mxu0
  %v5882 = vpack.c.bf16 %v5879, %v5879
  %s5883 = scalar_lea.vmem %s7, 160
  %v5884 = vld [vmem:[%s5883] sm:$0xf]
  %v5885 = vld [vmem:[%s5883 + $0x4] sm:$0xf]
  %v5886 = vld [vmem:[%s5883 + $0x8] sm:$0xf]
  %v5887 = vld [vmem:[%s5883 + $0xc] sm:$0xf]
  %v5888 = vld [vmem:[%s5883 + $0x10] sm:$0xf]
  %v5889 = vld [vmem:[%s5883 + $0x14] sm:$0xf]
  %v5890 = vld [vmem:[%s5883 + $0x18] sm:$0xf]
  %v5891 = vld [vmem:[%s5883 + $0x1c] sm:$0xf]
  %v5892 = vld [vmem:[%s5883 + $0x20] sm:$0xf]
  %v5893 = vld [vmem:[%s5883 + $0x24] sm:$0xf]
  %v5904 = vunpack.c.l.b16 %v5884
  %v5905 = vunpack.c.l.b16 %v5885
  %v5906 = vunpack.c.l.b16 %v5886
  %v5907 = vunpack.c.l.b16 %v5887
  %v5908 = vunpack.c.l.b16 %v5888
  %v5909 = vunpack.c.l.b16 %v5889
  %v5910 = vunpack.c.l.b16 %v5890
  %v5911 = vunpack.c.l.b16 %v5891
  %v5912 = vunpack.c.l.b16 %v5892
  %v5913 = vunpack.c.l.b16 %v5893
  %v5914 = vpack.c.b16 %v5905, %v5904
  %v5915 = vpack.c.b16 %v5907, %v5906
  %v5916 = vpack.c.b16 %v5909, %v5908
  %v5917 = vpack.c.b16 %v5911, %v5910
  %v5918 = vpack.c.b16 %v5913, %v5912
  %v5925 = vsel %vm5548, %v5882, 0
  %5927 = vmatpush.bf16.msra.mxu0 0
  %5928 = vmatpush.bf16.msra.mxu0 0
  %5929 = vmatpush.bf16.msra.mxu0 0
  %5930 = vmatpush.bf16.msra.mxu0 %v5918
  %5931 = vmatpush.bf16.msra.mxu0 %v5917
  %5932 = vmatpush.bf16.msra.mxu0 %v5916
  %5933 = vmatpush.bf16.msra.mxu0 %v5915
  %5934 = vmatpush.bf16.msra.mxu0 %v5914
  %5935 = vmatmul.bf16.gmra.mxu0 %v5925
  %v5936 = vpop.f32.mrf.mxu0
  %v5937 = vadd.f32 0.0, %v5936
  %v5938 = vpop.f32.mrf.mxu0
  %5939 = vdwg.mxu0
  %v5940 = vadd.f32 %v5847, %v5937
  %v5941 = vtanh.pop %v5940
  %v5942 = vpack.c.bf16 %v5941, %v5941
  %v5943 = vld [vmem:[%s9] sm:$0xf]
  %v5944 = vld [vmem:[%s9 + $0x4] sm:$0xf]
  %v5945 = vld [vmem:[%s9 + $0x8] sm:$0xf]
  %v5946 = vld [vmem:[%s9 + $0xc] sm:$0xf]
  %v5947 = vld [vmem:[%s9 + $0x10] sm:$0xf]
  %v5948 = vld [vmem:[%s9 + $0x14] sm:$0xf]
  %v5949 = vld [vmem:[%s9 + $0x18] sm:$0xf]
  %v5950 = vld [vmem:[%s9 + $0x1c] sm:$0xf]
  %v5951 = vld [vmem:[%s9 + $0x20] sm:$0xf]
  %v5952 = vld [vmem:[%s9 + $0x24] sm:$0xf]
  %v5953 = vld [vmem:[%s9 + $0x28] sm:$0xf]
  %v5954 = vld [vmem:[%s9 + $0x2c] sm:$0xf]
  %v5955 = vld [vmem:[%s9 + $0x30] sm:$0xf]
  %v5956 = vld [vmem:[%s9 + $0x34] sm:$0xf]
  %v5957 = vld [vmem:[%s9 + $0x38] sm:$0xf]
  %v5958 = vld [vmem:[%s9 + $0x3c] sm:$0xf]
  %v5959 = vld [vmem:[%s10] sm:$0x1]
  %v5961 = vperm.slane %v5959, 0
  %v5979 = vunpack.c.l.b16 %v5943
  %v5980 = vunpack.c.l.b16 %v5944
  %v5981 = vunpack.c.l.b16 %v5945
  %v5982 = vunpack.c.l.b16 %v5946
  %v5983 = vunpack.c.l.b16 %v5947
  %v5984 = vunpack.c.l.b16 %v5948
  %v5985 = vunpack.c.l.b16 %v5949
  %v5986 = vunpack.c.l.b16 %v5950
  %v5987 = vunpack.c.l.b16 %v5951
  %v5988 = vunpack.c.l.b16 %v5952
  %v5989 = vunpack.c.l.b16 %v5953
  %v5990 = vunpack.c.l.b16 %v5954
  %v5991 = vunpack.c.l.b16 %v5955
  %v5992 = vunpack.c.l.b16 %v5956
  %v5993 = vunpack.c.l.b16 %v5957
  %v5994 = vunpack.c.l.b16 %v5958
  %v5995 = vpack.c.b16 %v5980, %v5979
  %v5996 = vpack.c.b16 %v5982, %v5981
  %v5997 = vpack.c.b16 %v5984, %v5983
  %v5998 = vpack.c.b16 %v5986, %v5985
  %v5999 = vpack.c.b16 %v5988, %v5987
  %v6000 = vpack.c.b16 %v5990, %v5989
  %v6001 = vpack.c.b16 %v5992, %v5991
  %v6002 = vpack.c.b16 %v5994, %v5993
  %6011 = vmatpush.bf16.msra.mxu0 %v6002
  %6012 = vmatpush.bf16.msra.mxu0 %v6001
  %6013 = vmatpush.bf16.msra.mxu0 %v6000
  %6014 = vmatpush.bf16.msra.mxu0 %v5999
  %6015 = vmatpush.bf16.msra.mxu0 %v5998
  %6016 = vmatpush.bf16.msra.mxu0 %v5997
  %6017 = vmatpush.bf16.msra.mxu0 %v5996
  %6018 = vmatpush.bf16.msra.mxu0 %v5995
  %6019 = vmatmul.bf16.gmra.mxu0 %v5942
  %v6020 = vpop.f32.mrf.mxu0
  %v6021 = vadd.f32 %v5961, %v6020
  %v6022 = vpop.f32.mrf.mxu0
  %6023 = vdwg.mxu0
  %v6024 = vtanh.pop %v6021
  %v6025 = vpack.c.bf16 %v6024, %v6024
  %v6026 = vld [vmem:[%s11] sm:$0xf]
  %v6027 = vld [vmem:[%s11 + $0x4] sm:$0xf]
  %v6028 = vld [vmem:[%s11 + $0x8] sm:$0xf]
  %v6029 = vld [vmem:[%s11 + $0xc] sm:$0xf]
  %v6030 = vld [vmem:[%s11 + $0x10] sm:$0xf]
  %v6031 = vld [vmem:[%s11 + $0x14] sm:$0xf]
  %v6032 = vld [vmem:[%s11 + $0x18] sm:$0xf]
  %v6033 = vld [vmem:[%s11 + $0x1c] sm:$0xf]
  %v6034 = vld [vmem:[%s11 + $0x20] sm:$0xf]
  %v6035 = vld [vmem:[%s11 + $0x24] sm:$0xf]
  %v6036 = vld [vmem:[%s11 + $0x28] sm:$0xf]
  %v6037 = vld [vmem:[%s11 + $0x2c] sm:$0xf]
  %v6038 = vld [vmem:[%s11 + $0x30] sm:$0xf]
  %v6039 = vld [vmem:[%s11 + $0x34] sm:$0xf]
  %v6040 = vld [vmem:[%s11 + $0x38] sm:$0xf]
  %v6041 = vld [vmem:[%s11 + $0x3c] sm:$0xf]
  %v6042 = vld [vmem:[%s12] sm:$0x1]
  %v6044 = vperm.slane %v6042, 0
  %v6062 = vunpack.c.l.b16 %v6026
  %v6063 = vunpack.c.l.b16 %v6027
  %v6064 = vunpack.c.l.b16 %v6028
  %v6065 = vunpack.c.l.b16 %v6029
  %v6066 = vunpack.c.l.b16 %v6030
  %v6067 = vunpack.c.l.b16 %v6031
  %v6068 = vunpack.c.l.b16 %v6032
  %v6069 = vunpack.c.l.b16 %v6033
  %v6070 = vunpack.c.l.b16 %v6034
  %v6071 = vunpack.c.l.b16 %v6035
  %v6072 = vunpack.c.l.b16 %v6036
  %v6073 = vunpack.c.l.b16 %v6037
  %v6074 = vunpack.c.l.b16 %v6038
  %v6075 = vunpack.c.l.b16 %v6039
  %v6076 = vunpack.c.l.b16 %v6040
  %v6077 = vunpack.c.l.b16 %v6041
  %v6078 = vpack.c.b16 %v6063, %v6062
  %v6079 = vpack.c.b16 %v6065, %v6064
  %v6080 = vpack.c.b16 %v6067, %v6066
  %v6081 = vpack.c.b16 %v6069, %v6068
  %v6082 = vpack.c.b16 %v6071, %v6070
  %v6083 = vpack.c.b16 %v6073, %v6072
  %v6084 = vpack.c.b16 %v6075, %v6074
  %v6085 = vpack.c.b16 %v6077, %v6076
  %6094 = vmatpush.bf16.msra.mxu0 %v6085
  %6095 = vmatpush.bf16.msra.mxu0 %v6084
  %6096 = vmatpush.bf16.msra.mxu0 %v6083
  %6097 = vmatpush.bf16.msra.mxu0 %v6082
  %6098 = vmatpush.bf16.msra.mxu0 %v6081
  %6099 = vmatpush.bf16.msra.mxu0 %v6080
  %6100 = vmatpush.bf16.msra.mxu0 %v6079
  %6101 = vmatpush.bf16.msra.mxu0 %v6078
  %6102 = vmatmul.bf16.gmra.mxu0 %v6025
  %v6103 = vpop.f32.mrf.mxu0
  %v6104 = vadd.f32 %v6044, %v6103
  %v6105 = vpop.f32.mrf.mxu0
  %6106 = vdwg.mxu0
  %v6107 = vtanh.pop %v6104
  %vm6108 = vcmp.lt.s32.totalorder %v5465, 10
  %v6109 = vsel %vm6108, %v6107, -1e+30
  %6110 = vmax.xlane.f32.xlu0 %v6109
  %v6111 = vpop.xlane.xlu0 %6110
  %v6112 = vsub.f32 %v6109, %v6111
  %v6113 = vmul.f32 %v6112, 1.442695
  %v6114 = vpow.pop %v6113
  %6115 = vadd.xlane.f32.xlu0 %v6114
  %v6116 = vpop.xlane.xlu0 %6115
  %v6117 = vrcp.pop %v6116
  %v6118 = vmul.f32 %v6116, %v6117
  %v6119 = vsub.f32 1.0, %v6118
  %v6120 = vmul.f32 %v6117, %v6119
  %v6121 = vadd.f32 %v6117, %v6120
  %vm6122 = vweird.f32 %v6116
  %vm6123 = vweird.f32 %v6117
  %vm6124 = vmor %vm6122, %vm6123
  %v6125 = vsel %vm6124, %v6117, %v6121
  %v6126 = vand.u32 2147483647, %v6116
  %vm6127 = vcmp.eq.f32.partialorder %v6126, 8.507059e+37
  %v6128 = vand.u32 %v6116, 2147483648
  %v6129 = vor.u32 1.1754944e-38, %v6128
  %v6130 = vsel %vm6127, %v6129, %v6125
  %v6131 = vmul.f32 %v6114, %v6130
  %6132 = vst [vmem:[%s13] sm:$0xff] %v6131
  // Predicated region
  $region54: #{lenet5_forward.1} parent=0 // pred_check
    _
  $region55: #{lenet5_forward.1} parent=0 // pred_check_branch
    %6134 = sbr.rel (0) target = $region57
  $region56: #{lenet5_forward.1} parent=0 // pred_region
    _
  $region57: #{lenet5_forward.1} parent=0 // pred_fallthru
    _
  // Predicated region
  $region58: #{lenet5_forward.1} parent=0 // pred_check
    _
  $region59: #{lenet5_forward.1} parent=0 // pred_check_branch
    %6136 = sbr.rel (0) target = $region61
  $region60: #{lenet5_forward.1} parent=0 // pred_region
    _
  $region61: #{lenet5_forward.1} parent=0 // pred_fallthru
    _

</llo_original>
